<compile_context>
chip_gen: v6e
topology: v6e:2x2x1
jax: 0.10.0
libtpu: 0.0.40
codegen_flags: <defaults>
</compile_context>

<pallas_src>
import math

import jax
import jax.numpy as jnp
from jax import lax
from jax.experimental import pallas as pl
from jax.experimental.pallas import tpu as pltpu

# Module hyper-parameters (StackedEncoder defaults, small test sizes).
D_MODEL = 128
NUM_HEADS = 4
NUM_CONV_BLOCKS = 2
KERNEL_SIZE = 7
LN_EPS = 1e-5
NEG_INF = -1e30
PAD_ROWS = 8          # sublane-aligned zero band of the depthwise-conv scratch (>= K//2)


def timing_signal(length, channels, min_timescale=1.0, max_timescale=1.0e4):
    position = jnp.arange(length, dtype=jnp.float32)
    num_ts = channels // 2
    log_inc = math.log(max_timescale / min_timescale) / (num_ts - 1)
    inv_ts = min_timescale * jnp.exp(jnp.arange(num_ts, dtype=jnp.float32) * -log_inc)
    scaled = position[:, None] * inv_ts[None, :]
    signal = jnp.concatenate([jnp.sin(scaled), jnp.cos(scaled)], axis=1)
    if channels % 2:
        signal = jnp.pad(signal, ((0, 0), (0, 1)))
    return signal                                                   # (length, channels)


def _layer_norm(h, gamma, beta):
    mu = jnp.mean(h, axis=-1, keepdims=True)
    d = h - mu
    var = jnp.mean(d * d, axis=-1, keepdims=True)
    return d * lax.rsqrt(var + LN_EPS) * gamma + beta


def stacked_encoder_kernel(x_ref, kb_ref, pos_ref, ln_g_ref, ln_b_ref,
                           dw_ref, pw_w_ref, pw_b_ref, n2_g_ref, n2_b_ref,
                           wqkv_ref, bqkv_ref, wo_ref, bo_ref,
                           ffn_w_ref, ffn_b_ref, out_ref, hp_ref):
    BB, L, D = out_ref.shape
    M = BB * L
    Dh = D // NUM_HEADS
    pad = KERNEL_SIZE // 2
    bf16 = jnp.bfloat16

    # ---- PosEncoder: x + timing signal --------------------------------------
    x = (x_ref[...] + pos_ref[...][None]).reshape(M, D)             # (M, D) f32

    # Zero the pad bands of the depthwise-conv scratch (they stay zero across blocks).
    zband = jnp.zeros((BB, PAD_ROWS, D), jnp.float32)
    hp_ref[:, 0:PAD_ROWS, :] = zband
    hp_ref[:, PAD_ROWS + L:PAD_ROWS + L + PAD_ROWS, :] = zband

    # ---- conv blocks: pre-LN -> depthwise -> pointwise -> ReLU -> +residual --
    for i in range(NUM_CONV_BLOCKS):
        res = x
        h = _layer_norm(x, ln_g_ref[i:i + 1, :], ln_b_ref[i:i + 1, :])
        # Depthwise conv along tokens = K static sublane slices of the zero-padded
        # scratch (exact, VPU-only) -- replaces the one-hot LxL MXU matmuls.
        hp_ref[:, PAD_ROWS:PAD_ROWS + L, :] = h.reshape(BB, L, D)
        y = hp_ref[:, PAD_ROWS - pad:PAD_ROWS - pad + L, :] * dw_ref[i, 0:1, :]
        for t in range(1, KERNEL_SIZE):
            off = PAD_ROWS - pad + t
            y = y + hp_ref[:, off:off + L, :] * dw_ref[i, t:t + 1, :]
        # Pointwise 1x1 conv: bf16 MXU operands, f32 accumulate.
        y = jnp.dot(y.reshape(M, D).astype(bf16), pw_w_ref[i],
                    preferred_element_type=jnp.float32) + pw_b_ref[i:i + 1, :]
        x = jnp.maximum(y, 0.0) + res

    # ---- self-attention block: pre-LN (ffn_1_norm) -> MHA -> +residual -------
    res = x
    h = _layer_norm(x, n2_g_ref[0:1, :], n2_b_ref[0:1, :])
    # Fused QKV projection: single (M,128)@(128,384) bf16 matmul.  1/sqrt(Dh) is
    # already folded into Wq / bq by the wrapper.
    qkv = jnp.dot(h.astype(bf16), wqkv_ref[...],
                  preferred_element_type=jnp.float32) + bqkv_ref[...]
    qkv = qkv.reshape(BB, L, 3 * D)

    # TODO(synk): heads could be packed onto sublanes (pltpu.einshape) to avoid the
    # 32-lane per-head slices below; kept simple at Dh = 32.
    outs = []
    for b in range(BB):
        qkv_b = qkv[b]                                               # (L, 3D) f32
        key_bias = kb_ref[b]                                         # (1, L): 0 / -1e30
        acc = None
        for hd in range(NUM_HEADS):
            c0 = hd * Dh
            qh = qkv_b[:, c0:c0 + Dh].astype(bf16)
            kh = qkv_b[:, D + c0:D + c0 + Dh].astype(bf16)
            vh = qkv_b[:, 2 * D + c0:2 * D + c0 + Dh].astype(bf16)
            s = lax.dot_general(qh, kh, (((1,), (1,)), ((), ())),
                                preferred_element_type=jnp.float32)  # (L, L) f32
            s = s + key_bias
            s = s - jnp.max(s, axis=-1, keepdims=True)
            p = jnp.exp(s)
            p = p * pl.reciprocal(jnp.sum(p, axis=-1, keepdims=True), approx=True)
            oh = jnp.dot(p.astype(bf16), vh,
                         preferred_element_type=jnp.float32)          # (L, Dh)
            # Fold this head's slice of the output projection directly, so heads
            # never need a lane-axis concatenation.
            ctr = jnp.dot(oh.astype(bf16), wo_ref[c0:c0 + Dh, :],
                          preferred_element_type=jnp.float32)         # (L, D)
            if hd == NUM_HEADS - 1:
                ctr = ctr + bo_ref[...]
            acc = ctr if acc is None else acc + ctr
        outs.append(acc)
    attn_out = outs[0] if BB == 1 else jnp.concatenate(outs, axis=0)
    x = attn_out + res

    # ---- FFN block: pre-LN (ffn_2_norm) -> 1x1 conv+ReLU -> 1x1 conv -> +res --
    res = x
    h = _layer_norm(x, n2_g_ref[1:2, :], n2_b_ref[1:2, :])
    h = jnp.maximum(
        jnp.dot(h.astype(bf16), ffn_w_ref[0],
                preferred_element_type=jnp.float32) + ffn_b_ref[0:1, :], 0.0)
    h = jnp.dot(h.astype(bf16), ffn_w_ref[1],
                preferred_element_type=jnp.float32) + ffn_b_ref[1:2, :]
    x = h + res

    out_ref[...] = x.reshape(BB, L, D).astype(out_ref.dtype)


def _pick_block_batch(B, L):
    """Rows per grid step: fill the MXU M dimension (BB*L up to ~512) while keeping
    at least 2 grid steps so v7x's two TensorCores both get work, and dividing B."""
    best = 1
    for bb in range(1, B + 1):
        if B % bb:
            continue
        if bb * L > 512:
            continue
        if B >= 2 and B // bb < 2:
            continue
        best = bb
    return best


def _const_spec(a):
    nd = a.ndim
    # Constant index map -> the block is DMA'd once and stays resident across the grid.
    return pl.BlockSpec(a.shape, lambda *_: (0,) * nd)


def stacked_encoder_forward_bld(x_bld, mask, params):
    """Channels-last entry point: x_bld (B, L, d_model), mask (B, L) with True = valid.
    Keeping activations in (B, L, D) end-to-end avoids all layout transposes."""
    B, L, D = x_bld.shape
    assert D == D_MODEL
    Dh = D // NUM_HEADS
    scale = 1.0 / math.sqrt(Dh)
    BB = _pick_block_batch(B, L)

    pos = timing_signal(L, D)                                               # (L, D)
    # Key-padding bias hoisted out of the kernel (computed once per batch row here).
    key_bias = jnp.where(mask, 0.0, NEG_INF).astype(jnp.float32).reshape(B, 1, L)

    aw, ab = params["attn_w"], params["attn_b"]
    w_qkv = jnp.concatenate([aw[0] * scale, aw[1], aw[2]], axis=1).astype(jnp.bfloat16)
    b_qkv = jnp.concatenate([ab[0] * scale, ab[1], ab[2]]).reshape(1, 3 * D)

    weights = (
        pos,                                                 # (L, D)        f32
        params["ln_g"], params["ln_b"],                      # (NC, D)       f32
        params["dw_w"],                                      # (NC, K, D)    f32
        params["pw_w"].astype(jnp.bfloat16),                 # (NC, D, D)    bf16
        params["pw_b"],                                      # (NC, D)       f32
        params["n2_g"], params["n2_b"],                      # (2, D)        f32
        w_qkv,                                               # (D, 3D)       bf16
        b_qkv,                                               # (1, 3D)       f32
        aw[3].astype(jnp.bfloat16),                          # (D, D)        bf16
        ab[3].reshape(1, D),                                 # (1, D)        f32
        params["ffn_w"].astype(jnp.bfloat16),                # (2, D, D)     bf16
        params["ffn_b"],                                     # (2, D)        f32
    )

    # TODO(synk): if the weight set ever grows, mark the constant specs with
    # pipeline_mode=pl.Buffered(1) to stop pointless double-buffering on v7x.
    out = pl.pallas_call(
        stacked_encoder_kernel,
        grid=(B // BB,),
        in_specs=[pl.BlockSpec((BB, L, D), lambda b: (b, 0, 0)),   # activations tile
                  pl.BlockSpec((BB, 1, L), lambda b: (b, 0, 0))]   # key-padding bias
                 + [_const_spec(w) for w in weights],
        out_specs=pl.BlockSpec((BB, L, D), lambda b: (b, 0, 0)),
        out_shape=jax.ShapeDtypeStruct((B, L, D), jnp.float32),
        scratch_shapes=[pltpu.VMEM((BB, L + 2 * PAD_ROWS, D), jnp.float32)],
        input_output_aliases={0: 0},                               # reuse the input buffer
        compiler_params=pltpu.CompilerParams(
            dimension_semantics=("parallel",),
            vmem_limit_bytes=32 * 1024 * 1024),
    )(x_bld.astype(jnp.float32), key_bias, *weights)
    return out


@jax.jit
def stacked_encoder_forward(x_bdl, mask, params):
    """PyTorch-compatible interface: x_bdl (B, d_model, L) -> (B, d_model, L).
    The transposes exist only to match the module's channels-first interface."""
    x_bld = jnp.transpose(x_bdl, (0, 2, 1))
    out = stacked_encoder_forward_bld(x_bld, mask, params)
    return jnp.transpose(out, (0, 2, 1))


def stacked_encoder_reference(x_bdl, mask, p, matmul_dtype=jnp.float32):
    """Pure-JAX reference of the PyTorch eval-mode forward.  matmul_dtype=bfloat16
    mirrors the kernel's MXU numerics (bf16 operands, f32 accumulation)."""
    c = lambda a: a.astype(matmul_dtype)
    mm = lambda a, w: jnp.einsum("bld,de->ble", c(a), c(w),
                                 preferred_element_type=jnp.float32)
    x = jnp.transpose(x_bdl, (0, 2, 1)).astype(jnp.float32)          # (B, L, D)
    B, L, D = x.shape
    Dh = D // NUM_HEADS
    pad = KERNEL_SIZE // 2
    x = x + timing_signal(L, D)[None]

    def ln(h, g, b):
        mu = h.mean(-1, keepdims=True)
        var = ((h - mu) ** 2).mean(-1, keepdims=True)
        return (h - mu) * lax.rsqrt(var + LN_EPS) * g + b

    for i in range(NUM_CONV_BLOCKS):
        res = x
        h = ln(x, p["ln_g"][i], p["ln_b"][i])
        hp = jnp.pad(h, ((0, 0), (pad, pad), (0, 0)))
        y = jnp.zeros_like(h)
        for t in range(KERNEL_SIZE):
            y = y + hp[:, t:t + L, :] * p["dw_w"][i, t][None, None, :]
        y = mm(y, p["pw_w"][i]) + p["pw_b"][i]
        x = jax.nn.relu(y) + res

    res = x
    h = ln(x, p["n2_g"][0], p["n2_b"][0])
    q = (mm(h, p["attn_w"][0]) + p["attn_b"][0]) / math.sqrt(Dh)
    k = mm(h, p["attn_w"][1]) + p["attn_b"][1]
    v = mm(h, p["attn_w"][2]) + p["attn_b"][2]
    q = q.reshape(B, L, NUM_HEADS, Dh)
    k = k.reshape(B, L, NUM_HEADS, Dh)
    v = v.reshape(B, L, NUM_HEADS, Dh)
    s = jnp.einsum("blhe,bmhe->bhlm", c(q), c(k), preferred_element_type=jnp.float32)
    s = s + jnp.where(mask, 0.0, NEG_INF)[:, None, None, :]
    a = jax.nn.softmax(s, axis=-1)
    o = jnp.einsum("bhlm,bmhe->blhe", c(a), c(v),
                   preferred_element_type=jnp.float32).reshape(B, L, D)
    o = mm(o, p["attn_w"][3]) + p["attn_b"][3]
    x = o + res

    res = x
    h = ln(x, p["n2_g"][1], p["n2_b"][1])
    h = jax.nn.relu(mm(h, p["ffn_w"][0]) + p["ffn_b"][0])
    h = mm(h, p["ffn_w"][1]) + p["ffn_b"][1]
    x = h + res
    return jnp.transpose(x, (0, 2, 1))


if __name__ == "__main__":
    B, L, D = 2, 16, D_MODEL
    key = jax.random.PRNGKey(0)
    ks = jax.random.split(key, 12)
    w_scale = 1.0 / math.sqrt(D)

    params = {
        "ln_g":   1.0 + 0.1 * jax.random.normal(ks[0], (NUM_CONV_BLOCKS, D), jnp.float32),
        "ln_b":   0.1 * jax.random.normal(ks[1], (NUM_CONV_BLOCKS, D), jnp.float32),
        "dw_w":   0.3 * jax.random.normal(ks[2], (NUM_CONV_BLOCKS, KERNEL_SIZE, D), jnp.float32),
        "pw_w":   w_scale * jax.random.normal(ks[3], (NUM_CONV_BLOCKS, D, D), jnp.float32),
        "pw_b":   0.05 * jax.random.normal(ks[4], (NUM_CONV_BLOCKS, D), jnp.float32),
        "n2_g":   1.0 + 0.1 * jax.random.normal(ks[5], (2, D), jnp.float32),
        "n2_b":   0.1 * jax.random.normal(ks[6], (2, D), jnp.float32),
        "attn_w": w_scale * jax.random.normal(ks[7], (4, D, D), jnp.float32),  # [Wq,Wk,Wv,Wo] (in,out)
        "attn_b": 0.05 * jax.random.normal(ks[8], (4, D), jnp.float32),
        "ffn_w":  w_scale * jax.random.normal(ks[9], (2, D, D), jnp.float32),  # [ffn_1, ffn_2]
        "ffn_b":  0.05 * jax.random.normal(ks[10], (2, D), jnp.float32),
    }

    x = jax.random.normal(ks[11], (B, D, L), jnp.float32)            # (B, d_model, L)
    lengths = jnp.array([L, L - 4], dtype=jnp.int32)
    mask = jnp.arange(L)[None, :] < lengths[:, None]                  # (B, L), True = valid

    out = stacked_encoder_forward(x, mask, params)
    jax.block_until_ready(out)

    assert out.shape == (B, D, L)
    assert bool(jnp.all(jnp.isfinite(out)))

    # Tight check against a reference that mirrors the kernel's bf16-MXU numerics, and
    # a looser check against the full-f32 module semantics (bf16 drift budget).
    ref_mxu = stacked_encoder_reference(x, mask, params, matmul_dtype=jnp.bfloat16)
    ref_f32 = stacked_encoder_reference(x, mask, params, matmul_dtype=jnp.float32)
    err_mxu = float(jnp.max(jnp.abs(out - ref_mxu)))
    err_f32 = float(jnp.max(jnp.abs(out - ref_f32)))
    assert jnp.allclose(out, ref_mxu, atol=2e-2, rtol=2e-2), err_mxu
    assert jnp.allclose(out, ref_f32, atol=5e-2, rtol=5e-2), err_f32

    print("KERNEL_OK")
</pallas_src>

<mosaic_0001>
module attributes {stable_mosaic.version = 11 : i64} {
  func.func @stacked_encoder_kernel(%arg0: i32, %arg1: memref<1x16x128xf32, #tpu.memory_space<vmem>>, %arg2: memref<1x1x16xf32, #tpu.memory_space<vmem>>, %arg3: memref<16x128xf32, #tpu.memory_space<vmem>>, %arg4: memref<2x128xf32, #tpu.memory_space<vmem>>, %arg5: memref<2x128xf32, #tpu.memory_space<vmem>>, %arg6: memref<2x7x128xf32, #tpu.memory_space<vmem>>, %arg7: memref<2x128x128xbf16, #tpu.memory_space<vmem>>, %arg8: memref<2x128xf32, #tpu.memory_space<vmem>>, %arg9: memref<2x128xf32, #tpu.memory_space<vmem>>, %arg10: memref<2x128xf32, #tpu.memory_space<vmem>>, %arg11: memref<128x384xbf16, #tpu.memory_space<vmem>>, %arg12: memref<1x384xf32, #tpu.memory_space<vmem>>, %arg13: memref<128x128xbf16, #tpu.memory_space<vmem>>, %arg14: memref<1x128xf32, #tpu.memory_space<vmem>>, %arg15: memref<2x128x128xbf16, #tpu.memory_space<vmem>>, %arg16: memref<2x128xf32, #tpu.memory_space<vmem>>, %arg17: memref<1x16x128xf32, #tpu.memory_space<vmem>>, %arg18: memref<1x32x128xf32, #tpu.memory_space<vmem>>) attributes {dimension_semantics = [#tpu.dimension_semantics<parallel>], iteration_bounds = array<i64: 2>, scalar_prefetch = 0 : i64, scratch_operands = 1 : i64, tpu.core_type = #tpu.core_type<tc>, window_params = [{transform_indices = @transform_0, window_bounds = array<i64: 1, 16, 128>}, {transform_indices = @transform_1, window_bounds = array<i64: 1, 1, 16>}, {pipeline_mode = #tpu.pipeline_mode<synchronous>, transform_indices = @transform_2, window_bounds = array<i64: 16, 128>}, {pipeline_mode = #tpu.pipeline_mode<synchronous>, transform_indices = @transform_3, window_bounds = array<i64: 2, 128>}, {pipeline_mode = #tpu.pipeline_mode<synchronous>, transform_indices = @transform_4, window_bounds = array<i64: 2, 128>}, {pipeline_mode = #tpu.pipeline_mode<synchronous>, transform_indices = @transform_5, window_bounds = array<i64: 2, 7, 128>}, {pipeline_mode = #tpu.pipeline_mode<synchronous>, transform_indices = @transform_6, window_bounds = array<i64: 2, 128, 128>}, {pipeline_mode = #tpu.pipeline_mode<synchronous>, transform_indices = @transform_7, window_bounds = array<i64: 2, 128>}, {pipeline_mode = #tpu.pipeline_mode<synchronous>, transform_indices = @transform_8, window_bounds = array<i64: 2, 128>}, {pipeline_mode = #tpu.pipeline_mode<synchronous>, transform_indices = @transform_9, window_bounds = array<i64: 2, 128>}, {pipeline_mode = #tpu.pipeline_mode<synchronous>, transform_indices = @transform_10, window_bounds = array<i64: 128, 384>}, {pipeline_mode = #tpu.pipeline_mode<synchronous>, transform_indices = @transform_11, window_bounds = array<i64: 1, 384>}, {pipeline_mode = #tpu.pipeline_mode<synchronous>, transform_indices = @transform_12, window_bounds = array<i64: 128, 128>}, {pipeline_mode = #tpu.pipeline_mode<synchronous>, transform_indices = @transform_13, window_bounds = array<i64: 1, 128>}, {pipeline_mode = #tpu.pipeline_mode<synchronous>, transform_indices = @transform_14, window_bounds = array<i64: 2, 128, 128>}, {pipeline_mode = #tpu.pipeline_mode<synchronous>, transform_indices = @transform_15, window_bounds = array<i64: 2, 128>}, {transform_indices = @transform_16, window_bounds = array<i64: 1, 16, 128>}]} {
    %c0 = arith.constant 0 : index
    %c0_0 = arith.constant 0 : index
    %c0_1 = arith.constant 0 : index
    %0 = vector.load %arg1[%c0, %c0_0, %c0_1] : memref<1x16x128xf32, #tpu.memory_space<vmem>>, vector<1x16x128xf32>
    %c0_2 = arith.constant 0 : index
    %c0_3 = arith.constant 0 : index
    %1 = vector.load %arg3[%c0_2, %c0_3] : memref<16x128xf32, #tpu.memory_space<vmem>>, vector<16x128xf32>
    %2 = vector.shape_cast %1 : vector<16x128xf32> to vector<1x16x128xf32>
    %3 = arith.addf %0, %2 : vector<1x16x128xf32>
    %4 = vector.shape_cast %3 : vector<1x16x128xf32> to vector<16x128xf32>
    %cst = arith.constant 0.000000e+00 : f32
    %5 = vector.broadcast %cst : f32 to vector<1x8x128xf32>
    %c0_4 = arith.constant 0 : index
    %c0_5 = arith.constant 0 : index
    %c0_6 = arith.constant 0 : index
    %6 = vector.load %arg18[%c0_4, %c0_5, %c0_6] : memref<1x32x128xf32, #tpu.memory_space<vmem>>, vector<1x8x128xf32>
    tpu.vector_store %arg18[%c0_4, %c0_5, %c0_6], %5 {strides = array<i32>} : memref<1x32x128xf32, #tpu.memory_space<vmem>>, vector<1x8x128xf32>,
    %c0_7 = arith.constant 0 : index
    %c24 = arith.constant 24 : index
    %c0_8 = arith.constant 0 : index
    %7 = vector.load %arg18[%c0_7, %c24, %c0_8] : memref<1x32x128xf32, #tpu.memory_space<vmem>>, vector<1x8x128xf32>
    tpu.vector_store %arg18[%c0_7, %c24, %c0_8], %5 {strides = array<i32>} : memref<1x32x128xf32, #tpu.memory_space<vmem>>, vector<1x8x128xf32>,
    %c0_9 = arith.constant 0 : index
    %c0_10 = arith.constant 0 : index
    %8 = vector.load %arg4[%c0_9, %c0_10] : memref<2x128xf32, #tpu.memory_space<vmem>>, vector<1x128xf32>
    %c0_11 = arith.constant 0 : index
    %c0_12 = arith.constant 0 : index
    %9 = vector.load %arg5[%c0_11, %c0_12] : memref<2x128xf32, #tpu.memory_space<vmem>>, vector<1x128xf32>
    %cst_13 = arith.constant dense<0.000000e+00> : vector<16xf32>
    %10 = vector.multi_reduction <add>, %4, %cst_13 [1] : vector<16x128xf32> to vector<16xf32>
    %11 = vector.shape_cast %10 : vector<16xf32> to vector<16x1xf32>
    %cst_14 = arith.constant 1.280000e+02 : f32
    %12 = vector.broadcast %cst_14 : f32 to vector<16x1xf32>
    %13 = arith.divf %11, %12 : vector<16x1xf32>
    %14 = vector.broadcast %13 : vector<16x1xf32> to vector<16x128xf32>
    %15 = arith.subf %4, %14 : vector<16x128xf32>
    %16 = arith.mulf %15, %15 : vector<16x128xf32>
    %cst_15 = arith.constant dense<0.000000e+00> : vector<16xf32>
    %17 = vector.multi_reduction <add>, %16, %cst_15 [1] : vector<16x128xf32> to vector<16xf32>
    %18 = vector.shape_cast %17 : vector<16xf32> to vector<16x1xf32>
    %cst_16 = arith.constant 1.280000e+02 : f32
    %19 = vector.broadcast %cst_16 : f32 to vector<16x1xf32>
    %20 = arith.divf %18, %19 : vector<16x1xf32>
    %cst_17 = arith.constant 9.99999974E-6 : f32
    %21 = vector.broadcast %cst_17 : f32 to vector<16x1xf32>
    %22 = arith.addf %20, %21 : vector<16x1xf32>
    %23 = math.rsqrt %22 : vector<16x1xf32>
    %24 = vector.broadcast %23 : vector<16x1xf32> to vector<16x128xf32>
    %25 = arith.mulf %15, %24 : vector<16x128xf32>
    %26 = vector.broadcast %8 : vector<1x128xf32> to vector<16x128xf32>
    %27 = arith.mulf %25, %26 : vector<16x128xf32>
    %28 = vector.broadcast %9 : vector<1x128xf32> to vector<16x128xf32>
    %29 = arith.addf %27, %28 : vector<16x128xf32>
    %30 = vector.shape_cast %29 : vector<16x128xf32> to vector<1x16x128xf32>
    %c0_18 = arith.constant 0 : index
    %c8 = arith.constant 8 : index
    %c0_19 = arith.constant 0 : index
    %31 = vector.load %arg18[%c0_18, %c8, %c0_19] : memref<1x32x128xf32, #tpu.memory_space<vmem>>, vector<1x16x128xf32>
    tpu.vector_store %arg18[%c0_18, %c8, %c0_19], %30 {strides = array<i32>} : memref<1x32x128xf32, #tpu.memory_space<vmem>>, vector<1x16x128xf32>,
    %c0_20 = arith.constant 0 : index
    %c5 = arith.constant 5 : index
    %c0_21 = arith.constant 0 : index
    %32 = vector.load %arg18[%c0_20, %c5, %c0_21] : memref<1x32x128xf32, #tpu.memory_space<vmem>>, vector<1x16x128xf32>
    %c0_22 = arith.constant 0 : index
    %c0_23 = arith.constant 0 : index
    %c0_24 = arith.constant 0 : index
    %33 = vector.load %arg6[%c0_22, %c0_23, %c0_24] : memref<2x7x128xf32, #tpu.memory_space<vmem>>, vector<1x1x128xf32>
    %34 = vector.shape_cast %33 : vector<1x1x128xf32> to vector<1x128xf32>
    %35 = vector.shape_cast %34 : vector<1x128xf32> to vector<1x1x128xf32>
    %36 = vector.broadcast %35 : vector<1x1x128xf32> to vector<1x16x128xf32>
    %37 = arith.mulf %32, %36 : vector<1x16x128xf32>
    %c0_25 = arith.constant 0 : index
    %c6 = arith.constant 6 : index
    %c0_26 = arith.constant 0 : index
    %38 = vector.load %arg18[%c0_25, %c6, %c0_26] : memref<1x32x128xf32, #tpu.memory_space<vmem>>, vector<1x16x128xf32>
    %c0_27 = arith.constant 0 : index
    %c1 = arith.constant 1 : index
    %c0_28 = arith.constant 0 : index
    %39 = vector.load %arg6[%c0_27, %c1, %c0_28] : memref<2x7x128xf32, #tpu.memory_space<vmem>>, vector<1x1x128xf32>
    %40 = vector.shape_cast %39 : vector<1x1x128xf32> to vector<1x128xf32>
    %41 = vector.shape_cast %40 : vector<1x128xf32> to vector<1x1x128xf32>
    %42 = vector.broadcast %41 : vector<1x1x128xf32> to vector<1x16x128xf32>
    %43 = arith.mulf %38, %42 : vector<1x16x128xf32>
    %44 = arith.addf %37, %43 : vector<1x16x128xf32>
    %c0_29 = arith.constant 0 : index
    %c7 = arith.constant 7 : index
    %c0_30 = arith.constant 0 : index
    %45 = vector.load %arg18[%c0_29, %c7, %c0_30] : memref<1x32x128xf32, #tpu.memory_space<vmem>>, vector<1x16x128xf32>
    %c0_31 = arith.constant 0 : index
    %c2 = arith.constant 2 : index
    %c0_32 = arith.constant 0 : index
    %46 = vector.load %arg6[%c0_31, %c2, %c0_32] : memref<2x7x128xf32, #tpu.memory_space<vmem>>, vector<1x1x128xf32>
    %47 = vector.shape_cast %46 : vector<1x1x128xf32> to vector<1x128xf32>
    %48 = vector.shape_cast %47 : vector<1x128xf32> to vector<1x1x128xf32>
    %49 = vector.broadcast %48 : vector<1x1x128xf32> to vector<1x16x128xf32>
    %50 = arith.mulf %45, %49 : vector<1x16x128xf32>
    %51 = arith.addf %44, %50 : vector<1x16x128xf32>
    %c0_33 = arith.constant 0 : index
    %c8_34 = arith.constant 8 : index
    %c0_35 = arith.constant 0 : index
    %52 = vector.load %arg18[%c0_33, %c8_34, %c0_35] : memref<1x32x128xf32, #tpu.memory_space<vmem>>, vector<1x16x128xf32>
    %c0_36 = arith.constant 0 : index
    %c3 = arith.constant 3 : index
    %c0_37 = arith.constant 0 : index
    %53 = vector.load %arg6[%c0_36, %c3, %c0_37] : memref<2x7x128xf32, #tpu.memory_space<vmem>>, vector<1x1x128xf32>
    %54 = vector.shape_cast %53 : vector<1x1x128xf32> to vector<1x128xf32>
    %55 = vector.shape_cast %54 : vector<1x128xf32> to vector<1x1x128xf32>
    %56 = vector.broadcast %55 : vector<1x1x128xf32> to vector<1x16x128xf32>
    %57 = arith.mulf %52, %56 : vector<1x16x128xf32>
    %58 = arith.addf %51, %57 : vector<1x16x128xf32>
    %c0_38 = arith.constant 0 : index
    %c9 = arith.constant 9 : index
    %c0_39 = arith.constant 0 : index
    %59 = vector.load %arg18[%c0_38, %c9, %c0_39] : memref<1x32x128xf32, #tpu.memory_space<vmem>>, vector<1x16x128xf32>
    %c0_40 = arith.constant 0 : index
    %c4 = arith.constant 4 : index
    %c0_41 = arith.constant 0 : index
    %60 = vector.load %arg6[%c0_40, %c4, %c0_41] : memref<2x7x128xf32, #tpu.memory_space<vmem>>, vector<1x1x128xf32>
    %61 = vector.shape_cast %60 : vector<1x1x128xf32> to vector<1x128xf32>
    %62 = vector.shape_cast %61 : vector<1x128xf32> to vector<1x1x128xf32>
    %63 = vector.broadcast %62 : vector<1x1x128xf32> to vector<1x16x128xf32>
    %64 = arith.mulf %59, %63 : vector<1x16x128xf32>
    %65 = arith.addf %58, %64 : vector<1x16x128xf32>
    %c0_42 = arith.constant 0 : index
    %c10 = arith.constant 10 : index
    %c0_43 = arith.constant 0 : index
    %66 = vector.load %arg18[%c0_42, %c10, %c0_43] : memref<1x32x128xf32, #tpu.memory_space<vmem>>, vector<1x16x128xf32>
    %c0_44 = arith.constant 0 : index
    %c5_45 = arith.constant 5 : index
    %c0_46 = arith.constant 0 : index
    %67 = vector.load %arg6[%c0_44, %c5_45, %c0_46] : memref<2x7x128xf32, #tpu.memory_space<vmem>>, vector<1x1x128xf32>
    %68 = vector.shape_cast %67 : vector<1x1x128xf32> to vector<1x128xf32>
    %69 = vector.shape_cast %68 : vector<1x128xf32> to vector<1x1x128xf32>
    %70 = vector.broadcast %69 : vector<1x1x128xf32> to vector<1x16x128xf32>
    %71 = arith.mulf %66, %70 : vector<1x16x128xf32>
    %72 = arith.addf %65, %71 : vector<1x16x128xf32>
    %c0_47 = arith.constant 0 : index
    %c11 = arith.constant 11 : index
    %c0_48 = arith.constant 0 : index
    %73 = vector.load %arg18[%c0_47, %c11, %c0_48] : memref<1x32x128xf32, #tpu.memory_space<vmem>>, vector<1x16x128xf32>
    %c0_49 = arith.constant 0 : index
    %c6_50 = arith.constant 6 : index
    %c0_51 = arith.constant 0 : index
    %74 = vector.load %arg6[%c0_49, %c6_50, %c0_51] : memref<2x7x128xf32, #tpu.memory_space<vmem>>, vector<1x1x128xf32>
    %75 = vector.shape_cast %74 : vector<1x1x128xf32> to vector<1x128xf32>
    %76 = vector.shape_cast %75 : vector<1x128xf32> to vector<1x1x128xf32>
    %77 = vector.broadcast %76 : vector<1x1x128xf32> to vector<1x16x128xf32>
    %78 = arith.mulf %73, %77 : vector<1x16x128xf32>
    %79 = arith.addf %72, %78 : vector<1x16x128xf32>
    %80 = vector.shape_cast %79 : vector<1x16x128xf32> to vector<16x128xf32>
    %81 = arith.truncf %80 : vector<16x128xf32> to vector<16x128xbf16>
    %c0_52 = arith.constant 0 : index
    %c0_53 = arith.constant 0 : index
    %c0_54 = arith.constant 0 : index
    %82 = vector.load %arg7[%c0_52, %c0_53, %c0_54] : memref<2x128x128xbf16, #tpu.memory_space<vmem>>, vector<1x128x128xbf16>
    %83 = vector.shape_cast %82 : vector<1x128x128xbf16> to vector<128x128xbf16>
    %cst_55 = arith.constant dense<0.000000e+00> : vector<16x128xf32>
    %84 = tpu.matmul %81, %83, %cst_55 {dimension_numbers = #tpu.dot_dimension_numbers<[1], [0], [0], [1], [0, 0, 1, 1], [], []>} : vector<16x128xbf16>, vector<128x128xbf16>, vector<16x128xf32> -> vector<16x128xf32>
    %c0_56 = arith.constant 0 : index
    %c0_57 = arith.constant 0 : index
    %85 = vector.load %arg8[%c0_56, %c0_57] : memref<2x128xf32, #tpu.memory_space<vmem>>, vector<1x128xf32>
    %86 = vector.broadcast %85 : vector<1x128xf32> to vector<16x128xf32>
    %87 = arith.addf %84, %86 : vector<16x128xf32>
    %cst_58 = arith.constant 0.000000e+00 : f32
    %88 = vector.broadcast %cst_58 : f32 to vector<16x128xf32>
    %89 = arith.maximumf %87, %88 : vector<16x128xf32>
    %90 = arith.addf %89, %4 : vector<16x128xf32>
    %c1_59 = arith.constant 1 : index
    %c0_60 = arith.constant 0 : index
    %91 = vector.load %arg4[%c1_59, %c0_60] : memref<2x128xf32, #tpu.memory_space<vmem>>, vector<1x128xf32>
    %c1_61 = arith.constant 1 : index
    %c0_62 = arith.constant 0 : index
    %92 = vector.load %arg5[%c1_61, %c0_62] : memref<2x128xf32, #tpu.memory_space<vmem>>, vector<1x128xf32>
    %cst_63 = arith.constant dense<0.000000e+00> : vector<16xf32>
    %93 = vector.multi_reduction <add>, %90, %cst_63 [1] : vector<16x128xf32> to vector<16xf32>
    %94 = vector.shape_cast %93 : vector<16xf32> to vector<16x1xf32>
    %cst_64 = arith.constant 1.280000e+02 : f32
    %95 = vector.broadcast %cst_64 : f32 to vector<16x1xf32>
    %96 = arith.divf %94, %95 : vector<16x1xf32>
    %97 = vector.broadcast %96 : vector<16x1xf32> to vector<16x128xf32>
    %98 = arith.subf %90, %97 : vector<16x128xf32>
    %99 = arith.mulf %98, %98 : vector<16x128xf32>
    %cst_65 = arith.constant dense<0.000000e+00> : vector<16xf32>
    %100 = vector.multi_reduction <add>, %99, %cst_65 [1] : vector<16x128xf32> to vector<16xf32>
    %101 = vector.shape_cast %100 : vector<16xf32> to vector<16x1xf32>
    %cst_66 = arith.constant 1.280000e+02 : f32
    %102 = vector.broadcast %cst_66 : f32 to vector<16x1xf32>
    %103 = arith.divf %101, %102 : vector<16x1xf32>
    %cst_67 = arith.constant 9.99999974E-6 : f32
    %104 = vector.broadcast %cst_67 : f32 to vector<16x1xf32>
    %105 = arith.addf %103, %104 : vector<16x1xf32>
    %106 = math.rsqrt %105 : vector<16x1xf32>
    %107 = vector.broadcast %106 : vector<16x1xf32> to vector<16x128xf32>
    %108 = arith.mulf %98, %107 : vector<16x128xf32>
    %109 = vector.broadcast %91 : vector<1x128xf32> to vector<16x128xf32>
    %110 = arith.mulf %108, %109 : vector<16x128xf32>
    %111 = vector.broadcast %92 : vector<1x128xf32> to vector<16x128xf32>
    %112 = arith.addf %110, %111 : vector<16x128xf32>
    %113 = vector.shape_cast %112 : vector<16x128xf32> to vector<1x16x128xf32>
    %c0_68 = arith.constant 0 : index
    %c8_69 = arith.constant 8 : index
    %c0_70 = arith.constant 0 : index
    %114 = vector.load %arg18[%c0_68, %c8_69, %c0_70] : memref<1x32x128xf32, #tpu.memory_space<vmem>>, vector<1x16x128xf32>
    tpu.vector_store %arg18[%c0_68, %c8_69, %c0_70], %113 {strides = array<i32>} : memref<1x32x128xf32, #tpu.memory_space<vmem>>, vector<1x16x128xf32>,
    %c0_71 = arith.constant 0 : index
    %c5_72 = arith.constant 5 : index
    %c0_73 = arith.constant 0 : index
    %115 = vector.load %arg18[%c0_71, %c5_72, %c0_73] : memref<1x32x128xf32, #tpu.memory_space<vmem>>, vector<1x16x128xf32>
    %c1_74 = arith.constant 1 : index
    %c0_75 = arith.constant 0 : index
    %c0_76 = arith.constant 0 : index
    %116 = vector.load %arg6[%c1_74, %c0_75, %c0_76] : memref<2x7x128xf32, #tpu.memory_space<vmem>>, vector<1x1x128xf32>
    %117 = vector.shape_cast %116 : vector<1x1x128xf32> to vector<1x128xf32>
    %118 = vector.shape_cast %117 : vector<1x128xf32> to vector<1x1x128xf32>
    %119 = vector.broadcast %118 : vector<1x1x128xf32> to vector<1x16x128xf32>
    %120 = arith.mulf %115, %119 : vector<1x16x128xf32>
    %c0_77 = arith.constant 0 : index
    %c6_78 = arith.constant 6 : index
    %c0_79 = arith.constant 0 : index
    %121 = vector.load %arg18[%c0_77, %c6_78, %c0_79] : memref<1x32x128xf32, #tpu.memory_space<vmem>>, vector<1x16x128xf32>
    %c1_80 = arith.constant 1 : index
    %c1_81 = arith.constant 1 : index
    %c0_82 = arith.constant 0 : index
    %122 = vector.load %arg6[%c1_80, %c1_81, %c0_82] : memref<2x7x128xf32, #tpu.memory_space<vmem>>, vector<1x1x128xf32>
    %123 = vector.shape_cast %122 : vector<1x1x128xf32> to vector<1x128xf32>
    %124 = vector.shape_cast %123 : vector<1x128xf32> to vector<1x1x128xf32>
    %125 = vector.broadcast %124 : vector<1x1x128xf32> to vector<1x16x128xf32>
    %126 = arith.mulf %121, %125 : vector<1x16x128xf32>
    %127 = arith.addf %120, %126 : vector<1x16x128xf32>
    %c0_83 = arith.constant 0 : index
    %c7_84 = arith.constant 7 : index
    %c0_85 = arith.constant 0 : index
    %128 = vector.load %arg18[%c0_83, %c7_84, %c0_85] : memref<1x32x128xf32, #tpu.memory_space<vmem>>, vector<1x16x128xf32>
    %c1_86 = arith.constant 1 : index
    %c2_87 = arith.constant 2 : index
    %c0_88 = arith.constant 0 : index
    %129 = vector.load %arg6[%c1_86, %c2_87, %c0_88] : memref<2x7x128xf32, #tpu.memory_space<vmem>>, vector<1x1x128xf32>
    %130 = vector.shape_cast %129 : vector<1x1x128xf32> to vector<1x128xf32>
    %131 = vector.shape_cast %130 : vector<1x128xf32> to vector<1x1x128xf32>
    %132 = vector.broadcast %131 : vector<1x1x128xf32> to vector<1x16x128xf32>
    %133 = arith.mulf %128, %132 : vector<1x16x128xf32>
    %134 = arith.addf %127, %133 : vector<1x16x128xf32>
    %c0_89 = arith.constant 0 : index
    %c8_90 = arith.constant 8 : index
    %c0_91 = arith.constant 0 : index
    %135 = vector.load %arg18[%c0_89, %c8_90, %c0_91] : memref<1x32x128xf32, #tpu.memory_space<vmem>>, vector<1x16x128xf32>
    %c1_92 = arith.constant 1 : index
    %c3_93 = arith.constant 3 : index
    %c0_94 = arith.constant 0 : index
    %136 = vector.load %arg6[%c1_92, %c3_93, %c0_94] : memref<2x7x128xf32, #tpu.memory_space<vmem>>, vector<1x1x128xf32>
    %137 = vector.shape_cast %136 : vector<1x1x128xf32> to vector<1x128xf32>
    %138 = vector.shape_cast %137 : vector<1x128xf32> to vector<1x1x128xf32>
    %139 = vector.broadcast %138 : vector<1x1x128xf32> to vector<1x16x128xf32>
    %140 = arith.mulf %135, %139 : vector<1x16x128xf32>
    %141 = arith.addf %134, %140 : vector<1x16x128xf32>
    %c0_95 = arith.constant 0 : index
    %c9_96 = arith.constant 9 : index
    %c0_97 = arith.constant 0 : index
    %142 = vector.load %arg18[%c0_95, %c9_96, %c0_97] : memref<1x32x128xf32, #tpu.memory_space<vmem>>, vector<1x16x128xf32>
    %c1_98 = arith.constant 1 : index
    %c4_99 = arith.constant 4 : index
    %c0_100 = arith.constant 0 : index
    %143 = vector.load %arg6[%c1_98, %c4_99, %c0_100] : memref<2x7x128xf32, #tpu.memory_space<vmem>>, vector<1x1x128xf32>
    %144 = vector.shape_cast %143 : vector<1x1x128xf32> to vector<1x128xf32>
    %145 = vector.shape_cast %144 : vector<1x128xf32> to vector<1x1x128xf32>
    %146 = vector.broadcast %145 : vector<1x1x128xf32> to vector<1x16x128xf32>
    %147 = arith.mulf %142, %146 : vector<1x16x128xf32>
    %148 = arith.addf %141, %147 : vector<1x16x128xf32>
    %c0_101 = arith.constant 0 : index
    %c10_102 = arith.constant 10 : index
    %c0_103 = arith.constant 0 : index
    %149 = vector.load %arg18[%c0_101, %c10_102, %c0_103] : memref<1x32x128xf32, #tpu.memory_space<vmem>>, vector<1x16x128xf32>
    %c1_104 = arith.constant 1 : index
    %c5_105 = arith.constant 5 : index
    %c0_106 = arith.constant 0 : index
    %150 = vector.load %arg6[%c1_104, %c5_105, %c0_106] : memref<2x7x128xf32, #tpu.memory_space<vmem>>, vector<1x1x128xf32>
    %151 = vector.shape_cast %150 : vector<1x1x128xf32> to vector<1x128xf32>
    %152 = vector.shape_cast %151 : vector<1x128xf32> to vector<1x1x128xf32>
    %153 = vector.broadcast %152 : vector<1x1x128xf32> to vector<1x16x128xf32>
    %154 = arith.mulf %149, %153 : vector<1x16x128xf32>
    %155 = arith.addf %148, %154 : vector<1x16x128xf32>
    %c0_107 = arith.constant 0 : index
    %c11_108 = arith.constant 11 : index
    %c0_109 = arith.constant 0 : index
    %156 = vector.load %arg18[%c0_107, %c11_108, %c0_109] : memref<1x32x128xf32, #tpu.memory_space<vmem>>, vector<1x16x128xf32>
    %c1_110 = arith.constant 1 : index
    %c6_111 = arith.constant 6 : index
    %c0_112 = arith.constant 0 : index
    %157 = vector.load %arg6[%c1_110, %c6_111, %c0_112] : memref<2x7x128xf32, #tpu.memory_space<vmem>>, vector<1x1x128xf32>
    %158 = vector.shape_cast %157 : vector<1x1x128xf32> to vector<1x128xf32>
    %159 = vector.shape_cast %158 : vector<1x128xf32> to vector<1x1x128xf32>
    %160 = vector.broadcast %159 : vector<1x1x128xf32> to vector<1x16x128xf32>
    %161 = arith.mulf %156, %160 : vector<1x16x128xf32>
    %162 = arith.addf %155, %161 : vector<1x16x128xf32>
    %163 = vector.shape_cast %162 : vector<1x16x128xf32> to vector<16x128xf32>
    %164 = arith.truncf %163 : vector<16x128xf32> to vector<16x128xbf16>
    %c1_113 = arith.constant 1 : index
    %c0_114 = arith.constant 0 : index
    %c0_115 = arith.constant 0 : index
    %165 = vector.load %arg7[%c1_113, %c0_114, %c0_115] : memref<2x128x128xbf16, #tpu.memory_space<vmem>>, vector<1x128x128xbf16>
    %166 = vector.shape_cast %165 : vector<1x128x128xbf16> to vector<128x128xbf16>
    %cst_116 = arith.constant dense<0.000000e+00> : vector<16x128xf32>
    %167 = tpu.matmul %164, %166, %cst_116 {dimension_numbers = #tpu.dot_dimension_numbers<[1], [0], [0], [1], [0, 0, 1, 1], [], []>} : vector<16x128xbf16>, vector<128x128xbf16>, vector<16x128xf32> -> vector<16x128xf32>
    %c1_117 = arith.constant 1 : index
    %c0_118 = arith.constant 0 : index
    %168 = vector.load %arg8[%c1_117, %c0_118] : memref<2x128xf32, #tpu.memory_space<vmem>>, vector<1x128xf32>
    %169 = vector.broadcast %168 : vector<1x128xf32> to vector<16x128xf32>
    %170 = arith.addf %167, %169 : vector<16x128xf32>
    %cst_119 = arith.constant 0.000000e+00 : f32
    %171 = vector.broadcast %cst_119 : f32 to vector<16x128xf32>
    %172 = arith.maximumf %170, %171 : vector<16x128xf32>
    %173 = arith.addf %172, %90 : vector<16x128xf32>
    %c0_120 = arith.constant 0 : index
    %c0_121 = arith.constant 0 : index
    %174 = vector.load %arg9[%c0_120, %c0_121] : memref<2x128xf32, #tpu.memory_space<vmem>>, vector<1x128xf32>
    %c0_122 = arith.constant 0 : index
    %c0_123 = arith.constant 0 : index
    %175 = vector.load %arg10[%c0_122, %c0_123] : memref<2x128xf32, #tpu.memory_space<vmem>>, vector<1x128xf32>
    %cst_124 = arith.constant dense<0.000000e+00> : vector<16xf32>
    %176 = vector.multi_reduction <add>, %173, %cst_124 [1] : vector<16x128xf32> to vector<16xf32>
    %177 = vector.shape_cast %176 : vector<16xf32> to vector<16x1xf32>
    %cst_125 = arith.constant 1.280000e+02 : f32
    %178 = vector.broadcast %cst_125 : f32 to vector<16x1xf32>
    %179 = arith.divf %177, %178 : vector<16x1xf32>
    %180 = vector.broadcast %179 : vector<16x1xf32> to vector<16x128xf32>
    %181 = arith.subf %173, %180 : vector<16x128xf32>
    %182 = arith.mulf %181, %181 : vector<16x128xf32>
    %cst_126 = arith.constant dense<0.000000e+00> : vector<16xf32>
    %183 = vector.multi_reduction <add>, %182, %cst_126 [1] : vector<16x128xf32> to vector<16xf32>
    %184 = vector.shape_cast %183 : vector<16xf32> to vector<16x1xf32>
    %cst_127 = arith.constant 1.280000e+02 : f32
    %185 = vector.broadcast %cst_127 : f32 to vector<16x1xf32>
    %186 = arith.divf %184, %185 : vector<16x1xf32>
    %cst_128 = arith.constant 9.99999974E-6 : f32
    %187 = vector.broadcast %cst_128 : f32 to vector<16x1xf32>
    %188 = arith.addf %186, %187 : vector<16x1xf32>
    %189 = math.rsqrt %188 : vector<16x1xf32>
    %190 = vector.broadcast %189 : vector<16x1xf32> to vector<16x128xf32>
    %191 = arith.mulf %181, %190 : vector<16x128xf32>
    %192 = vector.broadcast %174 : vector<1x128xf32> to vector<16x128xf32>
    %193 = arith.mulf %191, %192 : vector<16x128xf32>
    %194 = vector.broadcast %175 : vector<1x128xf32> to vector<16x128xf32>
    %195 = arith.addf %193, %194 : vector<16x128xf32>
    %196 = arith.truncf %195 : vector<16x128xf32> to vector<16x128xbf16>
    %c0_129 = arith.constant 0 : index
    %c0_130 = arith.constant 0 : index
    %197 = vector.load %arg11[%c0_129, %c0_130] : memref<128x384xbf16, #tpu.memory_space<vmem>>, vector<128x384xbf16>
    %cst_131 = arith.constant dense<0.000000e+00> : vector<16x384xf32>
    %198 = tpu.matmul %196, %197, %cst_131 {dimension_numbers = #tpu.dot_dimension_numbers<[1], [0], [0], [1], [0, 0, 1, 1], [], []>} : vector<16x128xbf16>, vector<128x384xbf16>, vector<16x384xf32> -> vector<16x384xf32>
    %c0_132 = arith.constant 0 : index
    %c0_133 = arith.constant 0 : index
    %199 = vector.load %arg12[%c0_132, %c0_133] : memref<1x384xf32, #tpu.memory_space<vmem>>, vector<1x384xf32>
    %200 = vector.broadcast %199 : vector<1x384xf32> to vector<16x384xf32>
    %201 = arith.addf %198, %200 : vector<16x384xf32>
    %202 = vector.shape_cast %201 : vector<16x384xf32> to vector<1x16x384xf32>
    %203 = vector.shape_cast %202 : vector<1x16x384xf32> to vector<16x384xf32>
    %c0_134 = arith.constant 0 : index
    %c0_135 = arith.constant 0 : index
    %c0_136 = arith.constant 0 : index
    %204 = vector.load %arg2[%c0_134, %c0_135, %c0_136] : memref<1x1x16xf32, #tpu.memory_space<vmem>>, vector<1x1x16xf32>
    %205 = vector.shape_cast %204 : vector<1x1x16xf32> to vector<1x16xf32>
    %206 = vector.extract_strided_slice %203 {offsets = [0, 0], sizes = [16, 32], strides = [1, 1]} : vector<16x384xf32> to vector<16x32xf32>
    %207 = arith.truncf %206 : vector<16x32xf32> to vector<16x32xbf16>
    %208 = vector.extract_strided_slice %203 {offsets = [0, 128], sizes = [16, 32], strides = [1, 1]} : vector<16x384xf32> to vector<16x32xf32>
    %209 = arith.truncf %208 : vector<16x32xf32> to vector<16x32xbf16>
    %210 = vector.extract_strided_slice %203 {offsets = [0, 256], sizes = [16, 32], strides = [1, 1]} : vector<16x384xf32> to vector<16x32xf32>
    %211 = arith.truncf %210 : vector<16x32xf32> to vector<16x32xbf16>
    %cst_137 = arith.constant dense<0.000000e+00> : vector<16x16xf32>
    %212 = tpu.matmul %207, %209, %cst_137 {dimension_numbers = #tpu.dot_dimension_numbers<[1], [1], [0], [0], [0, 0, 1, 0], [], []>} : vector<16x32xbf16>, vector<16x32xbf16>, vector<16x16xf32> -> vector<16x16xf32>
    %213 = vector.broadcast %205 : vector<1x16xf32> to vector<16x16xf32>
    %214 = arith.addf %212, %213 : vector<16x16xf32>
    %cst_138 = arith.constant dense<0xFF800000> : vector<16xf32>
    %215 = vector.multi_reduction <maximumf>, %214, %cst_138 [1] : vector<16x16xf32> to vector<16xf32>
    %216 = vector.shape_cast %215 : vector<16xf32> to vector<16x1xf32>
    %217 = vector.broadcast %216 : vector<16x1xf32> to vector<16x16xf32>
    %218 = arith.subf %214, %217 : vector<16x16xf32>
    %219 = math.exp %218 : vector<16x16xf32>
    %cst_139 = arith.constant dense<0.000000e+00> : vector<16xf32>
    %220 = vector.multi_reduction <add>, %219, %cst_139 [1] : vector<16x16xf32> to vector<16xf32>
    %221 = vector.shape_cast %220 : vector<16xf32> to vector<16x1xf32>
    %222 = tpu.reciprocal %221 {approx = true} : vector<16x1xf32> -> vector<16x1xf32>
    %223 = vector.broadcast %222 : vector<16x1xf32> to vector<16x16xf32>
    %224 = arith.mulf %219, %223 : vector<16x16xf32>
    %225 = arith.truncf %224 : vector<16x16xf32> to vector<16x16xbf16>
    %cst_140 = arith.constant dense<0.000000e+00> : vector<16x32xf32>
    %226 = tpu.matmul %225, %211, %cst_140 {dimension_numbers = #tpu.dot_dimension_numbers<[1], [0], [0], [1], [0, 0, 1, 1], [], []>} : vector<16x16xbf16>, vector<16x32xbf16>, vector<16x32xf32> -> vector<16x32xf32>
    %227 = arith.truncf %226 : vector<16x32xf32> to vector<16x32xbf16>
    %c0_141 = arith.constant 0 : index
    %c0_142 = arith.constant 0 : index
    %228 = vector.load %arg13[%c0_141, %c0_142] : memref<128x128xbf16, #tpu.memory_space<vmem>>, vector<32x128xbf16>
    %cst_143 = arith.constant dense<0.000000e+00> : vector<16x128xf32>
    %229 = tpu.matmul %227, %228, %cst_143 {dimension_numbers = #tpu.dot_dimension_numbers<[1], [0], [0], [1], [0, 0, 1, 1], [], []>} : vector<16x32xbf16>, vector<32x128xbf16>, vector<16x128xf32> -> vector<16x128xf32>
    %230 = vector.extract_strided_slice %203 {offsets = [0, 32], sizes = [16, 32], strides = [1, 1]} : vector<16x384xf32> to vector<16x32xf32>
    %231 = arith.truncf %230 : vector<16x32xf32> to vector<16x32xbf16>
    %232 = vector.extract_strided_slice %203 {offsets = [0, 160], sizes = [16, 32], strides = [1, 1]} : vector<16x384xf32> to vector<16x32xf32>
    %233 = arith.truncf %232 : vector<16x32xf32> to vector<16x32xbf16>
    %234 = vector.extract_strided_slice %203 {offsets = [0, 288], sizes = [16, 32], strides = [1, 1]} : vector<16x384xf32> to vector<16x32xf32>
    %235 = arith.truncf %234 : vector<16x32xf32> to vector<16x32xbf16>
    %cst_144 = arith.constant dense<0.000000e+00> : vector<16x16xf32>
    %236 = tpu.matmul %231, %233, %cst_144 {dimension_numbers = #tpu.dot_dimension_numbers<[1], [1], [0], [0], [0, 0, 1, 0], [], []>} : vector<16x32xbf16>, vector<16x32xbf16>, vector<16x16xf32> -> vector<16x16xf32>
    %237 = vector.broadcast %205 : vector<1x16xf32> to vector<16x16xf32>
    %238 = arith.addf %236, %237 : vector<16x16xf32>
    %cst_145 = arith.constant dense<0xFF800000> : vector<16xf32>
    %239 = vector.multi_reduction <maximumf>, %238, %cst_145 [1] : vector<16x16xf32> to vector<16xf32>
    %240 = vector.shape_cast %239 : vector<16xf32> to vector<16x1xf32>
    %241 = vector.broadcast %240 : vector<16x1xf32> to vector<16x16xf32>
    %242 = arith.subf %238, %241 : vector<16x16xf32>
    %243 = math.exp %242 : vector<16x16xf32>
    %cst_146 = arith.constant dense<0.000000e+00> : vector<16xf32>
    %244 = vector.multi_reduction <add>, %243, %cst_146 [1] : vector<16x16xf32> to vector<16xf32>
    %245 = vector.shape_cast %244 : vector<16xf32> to vector<16x1xf32>
    %246 = tpu.reciprocal %245 {approx = true} : vector<16x1xf32> -> vector<16x1xf32>
    %247 = vector.broadcast %246 : vector<16x1xf32> to vector<16x16xf32>
    %248 = arith.mulf %243, %247 : vector<16x16xf32>
    %249 = arith.truncf %248 : vector<16x16xf32> to vector<16x16xbf16>
    %cst_147 = arith.constant dense<0.000000e+00> : vector<16x32xf32>
    %250 = tpu.matmul %249, %235, %cst_147 {dimension_numbers = #tpu.dot_dimension_numbers<[1], [0], [0], [1], [0, 0, 1, 1], [], []>} : vector<16x16xbf16>, vector<16x32xbf16>, vector<16x32xf32> -> vector<16x32xf32>
    %251 = arith.truncf %250 : vector<16x32xf32> to vector<16x32xbf16>
    %c32 = arith.constant 32 : index
    %c0_148 = arith.constant 0 : index
    %252 = vector.load %arg13[%c32, %c0_148] : memref<128x128xbf16, #tpu.memory_space<vmem>>, vector<32x128xbf16>
    %cst_149 = arith.constant dense<0.000000e+00> : vector<16x128xf32>
    %253 = tpu.matmul %251, %252, %cst_149 {dimension_numbers = #tpu.dot_dimension_numbers<[1], [0], [0], [1], [0, 0, 1, 1], [], []>} : vector<16x32xbf16>, vector<32x128xbf16>, vector<16x128xf32> -> vector<16x128xf32>
    %254 = arith.addf %229, %253 : vector<16x128xf32>
    %255 = vector.extract_strided_slice %203 {offsets = [0, 64], sizes = [16, 32], strides = [1, 1]} : vector<16x384xf32> to vector<16x32xf32>
    %256 = arith.truncf %255 : vector<16x32xf32> to vector<16x32xbf16>
    %257 = vector.extract_strided_slice %203 {offsets = [0, 192], sizes = [16, 32], strides = [1, 1]} : vector<16x384xf32> to vector<16x32xf32>
    %258 = arith.truncf %257 : vector<16x32xf32> to vector<16x32xbf16>
    %259 = vector.extract_strided_slice %203 {offsets = [0, 320], sizes = [16, 32], strides = [1, 1]} : vector<16x384xf32> to vector<16x32xf32>
    %260 = arith.truncf %259 : vector<16x32xf32> to vector<16x32xbf16>
    %cst_150 = arith.constant dense<0.000000e+00> : vector<16x16xf32>
    %261 = tpu.matmul %256, %258, %cst_150 {dimension_numbers = #tpu.dot_dimension_numbers<[1], [1], [0], [0], [0, 0, 1, 0], [], []>} : vector<16x32xbf16>, vector<16x32xbf16>, vector<16x16xf32> -> vector<16x16xf32>
    %262 = vector.broadcast %205 : vector<1x16xf32> to vector<16x16xf32>
    %263 = arith.addf %261, %262 : vector<16x16xf32>
    %cst_151 = arith.constant dense<0xFF800000> : vector<16xf32>
    %264 = vector.multi_reduction <maximumf>, %263, %cst_151 [1] : vector<16x16xf32> to vector<16xf32>
    %265 = vector.shape_cast %264 : vector<16xf32> to vector<16x1xf32>
    %266 = vector.broadcast %265 : vector<16x1xf32> to vector<16x16xf32>
    %267 = arith.subf %263, %266 : vector<16x16xf32>
    %268 = math.exp %267 : vector<16x16xf32>
    %cst_152 = arith.constant dense<0.000000e+00> : vector<16xf32>
    %269 = vector.multi_reduction <add>, %268, %cst_152 [1] : vector<16x16xf32> to vector<16xf32>
    %270 = vector.shape_cast %269 : vector<16xf32> to vector<16x1xf32>
    %271 = tpu.reciprocal %270 {approx = true} : vector<16x1xf32> -> vector<16x1xf32>
    %272 = vector.broadcast %271 : vector<16x1xf32> to vector<16x16xf32>
    %273 = arith.mulf %268, %272 : vector<16x16xf32>
    %274 = arith.truncf %273 : vector<16x16xf32> to vector<16x16xbf16>
    %cst_153 = arith.constant dense<0.000000e+00> : vector<16x32xf32>
    %275 = tpu.matmul %274, %260, %cst_153 {dimension_numbers = #tpu.dot_dimension_numbers<[1], [0], [0], [1], [0, 0, 1, 1], [], []>} : vector<16x16xbf16>, vector<16x32xbf16>, vector<16x32xf32> -> vector<16x32xf32>
    %276 = arith.truncf %275 : vector<16x32xf32> to vector<16x32xbf16>
    %c64 = arith.constant 64 : index
    %c0_154 = arith.constant 0 : index
    %277 = vector.load %arg13[%c64, %c0_154] : memref<128x128xbf16, #tpu.memory_space<vmem>>, vector<32x128xbf16>
    %cst_155 = arith.constant dense<0.000000e+00> : vector<16x128xf32>
    %278 = tpu.matmul %276, %277, %cst_155 {dimension_numbers = #tpu.dot_dimension_numbers<[1], [0], [0], [1], [0, 0, 1, 1], [], []>} : vector<16x32xbf16>, vector<32x128xbf16>, vector<16x128xf32> -> vector<16x128xf32>
    %279 = arith.addf %254, %278 : vector<16x128xf32>
    %280 = vector.extract_strided_slice %203 {offsets = [0, 96], sizes = [16, 32], strides = [1, 1]} : vector<16x384xf32> to vector<16x32xf32>
    %281 = arith.truncf %280 : vector<16x32xf32> to vector<16x32xbf16>
    %282 = vector.extract_strided_slice %203 {offsets = [0, 224], sizes = [16, 32], strides = [1, 1]} : vector<16x384xf32> to vector<16x32xf32>
    %283 = arith.truncf %282 : vector<16x32xf32> to vector<16x32xbf16>
    %284 = vector.extract_strided_slice %203 {offsets = [0, 352], sizes = [16, 32], strides = [1, 1]} : vector<16x384xf32> to vector<16x32xf32>
    %285 = arith.truncf %284 : vector<16x32xf32> to vector<16x32xbf16>
    %cst_156 = arith.constant dense<0.000000e+00> : vector<16x16xf32>
    %286 = tpu.matmul %281, %283, %cst_156 {dimension_numbers = #tpu.dot_dimension_numbers<[1], [1], [0], [0], [0, 0, 1, 0], [], []>} : vector<16x32xbf16>, vector<16x32xbf16>, vector<16x16xf32> -> vector<16x16xf32>
    %287 = vector.broadcast %205 : vector<1x16xf32> to vector<16x16xf32>
    %288 = arith.addf %286, %287 : vector<16x16xf32>
    %cst_157 = arith.constant dense<0xFF800000> : vector<16xf32>
    %289 = vector.multi_reduction <maximumf>, %288, %cst_157 [1] : vector<16x16xf32> to vector<16xf32>
    %290 = vector.shape_cast %289 : vector<16xf32> to vector<16x1xf32>
    %291 = vector.broadcast %290 : vector<16x1xf32> to vector<16x16xf32>
    %292 = arith.subf %288, %291 : vector<16x16xf32>
    %293 = math.exp %292 : vector<16x16xf32>
    %cst_158 = arith.constant dense<0.000000e+00> : vector<16xf32>
    %294 = vector.multi_reduction <add>, %293, %cst_158 [1] : vector<16x16xf32> to vector<16xf32>
    %295 = vector.shape_cast %294 : vector<16xf32> to vector<16x1xf32>
    %296 = tpu.reciprocal %295 {approx = true} : vector<16x1xf32> -> vector<16x1xf32>
    %297 = vector.broadcast %296 : vector<16x1xf32> to vector<16x16xf32>
    %298 = arith.mulf %293, %297 : vector<16x16xf32>
    %299 = arith.truncf %298 : vector<16x16xf32> to vector<16x16xbf16>
    %cst_159 = arith.constant dense<0.000000e+00> : vector<16x32xf32>
    %300 = tpu.matmul %299, %285, %cst_159 {dimension_numbers = #tpu.dot_dimension_numbers<[1], [0], [0], [1], [0, 0, 1, 1], [], []>} : vector<16x16xbf16>, vector<16x32xbf16>, vector<16x32xf32> -> vector<16x32xf32>
    %301 = arith.truncf %300 : vector<16x32xf32> to vector<16x32xbf16>
    %c96 = arith.constant 96 : index
    %c0_160 = arith.constant 0 : index
    %302 = vector.load %arg13[%c96, %c0_160] : memref<128x128xbf16, #tpu.memory_space<vmem>>, vector<32x128xbf16>
    %cst_161 = arith.constant dense<0.000000e+00> : vector<16x128xf32>
    %303 = tpu.matmul %301, %302, %cst_161 {dimension_numbers = #tpu.dot_dimension_numbers<[1], [0], [0], [1], [0, 0, 1, 1], [], []>} : vector<16x32xbf16>, vector<32x128xbf16>, vector<16x128xf32> -> vector<16x128xf32>
    %c0_162 = arith.constant 0 : index
    %c0_163 = arith.constant 0 : index
    %304 = vector.load %arg14[%c0_162, %c0_163] : memref<1x128xf32, #tpu.memory_space<vmem>>, vector<1x128xf32>
    %305 = vector.broadcast %304 : vector<1x128xf32> to vector<16x128xf32>
    %306 = arith.addf %303, %305 : vector<16x128xf32>
    %307 = arith.addf %279, %306 : vector<16x128xf32>
    %308 = arith.addf %307, %173 : vector<16x128xf32>
    %c1_164 = arith.constant 1 : index
    %c0_165 = arith.constant 0 : index
    %309 = vector.load %arg9[%c1_164, %c0_165] : memref<2x128xf32, #tpu.memory_space<vmem>>, vector<1x128xf32>
    %c1_166 = arith.constant 1 : index
    %c0_167 = arith.constant 0 : index
    %310 = vector.load %arg10[%c1_166, %c0_167] : memref<2x128xf32, #tpu.memory_space<vmem>>, vector<1x128xf32>
    %cst_168 = arith.constant dense<0.000000e+00> : vector<16xf32>
    %311 = vector.multi_reduction <add>, %308, %cst_168 [1] : vector<16x128xf32> to vector<16xf32>
    %312 = vector.shape_cast %311 : vector<16xf32> to vector<16x1xf32>
    %cst_169 = arith.constant 1.280000e+02 : f32
    %313 = vector.broadcast %cst_169 : f32 to vector<16x1xf32>
    %314 = arith.divf %312, %313 : vector<16x1xf32>
    %315 = vector.broadcast %314 : vector<16x1xf32> to vector<16x128xf32>
    %316 = arith.subf %308, %315 : vector<16x128xf32>
    %317 = arith.mulf %316, %316 : vector<16x128xf32>
    %cst_170 = arith.constant dense<0.000000e+00> : vector<16xf32>
    %318 = vector.multi_reduction <add>, %317, %cst_170 [1] : vector<16x128xf32> to vector<16xf32>
    %319 = vector.shape_cast %318 : vector<16xf32> to vector<16x1xf32>
    %cst_171 = arith.constant 1.280000e+02 : f32
    %320 = vector.broadcast %cst_171 : f32 to vector<16x1xf32>
    %321 = arith.divf %319, %320 : vector<16x1xf32>
    %cst_172 = arith.constant 9.99999974E-6 : f32
    %322 = vector.broadcast %cst_172 : f32 to vector<16x1xf32>
    %323 = arith.addf %321, %322 : vector<16x1xf32>
    %324 = math.rsqrt %323 : vector<16x1xf32>
    %325 = vector.broadcast %324 : vector<16x1xf32> to vector<16x128xf32>
    %326 = arith.mulf %316, %325 : vector<16x128xf32>
    %327 = vector.broadcast %309 : vector<1x128xf32> to vector<16x128xf32>
    %328 = arith.mulf %326, %327 : vector<16x128xf32>
    %329 = vector.broadcast %310 : vector<1x128xf32> to vector<16x128xf32>
    %330 = arith.addf %328, %329 : vector<16x128xf32>
    %331 = arith.truncf %330 : vector<16x128xf32> to vector<16x128xbf16>
    %c0_173 = arith.constant 0 : index
    %c0_174 = arith.constant 0 : index
    %c0_175 = arith.constant 0 : index
    %332 = vector.load %arg15[%c0_173, %c0_174, %c0_175] : memref<2x128x128xbf16, #tpu.memory_space<vmem>>, vector<1x128x128xbf16>
    %333 = vector.shape_cast %332 : vector<1x128x128xbf16> to vector<128x128xbf16>
    %cst_176 = arith.constant dense<0.000000e+00> : vector<16x128xf32>
    %334 = tpu.matmul %331, %333, %cst_176 {dimension_numbers = #tpu.dot_dimension_numbers<[1], [0], [0], [1], [0, 0, 1, 1], [], []>} : vector<16x128xbf16>, vector<128x128xbf16>, vector<16x128xf32> -> vector<16x128xf32>
    %c0_177 = arith.constant 0 : index
    %c0_178 = arith.constant 0 : index
    %335 = vector.load %arg16[%c0_177, %c0_178] : memref<2x128xf32, #tpu.memory_space<vmem>>, vector<1x128xf32>
    %336 = vector.broadcast %335 : vector<1x128xf32> to vector<16x128xf32>
    %337 = arith.addf %334, %336 : vector<16x128xf32>
    %cst_179 = arith.constant 0.000000e+00 : f32
    %338 = vector.broadcast %cst_179 : f32 to vector<16x128xf32>
    %339 = arith.maximumf %337, %338 : vector<16x128xf32>
    %340 = arith.truncf %339 : vector<16x128xf32> to vector<16x128xbf16>
    %c1_180 = arith.constant 1 : index
    %c0_181 = arith.constant 0 : index
    %c0_182 = arith.constant 0 : index
    %341 = vector.load %arg15[%c1_180, %c0_181, %c0_182] : memref<2x128x128xbf16, #tpu.memory_space<vmem>>, vector<1x128x128xbf16>
    %342 = vector.shape_cast %341 : vector<1x128x128xbf16> to vector<128x128xbf16>
    %cst_183 = arith.constant dense<0.000000e+00> : vector<16x128xf32>
    %343 = tpu.matmul %340, %342, %cst_183 {dimension_numbers = #tpu.dot_dimension_numbers<[1], [0], [0], [1], [0, 0, 1, 1], [], []>} : vector<16x128xbf16>, vector<128x128xbf16>, vector<16x128xf32> -> vector<16x128xf32>
    %c1_184 = arith.constant 1 : index
    %c0_185 = arith.constant 0 : index
    %344 = vector.load %arg16[%c1_184, %c0_185] : memref<2x128xf32, #tpu.memory_space<vmem>>, vector<1x128xf32>
    %345 = vector.broadcast %344 : vector<1x128xf32> to vector<16x128xf32>
    %346 = arith.addf %343, %345 : vector<16x128xf32>
    %347 = arith.addf %346, %308 : vector<16x128xf32>
    %348 = vector.shape_cast %347 : vector<16x128xf32> to vector<1x16x128xf32>
    %c0_186 = arith.constant 0 : index
    %c0_187 = arith.constant 0 : index
    %c0_188 = arith.constant 0 : index
    %349 = vector.load %arg17[%c0_186, %c0_187, %c0_188] : memref<1x16x128xf32, #tpu.memory_space<vmem>>, vector<1x16x128xf32>
    tpu.vector_store %arg17[%c0_186, %c0_187, %c0_188], %348 {strides = array<i32>} : memref<1x16x128xf32, #tpu.memory_space<vmem>>, vector<1x16x128xf32>,
    return
  }
  func.func @transform_0(%arg0: i32) -> (i32, i32, i32) {
    %c0_i32 = arith.constant 0 : i32
    %c0_i32_0 = arith.constant 0 : i32
    %c0_i32_1 = arith.constant 0 : i32
    return %arg0, %c0_i32, %c0_i32_0 : i32, i32, i32
  }
  func.func @transform_1(%arg0: i32) -> (i32, i32, i32) {
    %c0_i32 = arith.constant 0 : i32
    %c0_i32_0 = arith.constant 0 : i32
    %c0_i32_1 = arith.constant 0 : i32
    return %arg0, %c0_i32, %c0_i32_0 : i32, i32, i32
  }
  func.func @transform_2(%arg0: i32) -> (i32, i32) {
    %c0_i32 = arith.constant 0 : i32
    %c0_i32_0 = arith.constant 0 : i32
    %c0_i32_1 = arith.constant 0 : i32
    return %c0_i32, %c0_i32_0 : i32, i32
  }
  func.func @transform_3(%arg0: i32) -> (i32, i32) {
    %c0_i32 = arith.constant 0 : i32
    %c0_i32_0 = arith.constant 0 : i32
    %c0_i32_1 = arith.constant 0 : i32
    return %c0_i32, %c0_i32_0 : i32, i32
  }
  func.func @transform_4(%arg0: i32) -> (i32, i32) {
    %c0_i32 = arith.constant 0 : i32
    %c0_i32_0 = arith.constant 0 : i32
    %c0_i32_1 = arith.constant 0 : i32
    return %c0_i32, %c0_i32_0 : i32, i32
  }
  func.func @transform_5(%arg0: i32) -> (i32, i32, i32) {
    %c0_i32 = arith.constant 0 : i32
    %c0_i32_0 = arith.constant 0 : i32
    %c0_i32_1 = arith.constant 0 : i32
    %c0_i32_2 = arith.constant 0 : i32
    return %c0_i32, %c0_i32_0, %c0_i32_1 : i32, i32, i32
  }
  func.func @transform_6(%arg0: i32) -> (i32, i32, i32) {
    %c0_i32 = arith.constant 0 : i32
    %c0_i32_0 = arith.constant 0 : i32
    %c0_i32_1 = arith.constant 0 : i32
    %c0_i32_2 = arith.constant 0 : i32
    return %c0_i32, %c0_i32_0, %c0_i32_1 : i32, i32, i32
  }
  func.func @transform_7(%arg0: i32) -> (i32, i32) {
    %c0_i32 = arith.constant 0 : i32
    %c0_i32_0 = arith.constant 0 : i32
    %c0_i32_1 = arith.constant 0 : i32
    return %c0_i32, %c0_i32_0 : i32, i32
  }
  func.func @transform_8(%arg0: i32) -> (i32, i32) {
    %c0_i32 = arith.constant 0 : i32
    %c0_i32_0 = arith.constant 0 : i32
    %c0_i32_1 = arith.constant 0 : i32
    return %c0_i32, %c0_i32_0 : i32, i32
  }
  func.func @transform_9(%arg0: i32) -> (i32, i32) {
    %c0_i32 = arith.constant 0 : i32
    %c0_i32_0 = arith.constant 0 : i32
    %c0_i32_1 = arith.constant 0 : i32
    return %c0_i32, %c0_i32_0 : i32, i32
  }
  func.func @transform_10(%arg0: i32) -> (i32, i32) {
    %c0_i32 = arith.constant 0 : i32
    %c0_i32_0 = arith.constant 0 : i32
    %c0_i32_1 = arith.constant 0 : i32
    return %c0_i32, %c0_i32_0 : i32, i32
  }
  func.func @transform_11(%arg0: i32) -> (i32, i32) {
    %c0_i32 = arith.constant 0 : i32
    %c0_i32_0 = arith.constant 0 : i32
    %c0_i32_1 = arith.constant 0 : i32
    return %c0_i32, %c0_i32_0 : i32, i32
  }
  func.func @transform_12(%arg0: i32) -> (i32, i32) {
    %c0_i32 = arith.constant 0 : i32
    %c0_i32_0 = arith.constant 0 : i32
    %c0_i32_1 = arith.constant 0 : i32
    return %c0_i32, %c0_i32_0 : i32, i32
  }
  func.func @transform_13(%arg0: i32) -> (i32, i32) {
    %c0_i32 = arith.constant 0 : i32
    %c0_i32_0 = arith.constant 0 : i32
    %c0_i32_1 = arith.constant 0 : i32
    return %c0_i32, %c0_i32_0 : i32, i32
  }
  func.func @transform_14(%arg0: i32) -> (i32, i32, i32) {
    %c0_i32 = arith.constant 0 : i32
    %c0_i32_0 = arith.constant 0 : i32
    %c0_i32_1 = arith.constant 0 : i32
    %c0_i32_2 = arith.constant 0 : i32
    return %c0_i32, %c0_i32_0, %c0_i32_1 : i32, i32, i32
  }
  func.func @transform_15(%arg0: i32) -> (i32, i32) {
    %c0_i32 = arith.constant 0 : i32
    %c0_i32_0 = arith.constant 0 : i32
    %c0_i32_1 = arith.constant 0 : i32
    return %c0_i32, %c0_i32_0 : i32, i32
  }
  func.func @transform_16(%arg0: i32) -> (i32, i32, i32) {
    %c0_i32 = arith.constant 0 : i32
    %c0_i32_0 = arith.constant 0 : i32
    %c0_i32_1 = arith.constant 0 : i32
    return %arg0, %c0_i32, %c0_i32_0 : i32, i32, i32
  }
}

</mosaic_0001>

<llo_original>
// kernel: stacked_encoder_forward.1
$region0: #{stacked_encoder_forward.1}
  #allocation0 [shape = 'u32[]', space=smem, size = 0x4, offset = 0x4, fixed_abs, tag = 'smem constant byte address 0x4 - core index']
  #allocation1 [shape = 'u32[144,128]{1,0:T(1,128)}', space=vmem, size = 0x12000, scoped, tag = 'internal scratch']
  #allocation2 [shape = 'f32[1,32,128]{2,1,0:T(8,128)}', space=vmem, size = 0x4000, scoped, tag = 'scratch operand']
  %s0 = inlined_call_operand.vmem [shape: f32[2,16,128], index: 0, kind: input, shape index: {}, may-alias: {0,16}]
  %s1 = inlined_call_operand.vmem [shape: f32[2,1,16], index: 1, kind: input, shape index: {}]
  %s2 = inlined_call_operand.vmem [shape: f32[16,128], index: 2, kind: input, shape index: {}]
  %s3 = inlined_call_operand.vmem [shape: f32[2,128], index: 3, kind: input, shape index: {}]
  %s4 = inlined_call_operand.vmem [shape: f32[2,128], index: 4, kind: input, shape index: {}]
  %s5 = inlined_call_operand.vmem [shape: f32[2,7,128], index: 5, kind: input, shape index: {}]
  %s6 = inlined_call_operand.vmem [shape: bf16[2,128,128], index: 6, kind: input, shape index: {}]
  %s7 = inlined_call_operand.vmem [shape: f32[2,128], index: 7, kind: input, shape index: {}]
  %s8 = inlined_call_operand.vmem [shape: f32[2,128], index: 8, kind: input, shape index: {}]
  %s9 = inlined_call_operand.vmem [shape: f32[2,128], index: 9, kind: input, shape index: {}]
  %s10 = inlined_call_operand.vmem [shape: bf16[128,384], index: 10, kind: input, shape index: {}]
  %s11 = inlined_call_operand.vmem [shape: f32[1,384], index: 11, kind: input, shape index: {}]
  %s12 = inlined_call_operand.vmem [shape: bf16[128,128], index: 12, kind: input, shape index: {}]
  %s13 = inlined_call_operand.vmem [shape: f32[1,128], index: 13, kind: input, shape index: {}]
  %s14 = inlined_call_operand.vmem [shape: bf16[2,128,128], index: 14, kind: input, shape index: {}]
  %s15 = inlined_call_operand.vmem [shape: f32[2,128], index: 15, kind: input, shape index: {}]
  %s16 = inlined_call_operand.vmem [shape: f32[2,16,128], index: 16, kind: output, shape index: {}, may-alias: {0,16}]
  %s17 = sld [smem:[#allocation0]]
  $region97: #{stacked_encoder_forward.1} parent=0
    _
  %s19 = ssub.s32 1, %s17
  %s20 = scalar_select 0, %s19, %s17
  loop: start=0, step=1, limit=4
  $region2: #{stacked_encoder_forward.1} parent=0 // loop_pre_header
    _
  $region3: #{stacked_encoder_forward.1} parent=0 // loop_header
    %s22 = sphi 0, %s26
    %p23 = scmp.ge.s32.totalorder %s22, 4
    %s32 = sphi 0, %s34
    %s35 = sphi 0, %s32
    %s36 = sphi 0, %s35
    %s52 = sphi 0, %s36
    %s58 = sphi 0, %s60
    %s61 = sphi 0, %s58
    %s62 = sphi 0, %s61
    %s78 = sphi 0, %s62
    %s82 = sphi 0, %s82
    %s84 = sphi 0, %s82
    %s85 = sphi 0, %s84
    %s99 = sphi 0, %s85
    %s103 = sphi 0, %s103
    %s105 = sphi 0, %s103
    %s106 = sphi 0, %s105
    %s120 = sphi 0, %s106
    %s124 = sphi 0, %s124
    %s126 = sphi 0, %s124
    %s127 = sphi 0, %s126
    %s141 = sphi 0, %s127
    %s145 = sphi 0, %s145
    %s147 = sphi 0, %s145
    %s148 = sphi 0, %s147
    %s162 = sphi 0, %s148
    %s166 = sphi 0, %s166
    %s168 = sphi 0, %s166
    %s169 = sphi 0, %s168
    %s183 = sphi 0, %s169
    %s187 = sphi 0, %s187
    %s189 = sphi 0, %s187
    %s190 = sphi 0, %s189
    %s204 = sphi 0, %s190
    %s208 = sphi 0, %s208
    %s210 = sphi 0, %s208
    %s211 = sphi 0, %s210
    %s225 = sphi 0, %s211
    %s229 = sphi 0, %s229
    %s231 = sphi 0, %s229
    %s232 = sphi 0, %s231
    %s246 = sphi 0, %s232
    %s250 = sphi 0, %s250
    %s252 = sphi 0, %s250
    %s253 = sphi 0, %s252
    %s267 = sphi 0, %s253
    %s271 = sphi 0, %s271
    %s273 = sphi 0, %s271
    %s274 = sphi 0, %s273
    %s288 = sphi 0, %s274
    %s292 = sphi 0, %s292
    %s294 = sphi 0, %s292
    %s295 = sphi 0, %s294
    %s309 = sphi 0, %s295
    %s313 = sphi 0, %s313
    %s315 = sphi 0, %s313
    %s316 = sphi 0, %s315
    %s330 = sphi 0, %s316
    %s334 = sphi 0, %s334
    %s336 = sphi 0, %s334
    %s337 = sphi 0, %s336
    %s351 = sphi 0, %s337
    %s355 = sphi 0, %s355
    %s357 = sphi 0, %s355
    %s358 = sphi 0, %s357
    %s372 = sphi 0, %s358
    %s378 = sphi 0, %s380
    %s381 = sphi 0, %s378
    %s382 = sphi 0, %s381
    %s398 = sphi 0, %s382
  $region4: #{stacked_encoder_forward.1} parent=0 // loop_header_branch
    %25 = sbr.rel (%p23) target = $region8
  $region5: #{stacked_encoder_forward.1} parent=0 // loop_body
    %s27 = ssub.s32 %s22, 1
    %s28 = ssub.s32 %s22, 2
    %s29 = sadd.s32 %s22, 1
    %s30 = ssub.s32 %s22, %s29
    %p31 = scmp.eq.s32.totalorder %s30, 0
    %s33 = sadd.s32 %s32, 1
    %s34 = scalar_select %p31, %s32, %s33
    %p37 = pneg %p31
    %p38 = scmp.eq.s32.totalorder %s22, 1
    %p39 = por %p37, %p38
    %p40 = scmp.ne.s32.totalorder %s32, %s35
    %p41 = scmp.eq.s32.totalorder %s22, 0
    %p42 = por %p40, %p41
    %p43 = scmp.ne.s32.totalorder %s32, %s35
    %p44 = scmp.eq.s32.totalorder %s27, 1
    %p45 = por %p43, %p44
    %p46 = scmp.ne.s32.totalorder %s35, %s36
    %p47 = scmp.eq.s32.totalorder %s27, 0
    %p48 = por %p46, %p47
    %p49 = scmp.ne.s32.totalorder %s35, %s36
    %p50 = scmp.eq.s32.totalorder %s28, 1
    %p51 = por %p49, %p50
    %p53 = scmp.ne.s32.totalorder %s36, %s52
    %p54 = scmp.eq.s32.totalorder %s28, 0
    %p55 = por %p53, %p54
    %s56 = ssub.s32 %s22, %s29
    %p57 = scmp.eq.s32.totalorder %s56, 0
    %s59 = sadd.s32 %s58, 1
    %s60 = scalar_select %p57, %s58, %s59
    %p63 = pneg %p57
    %p64 = scmp.eq.s32.totalorder %s22, 1
    %p65 = por %p63, %p64
    %p66 = scmp.ne.s32.totalorder %s58, %s61
    %p67 = scmp.eq.s32.totalorder %s22, 0
    %p68 = por %p66, %p67
    %p69 = scmp.ne.s32.totalorder %s58, %s61
    %p70 = scmp.eq.s32.totalorder %s27, 1
    %p71 = por %p69, %p70
    %p72 = scmp.ne.s32.totalorder %s61, %s62
    %p73 = scmp.eq.s32.totalorder %s27, 0
    %p74 = por %p72, %p73
    %p75 = scmp.ne.s32.totalorder %s61, %s62
    %p76 = scmp.eq.s32.totalorder %s28, 1
    %p77 = por %p75, %p76
    %p79 = scmp.ne.s32.totalorder %s62, %s78
    %p80 = scmp.eq.s32.totalorder %s28, 0
    %p81 = por %p79, %p80
    %s83 = sadd.s32 %s82, 1
    %p86 = scmp.eq.s32.totalorder %s22, 1
    %p87 = scmp.ne.s32.totalorder %s82, %s84
    %p88 = scmp.eq.s32.totalorder %s22, 0
    %p89 = por %p87, %p88
    %p90 = scmp.ne.s32.totalorder %s82, %s84
    %p91 = scmp.eq.s32.totalorder %s27, 1
    %p92 = por %p90, %p91
    %p93 = scmp.ne.s32.totalorder %s84, %s85
    %p94 = scmp.eq.s32.totalorder %s27, 0
    %p95 = por %p93, %p94
    %p96 = scmp.ne.s32.totalorder %s84, %s85
    %p97 = scmp.eq.s32.totalorder %s28, 1
    %p98 = por %p96, %p97
    %p100 = scmp.ne.s32.totalorder %s85, %s99
    %p101 = scmp.eq.s32.totalorder %s28, 0
    %p102 = por %p100, %p101
    %s104 = sadd.s32 %s103, 1
    %p107 = scmp.eq.s32.totalorder %s22, 1
    %p108 = scmp.ne.s32.totalorder %s103, %s105
    %p109 = scmp.eq.s32.totalorder %s22, 0
    %p110 = por %p108, %p109
    %p111 = scmp.ne.s32.totalorder %s103, %s105
    %p112 = scmp.eq.s32.totalorder %s27, 1
    %p113 = por %p111, %p112
    %p114 = scmp.ne.s32.totalorder %s105, %s106
    %p115 = scmp.eq.s32.totalorder %s27, 0
    %p116 = por %p114, %p115
    %p117 = scmp.ne.s32.totalorder %s105, %s106
    %p118 = scmp.eq.s32.totalorder %s28, 1
    %p119 = por %p117, %p118
    %p121 = scmp.ne.s32.totalorder %s106, %s120
    %p122 = scmp.eq.s32.totalorder %s28, 0
    %p123 = por %p121, %p122
    %s125 = sadd.s32 %s124, 1
    %p128 = scmp.eq.s32.totalorder %s22, 1
    %p129 = scmp.ne.s32.totalorder %s124, %s126
    %p130 = scmp.eq.s32.totalorder %s22, 0
    %p131 = por %p129, %p130
    %p132 = scmp.ne.s32.totalorder %s124, %s126
    %p133 = scmp.eq.s32.totalorder %s27, 1
    %p134 = por %p132, %p133
    %p135 = scmp.ne.s32.totalorder %s126, %s127
    %p136 = scmp.eq.s32.totalorder %s27, 0
    %p137 = por %p135, %p136
    %p138 = scmp.ne.s32.totalorder %s126, %s127
    %p139 = scmp.eq.s32.totalorder %s28, 1
    %p140 = por %p138, %p139
    %p142 = scmp.ne.s32.totalorder %s127, %s141
    %p143 = scmp.eq.s32.totalorder %s28, 0
    %p144 = por %p142, %p143
    %s146 = sadd.s32 %s145, 1
    %p149 = scmp.eq.s32.totalorder %s22, 1
    %p150 = scmp.ne.s32.totalorder %s145, %s147
    %p151 = scmp.eq.s32.totalorder %s22, 0
    %p152 = por %p150, %p151
    %p153 = scmp.ne.s32.totalorder %s145, %s147
    %p154 = scmp.eq.s32.totalorder %s27, 1
    %p155 = por %p153, %p154
    %p156 = scmp.ne.s32.totalorder %s147, %s148
    %p157 = scmp.eq.s32.totalorder %s27, 0
    %p158 = por %p156, %p157
    %p159 = scmp.ne.s32.totalorder %s147, %s148
    %p160 = scmp.eq.s32.totalorder %s28, 1
    %p161 = por %p159, %p160
    %p163 = scmp.ne.s32.totalorder %s148, %s162
    %p164 = scmp.eq.s32.totalorder %s28, 0
    %p165 = por %p163, %p164
    %s167 = sadd.s32 %s166, 1
    %p170 = scmp.eq.s32.totalorder %s22, 1
    %p171 = scmp.ne.s32.totalorder %s166, %s168
    %p172 = scmp.eq.s32.totalorder %s22, 0
    %p173 = por %p171, %p172
    %p174 = scmp.ne.s32.totalorder %s166, %s168
    %p175 = scmp.eq.s32.totalorder %s27, 1
    %p176 = por %p174, %p175
    %p177 = scmp.ne.s32.totalorder %s168, %s169
    %p178 = scmp.eq.s32.totalorder %s27, 0
    %p179 = por %p177, %p178
    %p180 = scmp.ne.s32.totalorder %s168, %s169
    %p181 = scmp.eq.s32.totalorder %s28, 1
    %p182 = por %p180, %p181
    %p184 = scmp.ne.s32.totalorder %s169, %s183
    %p185 = scmp.eq.s32.totalorder %s28, 0
    %p186 = por %p184, %p185
    %s188 = sadd.s32 %s187, 1
    %p191 = scmp.eq.s32.totalorder %s22, 1
    %p192 = scmp.ne.s32.totalorder %s187, %s189
    %p193 = scmp.eq.s32.totalorder %s22, 0
    %p194 = por %p192, %p193
    %p195 = scmp.ne.s32.totalorder %s187, %s189
    %p196 = scmp.eq.s32.totalorder %s27, 1
    %p197 = por %p195, %p196
    %p198 = scmp.ne.s32.totalorder %s189, %s190
    %p199 = scmp.eq.s32.totalorder %s27, 0
    %p200 = por %p198, %p199
    %p201 = scmp.ne.s32.totalorder %s189, %s190
    %p202 = scmp.eq.s32.totalorder %s28, 1
    %p203 = por %p201, %p202
    %p205 = scmp.ne.s32.totalorder %s190, %s204
    %p206 = scmp.eq.s32.totalorder %s28, 0
    %p207 = por %p205, %p206
    %s209 = sadd.s32 %s208, 1
    %p212 = scmp.eq.s32.totalorder %s22, 1
    %p213 = scmp.ne.s32.totalorder %s208, %s210
    %p214 = scmp.eq.s32.totalorder %s22, 0
    %p215 = por %p213, %p214
    %p216 = scmp.ne.s32.totalorder %s208, %s210
    %p217 = scmp.eq.s32.totalorder %s27, 1
    %p218 = por %p216, %p217
    %p219 = scmp.ne.s32.totalorder %s210, %s211
    %p220 = scmp.eq.s32.totalorder %s27, 0
    %p221 = por %p219, %p220
    %p222 = scmp.ne.s32.totalorder %s210, %s211
    %p223 = scmp.eq.s32.totalorder %s28, 1
    %p224 = por %p222, %p223
    %p226 = scmp.ne.s32.totalorder %s211, %s225
    %p227 = scmp.eq.s32.totalorder %s28, 0
    %p228 = por %p226, %p227
    %s230 = sadd.s32 %s229, 1
    %p233 = scmp.eq.s32.totalorder %s22, 1
    %p234 = scmp.ne.s32.totalorder %s229, %s231
    %p235 = scmp.eq.s32.totalorder %s22, 0
    %p236 = por %p234, %p235
    %p237 = scmp.ne.s32.totalorder %s229, %s231
    %p238 = scmp.eq.s32.totalorder %s27, 1
    %p239 = por %p237, %p238
    %p240 = scmp.ne.s32.totalorder %s231, %s232
    %p241 = scmp.eq.s32.totalorder %s27, 0
    %p242 = por %p240, %p241
    %p243 = scmp.ne.s32.totalorder %s231, %s232
    %p244 = scmp.eq.s32.totalorder %s28, 1
    %p245 = por %p243, %p244
    %p247 = scmp.ne.s32.totalorder %s232, %s246
    %p248 = scmp.eq.s32.totalorder %s28, 0
    %p249 = por %p247, %p248
    %s251 = sadd.s32 %s250, 1
    %p254 = scmp.eq.s32.totalorder %s22, 1
    %p255 = scmp.ne.s32.totalorder %s250, %s252
    %p256 = scmp.eq.s32.totalorder %s22, 0
    %p257 = por %p255, %p256
    %p258 = scmp.ne.s32.totalorder %s250, %s252
    %p259 = scmp.eq.s32.totalorder %s27, 1
    %p260 = por %p258, %p259
    %p261 = scmp.ne.s32.totalorder %s252, %s253
    %p262 = scmp.eq.s32.totalorder %s27, 0
    %p263 = por %p261, %p262
    %p264 = scmp.ne.s32.totalorder %s252, %s253
    %p265 = scmp.eq.s32.totalorder %s28, 1
    %p266 = por %p264, %p265
    %p268 = scmp.ne.s32.totalorder %s253, %s267
    %p269 = scmp.eq.s32.totalorder %s28, 0
    %p270 = por %p268, %p269
    %s272 = sadd.s32 %s271, 1
    %p275 = scmp.eq.s32.totalorder %s22, 1
    %p276 = scmp.ne.s32.totalorder %s271, %s273
    %p277 = scmp.eq.s32.totalorder %s22, 0
    %p278 = por %p276, %p277
    %p279 = scmp.ne.s32.totalorder %s271, %s273
    %p280 = scmp.eq.s32.totalorder %s27, 1
    %p281 = por %p279, %p280
    %p282 = scmp.ne.s32.totalorder %s273, %s274
    %p283 = scmp.eq.s32.totalorder %s27, 0
    %p284 = por %p282, %p283
    %p285 = scmp.ne.s32.totalorder %s273, %s274
    %p286 = scmp.eq.s32.totalorder %s28, 1
    %p287 = por %p285, %p286
    %p289 = scmp.ne.s32.totalorder %s274, %s288
    %p290 = scmp.eq.s32.totalorder %s28, 0
    %p291 = por %p289, %p290
    %s293 = sadd.s32 %s292, 1
    %p296 = scmp.eq.s32.totalorder %s22, 1
    %p297 = scmp.ne.s32.totalorder %s292, %s294
    %p298 = scmp.eq.s32.totalorder %s22, 0
    %p299 = por %p297, %p298
    %p300 = scmp.ne.s32.totalorder %s292, %s294
    %p301 = scmp.eq.s32.totalorder %s27, 1
    %p302 = por %p300, %p301
    %p303 = scmp.ne.s32.totalorder %s294, %s295
    %p304 = scmp.eq.s32.totalorder %s27, 0
    %p305 = por %p303, %p304
    %p306 = scmp.ne.s32.totalorder %s294, %s295
    %p307 = scmp.eq.s32.totalorder %s28, 1
    %p308 = por %p306, %p307
    %p310 = scmp.ne.s32.totalorder %s295, %s309
    %p311 = scmp.eq.s32.totalorder %s28, 0
    %p312 = por %p310, %p311
    %s314 = sadd.s32 %s313, 1
    %p317 = scmp.eq.s32.totalorder %s22, 1
    %p318 = scmp.ne.s32.totalorder %s313, %s315
    %p319 = scmp.eq.s32.totalorder %s22, 0
    %p320 = por %p318, %p319
    %p321 = scmp.ne.s32.totalorder %s313, %s315
    %p322 = scmp.eq.s32.totalorder %s27, 1
    %p323 = por %p321, %p322
    %p324 = scmp.ne.s32.totalorder %s315, %s316
    %p325 = scmp.eq.s32.totalorder %s27, 0
    %p326 = por %p324, %p325
    %p327 = scmp.ne.s32.totalorder %s315, %s316
    %p328 = scmp.eq.s32.totalorder %s28, 1
    %p329 = por %p327, %p328
    %p331 = scmp.ne.s32.totalorder %s316, %s330
    %p332 = scmp.eq.s32.totalorder %s28, 0
    %p333 = por %p331, %p332
    %s335 = sadd.s32 %s334, 1
    %p338 = scmp.eq.s32.totalorder %s22, 1
    %p339 = scmp.ne.s32.totalorder %s334, %s336
    %p340 = scmp.eq.s32.totalorder %s22, 0
    %p341 = por %p339, %p340
    %p342 = scmp.ne.s32.totalorder %s334, %s336
    %p343 = scmp.eq.s32.totalorder %s27, 1
    %p344 = por %p342, %p343
    %p345 = scmp.ne.s32.totalorder %s336, %s337
    %p346 = scmp.eq.s32.totalorder %s27, 0
    %p347 = por %p345, %p346
    %p348 = scmp.ne.s32.totalorder %s336, %s337
    %p349 = scmp.eq.s32.totalorder %s28, 1
    %p350 = por %p348, %p349
    %p352 = scmp.ne.s32.totalorder %s337, %s351
    %p353 = scmp.eq.s32.totalorder %s28, 0
    %p354 = por %p352, %p353
    %s356 = sadd.s32 %s355, 1
    %p359 = scmp.eq.s32.totalorder %s22, 1
    %p360 = scmp.ne.s32.totalorder %s355, %s357
    %p361 = scmp.eq.s32.totalorder %s22, 0
    %p362 = por %p360, %p361
    %p363 = scmp.ne.s32.totalorder %s355, %s357
    %p364 = scmp.eq.s32.totalorder %s27, 1
    %p365 = por %p363, %p364
    %p366 = scmp.ne.s32.totalorder %s357, %s358
    %p367 = scmp.eq.s32.totalorder %s27, 0
    %p368 = por %p366, %p367
    %p369 = scmp.ne.s32.totalorder %s357, %s358
    %p370 = scmp.eq.s32.totalorder %s28, 1
    %p371 = por %p369, %p370
    %p373 = scmp.ne.s32.totalorder %s358, %s372
    %p374 = scmp.eq.s32.totalorder %s28, 0
    %p375 = por %p373, %p374
    %s376 = ssub.s32 %s22, %s29
    %p377 = scmp.eq.s32.totalorder %s376, 0
    %s379 = sadd.s32 %s378, 1
    %s380 = scalar_select %p377, %s378, %s379
    %p383 = pneg %p377
    %p384 = scmp.eq.s32.totalorder %s22, 1
    %p385 = por %p383, %p384
    %p386 = scmp.ne.s32.totalorder %s378, %s381
    %p387 = scmp.eq.s32.totalorder %s22, 0
    %p388 = por %p386, %p387
    %p389 = scmp.ne.s32.totalorder %s378, %s381
    %p390 = scmp.eq.s32.totalorder %s27, 1
    %p391 = por %p389, %p390
    %p392 = scmp.ne.s32.totalorder %s381, %s382
    %p393 = scmp.eq.s32.totalorder %s27, 0
    %p394 = por %p392, %p393
    %p395 = scmp.ne.s32.totalorder %s381, %s382
    %p396 = scmp.eq.s32.totalorder %s28, 1
    %p397 = por %p395, %p396
    %p399 = scmp.ne.s32.totalorder %s382, %s398
    %p400 = scmp.eq.s32.totalorder %s28, 0
    %p401 = por %p399, %p400
    %p402 = scmp.le.s32.totalorder 1, %s22
    %p403 = scmp.lt.s32.totalorder %s22, 3
    %p404 = pnand %p402, %p403
    %p405 = pneg %p404
    // Predicated region
    $region9: #{stacked_encoder_forward.1} parent=5 // pred_check
      _
    $region10: #{stacked_encoder_forward.1} parent=5 // pred_check_branch
      %407 = sbr.rel (%p404) target = $region12
    $region11: #{stacked_encoder_forward.1} parent=5 // pred_region
      %s408 = ssub.s32 %s22, 1
      // Predicated region
      $region13: #{stacked_encoder_forward.1} parent=11 // pred_check
        %p409 = pneg %p95
      $region14: #{stacked_encoder_forward.1} parent=11 // pred_check_branch
        %411 = sbr.rel (%p409) target = $region16
      $region15: #{stacked_encoder_forward.1} parent=11 // pred_region
        _
      $region16: #{stacked_encoder_forward.1} parent=11 // pred_fallthru
        _
      // Predicated region
      $region17: #{stacked_encoder_forward.1} parent=11 // pred_check
        %p412 = pneg %p116
      $region18: #{stacked_encoder_forward.1} parent=11 // pred_check_branch
        %414 = sbr.rel (%p412) target = $region20
      $region19: #{stacked_encoder_forward.1} parent=11 // pred_region
        _
      $region20: #{stacked_encoder_forward.1} parent=11 // pred_fallthru
        _
      // Predicated region
      $region21: #{stacked_encoder_forward.1} parent=11 // pred_check
        %p415 = pneg %p137
      $region22: #{stacked_encoder_forward.1} parent=11 // pred_check_branch
        %417 = sbr.rel (%p415) target = $region24
      $region23: #{stacked_encoder_forward.1} parent=11 // pred_region
        _
      $region24: #{stacked_encoder_forward.1} parent=11 // pred_fallthru
        _
      // Predicated region
      $region25: #{stacked_encoder_forward.1} parent=11 // pred_check
        %p418 = pneg %p158
      $region26: #{stacked_encoder_forward.1} parent=11 // pred_check_branch
        %420 = sbr.rel (%p418) target = $region28
      $region27: #{stacked_encoder_forward.1} parent=11 // pred_region
        _
      $region28: #{stacked_encoder_forward.1} parent=11 // pred_fallthru
        _
      // Predicated region
      $region29: #{stacked_encoder_forward.1} parent=11 // pred_check
        %p421 = pneg %p179
      $region30: #{stacked_encoder_forward.1} parent=11 // pred_check_branch
        %423 = sbr.rel (%p421) target = $region32
      $region31: #{stacked_encoder_forward.1} parent=11 // pred_region
        _
      $region32: #{stacked_encoder_forward.1} parent=11 // pred_fallthru
        _
      // Predicated region
      $region33: #{stacked_encoder_forward.1} parent=11 // pred_check
        %p424 = pneg %p200
      $region34: #{stacked_encoder_forward.1} parent=11 // pred_check_branch
        %426 = sbr.rel (%p424) target = $region36
      $region35: #{stacked_encoder_forward.1} parent=11 // pred_region
        _
      $region36: #{stacked_encoder_forward.1} parent=11 // pred_fallthru
        _
      // Predicated region
      $region37: #{stacked_encoder_forward.1} parent=11 // pred_check
        %p427 = pneg %p221
      $region38: #{stacked_encoder_forward.1} parent=11 // pred_check_branch
        %429 = sbr.rel (%p427) target = $region40
      $region39: #{stacked_encoder_forward.1} parent=11 // pred_region
        _
      $region40: #{stacked_encoder_forward.1} parent=11 // pred_fallthru
        _
      // Predicated region
      $region41: #{stacked_encoder_forward.1} parent=11 // pred_check
        %p430 = pneg %p242
      $region42: #{stacked_encoder_forward.1} parent=11 // pred_check_branch
        %432 = sbr.rel (%p430) target = $region44
      $region43: #{stacked_encoder_forward.1} parent=11 // pred_region
        _
      $region44: #{stacked_encoder_forward.1} parent=11 // pred_fallthru
        _
      // Predicated region
      $region45: #{stacked_encoder_forward.1} parent=11 // pred_check
        %p433 = pneg %p263
      $region46: #{stacked_encoder_forward.1} parent=11 // pred_check_branch
        %435 = sbr.rel (%p433) target = $region48
      $region47: #{stacked_encoder_forward.1} parent=11 // pred_region
        _
      $region48: #{stacked_encoder_forward.1} parent=11 // pred_fallthru
        _
      // Predicated region
      $region49: #{stacked_encoder_forward.1} parent=11 // pred_check
        %p436 = pneg %p284
      $region50: #{stacked_encoder_forward.1} parent=11 // pred_check_branch
        %438 = sbr.rel (%p436) target = $region52
      $region51: #{stacked_encoder_forward.1} parent=11 // pred_region
        _
      $region52: #{stacked_encoder_forward.1} parent=11 // pred_fallthru
        _
      // Predicated region
      $region53: #{stacked_encoder_forward.1} parent=11 // pred_check
        %p439 = pneg %p305
      $region54: #{stacked_encoder_forward.1} parent=11 // pred_check_branch
        %441 = sbr.rel (%p439) target = $region56
      $region55: #{stacked_encoder_forward.1} parent=11 // pred_region
        _
      $region56: #{stacked_encoder_forward.1} parent=11 // pred_fallthru
        _
      // Predicated region
      $region57: #{stacked_encoder_forward.1} parent=11 // pred_check
        %p442 = pneg %p326
      $region58: #{stacked_encoder_forward.1} parent=11 // pred_check_branch
        %444 = sbr.rel (%p442) target = $region60
      $region59: #{stacked_encoder_forward.1} parent=11 // pred_region
        _
      $region60: #{stacked_encoder_forward.1} parent=11 // pred_fallthru
        _
      // Predicated region
      $region61: #{stacked_encoder_forward.1} parent=11 // pred_check
        %p445 = pneg %p347
      $region62: #{stacked_encoder_forward.1} parent=11 // pred_check_branch
        %447 = sbr.rel (%p445) target = $region64
      $region63: #{stacked_encoder_forward.1} parent=11 // pred_region
        _
      $region64: #{stacked_encoder_forward.1} parent=11 // pred_fallthru
        _
      // Predicated region
      $region65: #{stacked_encoder_forward.1} parent=11 // pred_check
        %p448 = pneg %p368
      $region66: #{stacked_encoder_forward.1} parent=11 // pred_check_branch
        %450 = sbr.rel (%p448) target = $region68
      $region67: #{stacked_encoder_forward.1} parent=11 // pred_region
        _
      $region68: #{stacked_encoder_forward.1} parent=11 // pred_fallthru
        _
    $region12: #{stacked_encoder_forward.1} parent=5 // pred_fallthru
      _
    %p451 = scmp.lt.s32.totalorder %s22, 2
    // Predicated region
    $region69: #{stacked_encoder_forward.1} parent=5 // pred_check
      %p452 = pneg %p451
    $region70: #{stacked_encoder_forward.1} parent=5 // pred_check_branch
      %454 = sbr.rel (%p452) target = $region72
    $region71: #{stacked_encoder_forward.1} parent=5 // pred_region
      // Predicated region
      $region73: #{stacked_encoder_forward.1} parent=71 // pred_check
        %p455 = pneg %p42
      $region74: #{stacked_encoder_forward.1} parent=71 // pred_check_branch
        %457 = sbr.rel (%p455) target = $region76
      $region75: #{stacked_encoder_forward.1} parent=71 // pred_region
        %p458 = scmp.lt.s32.totalorder %s22, 1
        %s459 = scalar_select %p458, %s22, 1
        %s460 = smul.addr %s459, 2
        %s461 = smul.addr %s460, 8
        %s462 = scalar_lea.vmem %s0, %s461
      $region76: #{stacked_encoder_forward.1} parent=71 // pred_fallthru
        _
      // Predicated region
      $region77: #{stacked_encoder_forward.1} parent=71 // pred_check
        %p463 = pneg %p68
      $region78: #{stacked_encoder_forward.1} parent=71 // pred_check_branch
        %465 = sbr.rel (%p463) target = $region80
      $region79: #{stacked_encoder_forward.1} parent=71 // pred_region
        %p466 = scmp.lt.s32.totalorder %s22, 1
        %s467 = scalar_select %p466, %s22, 1
        %s468 = scalar_lea.vmem %s1, %s467
      $region80: #{stacked_encoder_forward.1} parent=71 // pred_fallthru
        _
    $region72: #{stacked_encoder_forward.1} parent=5 // pred_fallthru
      _
    %p469 = scmp.le.s32.totalorder 1, %s22
    %p470 = scmp.lt.s32.totalorder %s22, 3
    %p471 = pnand %p469, %p470
    %p472 = pneg %p471
    // Predicated region
    $region81: #{stacked_encoder_forward.1} parent=5 // pred_check
      _
    $region82: #{stacked_encoder_forward.1} parent=5 // pred_check_branch
      %474 = sbr.rel (%p471) target = $region84
    $region83: #{stacked_encoder_forward.1} parent=5 // pred_region
      %s475 = ssub.s32 %s22, 1
      %p476 = scmp.lt.s32.totalorder %s27, 1
      %s477 = scalar_select %p476, %s27, 1
      %s478 = smul.addr %s477, 2
      %s479 = smul.addr %s478, 8
      %s480 = scalar_lea.vmem %s0, %s479
      %p481 = pneg %p48
      %p482 = pneg %p45
      %p483 = scmp.lt.s32.totalorder %s27, 1
      %s484 = scalar_select %p483, %s27, 1
      %s485 = scalar_lea.vmem %s1, %s484
      %p486 = pneg %p74
      %p487 = pneg %p71
      %p488 = pneg %p95
      %p489 = pneg %p92
      %p490 = pneg %p116
      %p491 = pneg %p113
      %p492 = pneg %p137
      %p493 = pneg %p134
      %p494 = pneg %p158
      %p495 = pneg %p155
      %p496 = pneg %p179
      %p497 = pneg %p176
      %p498 = pneg %p200
      %p499 = pneg %p197
      %p500 = pneg %p221
      %p501 = pneg %p218
      %p502 = pneg %p242
      %p503 = pneg %p239
      %p504 = pneg %p263
      %p505 = pneg %p260
      %p506 = pneg %p284
      %p507 = pneg %p281
      %p508 = pneg %p305
      %p509 = pneg %p302
      %p510 = pneg %p326
      %p511 = pneg %p323
      %p512 = pneg %p347
      %p513 = pneg %p344
      %p514 = pneg %p368
      %p515 = pneg %p365
      %p516 = pneg %p394
      %p517 = pneg %p391
      %p518 = scmp.lt.s32.totalorder %s27, 1
      %s519 = scalar_select %p518, %s27, 1
      %s520 = smul.addr %s519, 2
      %s521 = smul.addr %s520, 8
      %s522 = scalar_lea.vmem %s16, %s521
      %p523 = scmp.lt.s32.totalorder %s27, 1
      %s524 = scalar_select %p523, %s27, 1
      %s525 = smul.addr %s524, 2
      %s526 = smul.addr %s525, 8
      %s527 = scalar_lea.vmem %s0, %s526
      %p528 = scmp.lt.s32.totalorder %s27, 1
      %s529 = scalar_select %p528, %s27, 1
      %s530 = scalar_lea.vmem %s1, %s529
      %p531 = scmp.lt.s32.totalorder %s27, 1
      %s532 = scalar_select %p531, %s27, 1
      %s533 = smul.addr %s532, 2
      %s534 = smul.addr %s533, 8
      %s535 = scalar_lea.vmem %s16, %s534
      %v537 = vld [vmem:[%s527] sm:$0xff]
      %v538 = vld [vmem:[%s527 + $0x8] sm:$0xff]
      %v539 = vld [vmem:[%s2] sm:$0xff]
      %v540 = vld [vmem:[%s2 + $0x8] sm:$0xff]
      %v541 = vadd.f32 %v537, %v539
      %v542 = vadd.f32 %v538, %v540
      %543 = vst [vmem:[#allocation2] sm:$0xff] 0.0
      %544 = vst [vmem:[#allocation2 + $0x18] sm:$0xff] 0.0
      %v545 = vld [vmem:[%s3] sm:$0x1]
      %v546 = vld [vmem:[%s4] sm:$0x1]
      %547 = vadd.xlane.f32.xlu0 %v541
      %v548 = vpop.xlane.xlu0 %547
      %549 = vadd.xlane.f32.xlu0 %v542
      %v550 = vpop.xlane.xlu0 %549
      %v551 = vrcp.pop 128.0
      %v552 = vmul.f32 %v548, %v551
      %v553 = vmul.f32 %v550, %v551
      %v554 = vsub.f32 %v541, %v552
      %v555 = vsub.f32 %v542, %v553
      %v556 = vmul.f32 %v554, %v554
      %v557 = vmul.f32 %v555, %v555
      %558 = vadd.xlane.f32.xlu0 %v556
      %v559 = vpop.xlane.xlu0 %558
      %560 = vadd.xlane.f32.xlu0 %v557
      %v561 = vpop.xlane.xlu0 %560
      %v562 = vmul.f32 %v559, %v551
      %v563 = vmul.f32 %v561, %v551
      %v564 = vadd.f32 %v562, 1e-05
      %v565 = vadd.f32 %v563, 1e-05
      %v566 = vrsqrt.pop %v564
      %v567 = vrsqrt.pop %v565
      %v568 = vmul.f32 %v554, %v566
      %v569 = vmul.f32 %v555, %v567
      %v570 = vlaneseq
      %v571 = vshrl.u32 %v570, 7
      %v572 = vsub.s32 0, %v571
      %v573 = vrot.slane %v545, %v572
      %v574 = vmul.f32 %v568, %v573
      %v575 = vmul.f32 %v569, %v573
      %v576 = vlaneseq
      %v577 = vshrl.u32 %v576, 7
      %v578 = vsub.s32 0, %v577
      %v579 = vrot.slane %v546, %v578
      %v580 = vadd.f32 %v574, %v579
      %v581 = vadd.f32 %v575, %v579
      %582 = vst [vmem:[#allocation2 + $0x8] sm:$0xff] %v580
      %583 = vst [vmem:[#allocation2 + $0x10] sm:$0xff] %v581
      %v584 = vld [vmem:[#allocation2 + $0x5] sm:$0xff]
      %v585 = vld [vmem:[#allocation2 + $0xd] sm:$0xff]
      %v586 = vld [vmem:[%s5] sm:$0x1]
      %v587 = vlaneseq
      %v588 = vshrl.u32 %v587, 7
      %v589 = vsub.s32 0, %v588
      %v590 = vrot.slane %v586, %v589
      %v591 = vmul.f32 %v584, %v590
      %v592 = vmul.f32 %v585, %v590
      %v593 = vld [vmem:[#allocation2 + $0x6] sm:$0xff]
      %v594 = vld [vmem:[#allocation2 + $0xe] sm:$0xff]
      %v595 = vld [vmem:[%s5 + $0x1] sm:$0x1]
      %v596 = vlaneseq
      %v597 = vshrl.u32 %v596, 7
      %v598 = vsub.s32 0, %v597
      %v599 = vrot.slane %v595, %v598
      %v600 = vmul.f32 %v593, %v599
      %v601 = vmul.f32 %v594, %v599
      %v602 = vadd.f32 %v591, %v600
      %v603 = vadd.f32 %v592, %v601
      %v604 = vld [vmem:[#allocation2 + $0x7] sm:$0xff]
      %v605 = vld [vmem:[#allocation2 + $0xf] sm:$0xff]
      %v606 = vld [vmem:[%s5 + $0x2] sm:$0x1]
      %v607 = vlaneseq
      %v608 = vshrl.u32 %v607, 7
      %v609 = vsub.s32 0, %v608
      %v610 = vrot.slane %v606, %v609
      %v611 = vmul.f32 %v604, %v610
      %v612 = vmul.f32 %v605, %v610
      %v613 = vadd.f32 %v602, %v611
      %v614 = vadd.f32 %v603, %v612
      %v615 = vld [vmem:[#allocation2 + $0x8] sm:$0xff]
      %v616 = vld [vmem:[#allocation2 + $0x10] sm:$0xff]
      %v617 = vld [vmem:[%s5 + $0x3] sm:$0x1]
      %v618 = vlaneseq
      %v619 = vshrl.u32 %v618, 7
      %v620 = vsub.s32 0, %v619
      %v621 = vrot.slane %v617, %v620
      %v622 = vmul.f32 %v615, %v621
      %v623 = vmul.f32 %v616, %v621
      %v624 = vadd.f32 %v613, %v622
      %v625 = vadd.f32 %v614, %v623
      %v626 = vld [vmem:[#allocation2 + $0x9] sm:$0xff]
      %v627 = vld [vmem:[#allocation2 + $0x11] sm:$0xff]
      %v628 = vld [vmem:[%s5 + $0x4] sm:$0x1]
      %v629 = vlaneseq
      %v630 = vshrl.u32 %v629, 7
      %v631 = vsub.s32 0, %v630
      %v632 = vrot.slane %v628, %v631
      %v633 = vmul.f32 %v626, %v632
      %v634 = vmul.f32 %v627, %v632
      %v635 = vadd.f32 %v624, %v633
      %v636 = vadd.f32 %v625, %v634
      %v637 = vld [vmem:[#allocation2 + $0xa] sm:$0xff]
      %v638 = vld [vmem:[#allocation2 + $0x12] sm:$0xff]
      %v639 = vld [vmem:[%s5 + $0x5] sm:$0x1]
      %v640 = vlaneseq
      %v641 = vshrl.u32 %v640, 7
      %v642 = vsub.s32 0, %v641
      %v643 = vrot.slane %v639, %v642
      %v644 = vmul.f32 %v637, %v643
      %v645 = vmul.f32 %v638, %v643
      %v646 = vadd.f32 %v635, %v644
      %v647 = vadd.f32 %v636, %v645
      %v648 = vld [vmem:[#allocation2 + $0xb] sm:$0xff]
      %v649 = vld [vmem:[#allocation2 + $0x13] sm:$0xff]
      %v650 = vld [vmem:[%s5 + $0x6] sm:$0x1]
      %v651 = vlaneseq
      %v652 = vshrl.u32 %v651, 7
      %v653 = vsub.s32 0, %v652
      %v654 = vrot.slane %v650, %v653
      %v655 = vmul.f32 %v648, %v654
      %v656 = vmul.f32 %v649, %v654
      %v657 = vadd.f32 %v646, %v655
      %v658 = vadd.f32 %v647, %v656
      %v659 = vpack.c.bf16 %v658, %v657
      %v660 = vld [vmem:[%s6] sm:$0xf]
      %v661 = vld [vmem:[%s6 + $0x4] sm:$0xf]
      %v662 = vld [vmem:[%s6 + $0x8] sm:$0xf]
      %v663 = vld [vmem:[%s6 + $0xc] sm:$0xf]
      %v664 = vld [vmem:[%s6 + $0x10] sm:$0xf]
      %v665 = vld [vmem:[%s6 + $0x14] sm:$0xf]
      %v666 = vld [vmem:[%s6 + $0x18] sm:$0xf]
      %v667 = vld [vmem:[%s6 + $0x1c] sm:$0xf]
      %v668 = vld [vmem:[%s6 + $0x20] sm:$0xf]
      %v669 = vld [vmem:[%s6 + $0x24] sm:$0xf]
      %v670 = vld [vmem:[%s6 + $0x28] sm:$0xf]
      %v671 = vld [vmem:[%s6 + $0x2c] sm:$0xf]
      %v672 = vld [vmem:[%s6 + $0x30] sm:$0xf]
      %v673 = vld [vmem:[%s6 + $0x34] sm:$0xf]
      %v674 = vld [vmem:[%s6 + $0x38] sm:$0xf]
      %v675 = vld [vmem:[%s6 + $0x3c] sm:$0xf]
      %v676 = vld [vmem:[%s7] sm:$0x1]
      %v677 = vlaneseq
      %v678 = vshrl.u32 %v677, 7
      %v679 = vsub.s32 0, %v678
      %v680 = vrot.slane %v676, %v679
      %v697 = vunpack.c.l.b16 %v660
      %v698 = vunpack.c.l.b16 %v661
      %v699 = vunpack.c.l.b16 %v662
      %v700 = vunpack.c.l.b16 %v663
      %v701 = vunpack.c.l.b16 %v664
      %v702 = vunpack.c.l.b16 %v665
      %v703 = vunpack.c.l.b16 %v666
      %v704 = vunpack.c.l.b16 %v667
      %v705 = vunpack.c.l.b16 %v668
      %v706 = vunpack.c.l.b16 %v669
      %v707 = vunpack.c.l.b16 %v670
      %v708 = vunpack.c.l.b16 %v671
      %v709 = vunpack.c.l.b16 %v672
      %v710 = vunpack.c.l.b16 %v673
      %v711 = vunpack.c.l.b16 %v674
      %v712 = vunpack.c.l.b16 %v675
      %v713 = vpack.c.b16 %v698, %v697
      %v714 = vpack.c.b16 %v700, %v699
      %v715 = vpack.c.b16 %v702, %v701
      %v716 = vpack.c.b16 %v704, %v703
      %v717 = vpack.c.b16 %v706, %v705
      %v718 = vpack.c.b16 %v708, %v707
      %v719 = vpack.c.b16 %v710, %v709
      %v720 = vpack.c.b16 %v712, %v711
      %729 = vmatprep.subr.bf16.mxu0 0
      %730 = vmatpush1.bf16.msra.mxu0 %v720
      %731 = vmatprep.subr.bf16.mxu0 0
      %732 = vmatpush1.bf16.msra.mxu0 %v719
      %733 = vmatprep.subr.bf16.mxu0 0
      %734 = vmatpush1.bf16.msra.mxu0 %v718
      %735 = vmatprep.subr.bf16.mxu0 0
      %736 = vmatpush1.bf16.msra.mxu0 %v717
      %737 = vmatprep.subr.bf16.mxu0 0
      %738 = vmatpush1.bf16.msra.mxu0 %v716
      %739 = vmatprep.subr.bf16.mxu0 0
      %740 = vmatpush1.bf16.msra.mxu0 %v715
      %741 = vmatprep.subr.bf16.mxu0 0
      %742 = vmatpush1.bf16.msra.mxu0 %v714
      %743 = vmatprep.subr.bf16.mxu0 0
      %744 = vmatpush1.bf16.msra.mxu0 %v713
      %745 = vmatprep.subr.bf16.mxu0 0
      %746 = vmatpush2.bf16.msra.mxu0 0
      %747 = vmatprep.subr.bf16.mxu0 0
      %748 = vmatpush2.bf16.msra.mxu0 0
      %749 = vmatprep.subr.bf16.mxu0 0
      %750 = vmatpush2.bf16.msra.mxu0 0
      %751 = vmatprep.subr.bf16.mxu0 0
      %752 = vmatpush2.bf16.msra.mxu0 0
      %753 = vmatprep.subr.bf16.mxu0 0
      %754 = vmatpush2.bf16.msra.mxu0 0
      %755 = vmatprep.subr.bf16.mxu0 0
      %756 = vmatpush2.bf16.msra.mxu0 0
      %757 = vmatprep.subr.bf16.mxu0 0
      %758 = vmatpush2.bf16.msra.mxu0 0
      %759 = vmatprep.subr.bf16.mxu0 0
      %760 = vmatpush2.bf16.msra.mxu0 0
      %761 = vmatprep.mubr.bf16.mxu0 0
      %762 = vmatmul.mubr.bf16.gmra.mxu0 %v659
      %v763 = vpop.f32.mrf.mxu0
      %v764 = vadd.f32 %v680, %v763
      %v765 = vpop.f32.mrf.mxu0
      %v766 = vpop.f32.mrf.mxu0
      %v767 = vadd.f32 %v680, %v766
      %v768 = vpop.f32.mrf.mxu0
      %769 = vdwg.mxu0
      %v770 = vmax.f32 %v764, 0.0
      %v771 = vmax.f32 %v767, 0.0
      %v772 = vadd.f32 %v770, %v541
      %v773 = vadd.f32 %v771, %v542
      %v774 = vld [vmem:[%s3 + $0x1] sm:$0x1]
      %v775 = vld [vmem:[%s4 + $0x1] sm:$0x1]
      %776 = vadd.xlane.f32.xlu0 %v772
      %v777 = vpop.xlane.xlu0 %776
      %778 = vadd.xlane.f32.xlu0 %v773
      %v779 = vpop.xlane.xlu0 %778
      %v780 = vmul.f32 %v777, %v551
      %v781 = vmul.f32 %v779, %v551
      %v782 = vsub.f32 %v772, %v780
      %v783 = vsub.f32 %v773, %v781
      %v784 = vmul.f32 %v782, %v782
      %v785 = vmul.f32 %v783, %v783
      %786 = vadd.xlane.f32.xlu0 %v784
      %v787 = vpop.xlane.xlu0 %786
      %788 = vadd.xlane.f32.xlu0 %v785
      %v789 = vpop.xlane.xlu0 %788
      %v790 = vmul.f32 %v787, %v551
      %v791 = vmul.f32 %v789, %v551
      %v792 = vadd.f32 %v790, 1e-05
      %v793 = vadd.f32 %v791, 1e-05
      %v794 = vrsqrt.pop %v792
      %v795 = vrsqrt.pop %v793
      %v796 = vmul.f32 %v782, %v794
      %v797 = vmul.f32 %v783, %v795
      %v798 = vlaneseq
      %v799 = vshrl.u32 %v798, 7
      %v800 = vsub.s32 0, %v799
      %v801 = vrot.slane %v774, %v800
      %v802 = vmul.f32 %v796, %v801
      %v803 = vmul.f32 %v797, %v801
      %v804 = vlaneseq
      %v805 = vshrl.u32 %v804, 7
      %v806 = vsub.s32 0, %v805
      %v807 = vrot.slane %v775, %v806
      %v808 = vadd.f32 %v802, %v807
      %v809 = vadd.f32 %v803, %v807
      %810 = vst [vmem:[#allocation2 + $0x8] sm:$0xff] %v808
      %811 = vst [vmem:[#allocation2 + $0x10] sm:$0xff] %v809
      %v812 = vld [vmem:[#allocation2 + $0x5] sm:$0xff]
      %v813 = vld [vmem:[#allocation2 + $0xd] sm:$0xff]
      %s814 = scalar_lea.vmem %s5, 8
      %v815 = vld [vmem:[%s814] sm:$0x1]
      %v816 = vlaneseq
      %v817 = vshrl.u32 %v816, 7
      %v818 = vsub.s32 0, %v817
      %v819 = vrot.slane %v815, %v818
      %v820 = vmul.f32 %v812, %v819
      %v821 = vmul.f32 %v813, %v819
      %v822 = vld [vmem:[#allocation2 + $0x6] sm:$0xff]
      %v823 = vld [vmem:[#allocation2 + $0xe] sm:$0xff]
      %v824 = vld [vmem:[%s814 + $0x1] sm:$0x1]
      %v825 = vlaneseq
      %v826 = vshrl.u32 %v825, 7
      %v827 = vsub.s32 0, %v826
      %v828 = vrot.slane %v824, %v827
      %v829 = vmul.f32 %v822, %v828
      %v830 = vmul.f32 %v823, %v828
      %v831 = vadd.f32 %v820, %v829
      %v832 = vadd.f32 %v821, %v830
      %v833 = vld [vmem:[#allocation2 + $0x7] sm:$0xff]
      %v834 = vld [vmem:[#allocation2 + $0xf] sm:$0xff]
      %v835 = vld [vmem:[%s814 + $0x2] sm:$0x1]
      %v836 = vlaneseq
      %v837 = vshrl.u32 %v836, 7
      %v838 = vsub.s32 0, %v837
      %v839 = vrot.slane %v835, %v838
      %v840 = vmul.f32 %v833, %v839
      %v841 = vmul.f32 %v834, %v839
      %v842 = vadd.f32 %v831, %v840
      %v843 = vadd.f32 %v832, %v841
      %v844 = vld [vmem:[#allocation2 + $0x8] sm:$0xff]
      %v845 = vld [vmem:[#allocation2 + $0x10] sm:$0xff]
      %v846 = vld [vmem:[%s814 + $0x3] sm:$0x1]
      %v847 = vlaneseq
      %v848 = vshrl.u32 %v847, 7
      %v849 = vsub.s32 0, %v848
      %v850 = vrot.slane %v846, %v849
      %v851 = vmul.f32 %v844, %v850
      %v852 = vmul.f32 %v845, %v850
      %v853 = vadd.f32 %v842, %v851
      %v854 = vadd.f32 %v843, %v852
      %v855 = vld [vmem:[#allocation2 + $0x9] sm:$0xff]
      %v856 = vld [vmem:[#allocation2 + $0x11] sm:$0xff]
      %v857 = vld [vmem:[%s814 + $0x4] sm:$0x1]
      %v858 = vlaneseq
      %v859 = vshrl.u32 %v858, 7
      %v860 = vsub.s32 0, %v859
      %v861 = vrot.slane %v857, %v860
      %v862 = vmul.f32 %v855, %v861
      %v863 = vmul.f32 %v856, %v861
      %v864 = vadd.f32 %v853, %v862
      %v865 = vadd.f32 %v854, %v863
      %v866 = vld [vmem:[#allocation2 + $0xa] sm:$0xff]
      %v867 = vld [vmem:[#allocation2 + $0x12] sm:$0xff]
      %v868 = vld [vmem:[%s814 + $0x5] sm:$0x1]
      %v869 = vlaneseq
      %v870 = vshrl.u32 %v869, 7
      %v871 = vsub.s32 0, %v870
      %v872 = vrot.slane %v868, %v871
      %v873 = vmul.f32 %v866, %v872
      %v874 = vmul.f32 %v867, %v872
      %v875 = vadd.f32 %v864, %v873
      %v876 = vadd.f32 %v865, %v874
      %v877 = vld [vmem:[#allocation2 + $0xb] sm:$0xff]
      %v878 = vld [vmem:[#allocation2 + $0x13] sm:$0xff]
      %v879 = vld [vmem:[%s814 + $0x6] sm:$0x1]
      %v880 = vlaneseq
      %v881 = vshrl.u32 %v880, 7
      %v882 = vsub.s32 0, %v881
      %v883 = vrot.slane %v879, %v882
      %v884 = vmul.f32 %v877, %v883
      %v885 = vmul.f32 %v878, %v883
      %v886 = vadd.f32 %v875, %v884
      %v887 = vadd.f32 %v876, %v885
      %v888 = vpack.c.bf16 %v887, %v886
      %s889 = scalar_lea.vmem %s6, 64
      %v890 = vld [vmem:[%s889] sm:$0xf]
      %v891 = vld [vmem:[%s889 + $0x4] sm:$0xf]
      %v892 = vld [vmem:[%s889 + $0x8] sm:$0xf]
      %v893 = vld [vmem:[%s889 + $0xc] sm:$0xf]
      %v894 = vld [vmem:[%s889 + $0x10] sm:$0xf]
      %v895 = vld [vmem:[%s889 + $0x14] sm:$0xf]
      %v896 = vld [vmem:[%s889 + $0x18] sm:$0xf]
      %v897 = vld [vmem:[%s889 + $0x1c] sm:$0xf]
      %v898 = vld [vmem:[%s889 + $0x20] sm:$0xf]
      %v899 = vld [vmem:[%s889 + $0x24] sm:$0xf]
      %v900 = vld [vmem:[%s889 + $0x28] sm:$0xf]
      %v901 = vld [vmem:[%s889 + $0x2c] sm:$0xf]
      %v902 = vld [vmem:[%s889 + $0x30] sm:$0xf]
      %v903 = vld [vmem:[%s889 + $0x34] sm:$0xf]
      %v904 = vld [vmem:[%s889 + $0x38] sm:$0xf]
      %v905 = vld [vmem:[%s889 + $0x3c] sm:$0xf]
      %v906 = vld [vmem:[%s7 + $0x1] sm:$0x1]
      %v907 = vlaneseq
      %v908 = vshrl.u32 %v907, 7
      %v909 = vsub.s32 0, %v908
      %v910 = vrot.slane %v906, %v909
      %v927 = vunpack.c.l.b16 %v890
      %v928 = vunpack.c.l.b16 %v891
      %v929 = vunpack.c.l.b16 %v892
      %v930 = vunpack.c.l.b16 %v893
      %v931 = vunpack.c.l.b16 %v894
      %v932 = vunpack.c.l.b16 %v895
      %v933 = vunpack.c.l.b16 %v896
      %v934 = vunpack.c.l.b16 %v897
      %v935 = vunpack.c.l.b16 %v898
      %v936 = vunpack.c.l.b16 %v899
      %v937 = vunpack.c.l.b16 %v900
      %v938 = vunpack.c.l.b16 %v901
      %v939 = vunpack.c.l.b16 %v902
      %v940 = vunpack.c.l.b16 %v903
      %v941 = vunpack.c.l.b16 %v904
      %v942 = vunpack.c.l.b16 %v905
      %v943 = vpack.c.b16 %v928, %v927
      %v944 = vpack.c.b16 %v930, %v929
      %v945 = vpack.c.b16 %v932, %v931
      %v946 = vpack.c.b16 %v934, %v933
      %v947 = vpack.c.b16 %v936, %v935
      %v948 = vpack.c.b16 %v938, %v937
      %v949 = vpack.c.b16 %v940, %v939
      %v950 = vpack.c.b16 %v942, %v941
      %959 = vmatprep.subr.bf16.mxu0 0
      %960 = vmatpush1.bf16.msra.mxu0 %v950
      %961 = vmatprep.subr.bf16.mxu0 0
      %962 = vmatpush1.bf16.msra.mxu0 %v949
      %963 = vmatprep.subr.bf16.mxu0 0
      %964 = vmatpush1.bf16.msra.mxu0 %v948
      %965 = vmatprep.subr.bf16.mxu0 0
      %966 = vmatpush1.bf16.msra.mxu0 %v947
      %967 = vmatprep.subr.bf16.mxu0 0
      %968 = vmatpush1.bf16.msra.mxu0 %v946
      %969 = vmatprep.subr.bf16.mxu0 0
      %970 = vmatpush1.bf16.msra.mxu0 %v945
      %971 = vmatprep.subr.bf16.mxu0 0
      %972 = vmatpush1.bf16.msra.mxu0 %v944
      %973 = vmatprep.subr.bf16.mxu0 0
      %974 = vmatpush1.bf16.msra.mxu0 %v943
      %975 = vmatprep.subr.bf16.mxu0 0
      %976 = vmatpush2.bf16.msra.mxu0 0
      %977 = vmatprep.subr.bf16.mxu0 0
      %978 = vmatpush2.bf16.msra.mxu0 0
      %979 = vmatprep.subr.bf16.mxu0 0
      %980 = vmatpush2.bf16.msra.mxu0 0
      %981 = vmatprep.subr.bf16.mxu0 0
      %982 = vmatpush2.bf16.msra.mxu0 0
      %983 = vmatprep.subr.bf16.mxu0 0
      %984 = vmatpush2.bf16.msra.mxu0 0
      %985 = vmatprep.subr.bf16.mxu0 0
      %986 = vmatpush2.bf16.msra.mxu0 0
      %987 = vmatprep.subr.bf16.mxu0 0
      %988 = vmatpush2.bf16.msra.mxu0 0
      %989 = vmatprep.subr.bf16.mxu0 0
      %990 = vmatpush2.bf16.msra.mxu0 0
      %991 = vmatprep.mubr.bf16.mxu0 0
      %992 = vmatmul.mubr.bf16.gmra.mxu0 %v888
      %v993 = vpop.f32.mrf.mxu0
      %v994 = vadd.f32 %v910, %v993
      %v995 = vpop.f32.mrf.mxu0
      %v996 = vpop.f32.mrf.mxu0
      %v997 = vadd.f32 %v910, %v996
      %v998 = vpop.f32.mrf.mxu0
      %999 = vdwg.mxu0
      %v1000 = vmax.f32 %v994, 0.0
      %v1001 = vmax.f32 %v997, 0.0
      %v1002 = vadd.f32 %v1000, %v772
      %v1003 = vadd.f32 %v1001, %v773
      %v1004 = vld [vmem:[%s8] sm:$0x1]
      %v1005 = vld [vmem:[%s9] sm:$0x1]
      %1006 = vadd.xlane.f32.xlu0 %v1002
      %v1007 = vpop.xlane.xlu0 %1006
      %1008 = vadd.xlane.f32.xlu0 %v1003
      %v1009 = vpop.xlane.xlu0 %1008
      %v1010 = vmul.f32 %v1007, %v551
      %v1011 = vmul.f32 %v1009, %v551
      %v1012 = vsub.f32 %v1002, %v1010
      %v1013 = vsub.f32 %v1003, %v1011
      %v1014 = vmul.f32 %v1012, %v1012
      %v1015 = vmul.f32 %v1013, %v1013
      %1016 = vadd.xlane.f32.xlu0 %v1014
      %v1017 = vpop.xlane.xlu0 %1016
      %1018 = vadd.xlane.f32.xlu0 %v1015
      %v1019 = vpop.xlane.xlu0 %1018
      %v1020 = vmul.f32 %v1017, %v551
      %v1021 = vmul.f32 %v1019, %v551
      %v1022 = vadd.f32 %v1020, 1e-05
      %v1023 = vadd.f32 %v1021, 1e-05
      %v1024 = vrsqrt.pop %v1022
      %v1025 = vrsqrt.pop %v1023
      %v1026 = vmul.f32 %v1012, %v1024
      %v1027 = vmul.f32 %v1013, %v1025
      %v1028 = vlaneseq
      %v1029 = vshrl.u32 %v1028, 7
      %v1030 = vsub.s32 0, %v1029
      %v1031 = vrot.slane %v1004, %v1030
      %v1032 = vmul.f32 %v1026, %v1031
      %v1033 = vmul.f32 %v1027, %v1031
      %v1034 = vlaneseq
      %v1035 = vshrl.u32 %v1034, 7
      %v1036 = vsub.s32 0, %v1035
      %v1037 = vrot.slane %v1005, %v1036
      %v1038 = vadd.f32 %v1032, %v1037
      %v1039 = vadd.f32 %v1033, %v1037
      %v1040 = vpack.c.bf16 %v1039, %v1038
      %v1041 = vld [vmem:[%s10] sm:$0xff]
      %v1042 = vld [vmem:[%s10 + $0x8] sm:$0xf]
      %v1043 = vld [vmem:[%s10 + $0xc] sm:$0xff]
      %v1044 = vld [vmem:[%s10 + $0x14] sm:$0xf]
      %v1045 = vld [vmem:[%s10 + $0x18] sm:$0xff]
      %v1046 = vld [vmem:[%s10 + $0x20] sm:$0xf]
      %v1047 = vld [vmem:[%s10 + $0x24] sm:$0xff]
      %v1048 = vld [vmem:[%s10 + $0x2c] sm:$0xf]
      %v1049 = vld [vmem:[%s10 + $0x30] sm:$0xff]
      %v1050 = vld [vmem:[%s10 + $0x38] sm:$0xf]
      %v1051 = vld [vmem:[%s10 + $0x3c] sm:$0xff]
      %v1052 = vld [vmem:[%s10 + $0x44] sm:$0xf]
      %v1053 = vld [vmem:[%s10 + $0x48] sm:$0xff]
      %v1054 = vld [vmem:[%s10 + $0x50] sm:$0xf]
      %v1055 = vld [vmem:[%s10 + $0x54] sm:$0xff]
      %v1056 = vld [vmem:[%s10 + $0x5c] sm:$0xf]
      %v1057 = vld [vmem:[%s10 + $0x60] sm:$0xff]
      %v1058 = vld [vmem:[%s10 + $0x68] sm:$0xf]
      %v1059 = vld [vmem:[%s10 + $0x6c] sm:$0xff]
      %v1060 = vld [vmem:[%s10 + $0x74] sm:$0xf]
      %v1061 = vld [vmem:[%s10 + $0x78] sm:$0xff]
      %v1062 = vld [vmem:[%s10 + $0x80] sm:$0xf]
      %v1063 = vld [vmem:[%s10 + $0x84] sm:$0xff]
      %v1064 = vld [vmem:[%s10 + $0x8c] sm:$0xf]
      %v1065 = vld [vmem:[%s10 + $0x90] sm:$0xff]
      %v1066 = vld [vmem:[%s10 + $0x98] sm:$0xf]
      %v1067 = vld [vmem:[%s10 + $0x9c] sm:$0xff]
      %v1068 = vld [vmem:[%s10 + $0xa4] sm:$0xf]
      %v1069 = vld [vmem:[%s10 + $0xa8] sm:$0xff]
      %v1070 = vld [vmem:[%s10 + $0xb0] sm:$0xf]
      %v1071 = vld [vmem:[%s10 + $0xb4] sm:$0xff]
      %v1072 = vld [vmem:[%s10 + $0xbc] sm:$0xf]
      %v1073 = vld [vmem:[%s11] sm:$0x7]
      %v1075 = vlaneseq
      %v1076 = vshrl.u32 %v1075, 7
      %v1077 = vsub.s32 0, %v1076
      %v1078 = vrot.slane %v1073, %v1077
      %v1079 = vlaneseq
      %v1080 = vshrl.u32 %v1079, 7
      %v1081 = vsub.s32 1, %v1080
      %v1082 = vrot.slane %v1073, %v1081
      %v1083 = vlaneseq
      %v1084 = vshrl.u32 %v1083, 7
      %v1085 = vsub.s32 2, %v1084
      %v1086 = vrot.slane %v1073, %v1085
      %v1122 = vunpack.c.l.b16 %v1041
      %v1123 = vunpack.c.h.b16 %v1041
      %v1124 = vunpack.c.l.b16 %v1042
      %v1125 = vunpack.c.l.b16 %v1043
      %v1126 = vunpack.c.h.b16 %v1043
      %v1127 = vunpack.c.l.b16 %v1044
      %v1128 = vunpack.c.l.b16 %v1045
      %v1129 = vunpack.c.h.b16 %v1045
      %v1130 = vunpack.c.l.b16 %v1046
      %v1131 = vunpack.c.l.b16 %v1047
      %v1132 = vunpack.c.h.b16 %v1047
      %v1133 = vunpack.c.l.b16 %v1048
      %v1134 = vunpack.c.l.b16 %v1049
      %v1135 = vunpack.c.h.b16 %v1049
      %v1136 = vunpack.c.l.b16 %v1050
      %v1137 = vunpack.c.l.b16 %v1051
      %v1138 = vunpack.c.h.b16 %v1051
      %v1139 = vunpack.c.l.b16 %v1052
      %v1140 = vunpack.c.l.b16 %v1053
      %v1141 = vunpack.c.h.b16 %v1053
      %v1142 = vunpack.c.l.b16 %v1054
      %v1143 = vunpack.c.l.b16 %v1055
      %v1144 = vunpack.c.h.b16 %v1055
      %v1145 = vunpack.c.l.b16 %v1056
      %v1146 = vunpack.c.l.b16 %v1057
      %v1147 = vunpack.c.h.b16 %v1057
      %v1148 = vunpack.c.l.b16 %v1058
      %v1149 = vunpack.c.l.b16 %v1059
      %v1150 = vunpack.c.h.b16 %v1059
      %v1151 = vunpack.c.l.b16 %v1060
      %v1152 = vunpack.c.l.b16 %v1061
      %v1153 = vunpack.c.h.b16 %v1061
      %v1154 = vunpack.c.l.b16 %v1062
      %v1155 = vunpack.c.l.b16 %v1063
      %v1156 = vunpack.c.h.b16 %v1063
      %v1157 = vunpack.c.l.b16 %v1064
      %v1158 = vunpack.c.l.b16 %v1065
      %v1159 = vunpack.c.h.b16 %v1065
      %v1160 = vunpack.c.l.b16 %v1066
      %v1161 = vunpack.c.l.b16 %v1067
      %v1162 = vunpack.c.h.b16 %v1067
      %v1163 = vunpack.c.l.b16 %v1068
      %v1164 = vunpack.c.l.b16 %v1069
      %v1165 = vunpack.c.h.b16 %v1069
      %v1166 = vunpack.c.l.b16 %v1070
      %v1167 = vunpack.c.l.b16 %v1071
      %v1168 = vunpack.c.h.b16 %v1071
      %v1169 = vunpack.c.l.b16 %v1072
      %v1170 = vpack.c.b16 %v1125, %v1122
      %v1171 = vpack.c.b16 %v1126, %v1123
      %v1172 = vpack.c.b16 %v1127, %v1124
      %v1173 = vpack.c.b16 %v1131, %v1128
      %v1174 = vpack.c.b16 %v1132, %v1129
      %v1175 = vpack.c.b16 %v1133, %v1130
      %v1176 = vpack.c.b16 %v1137, %v1134
      %v1177 = vpack.c.b16 %v1138, %v1135
      %v1178 = vpack.c.b16 %v1139, %v1136
      %v1179 = vpack.c.b16 %v1143, %v1140
      %v1180 = vpack.c.b16 %v1144, %v1141
      %v1181 = vpack.c.b16 %v1145, %v1142
      %v1182 = vpack.c.b16 %v1149, %v1146
      %v1183 = vpack.c.b16 %v1150, %v1147
      %v1184 = vpack.c.b16 %v1151, %v1148
      %v1185 = vpack.c.b16 %v1155, %v1152
      %v1186 = vpack.c.b16 %v1156, %v1153
      %v1187 = vpack.c.b16 %v1157, %v1154
      %v1188 = vpack.c.b16 %v1161, %v1158
      %v1189 = vpack.c.b16 %v1162, %v1159
      %v1190 = vpack.c.b16 %v1163, %v1160
      %v1191 = vpack.c.b16 %v1167, %v1164
      %v1192 = vpack.c.b16 %v1168, %v1165
      %v1193 = vpack.c.b16 %v1169, %v1166
      %1218 = vmatprep.subr.bf16.mxu0 %v1192
      %1219 = vmatpush1.bf16.msra.mxu0 %v1191
      %1220 = vmatprep.subr.bf16.mxu0 %v1189
      %1221 = vmatpush1.bf16.msra.mxu0 %v1188
      %1222 = vmatprep.subr.bf16.mxu0 %v1186
      %1223 = vmatpush1.bf16.msra.mxu0 %v1185
      %1224 = vmatprep.subr.bf16.mxu0 %v1183
      %1225 = vmatpush1.bf16.msra.mxu0 %v1182
      %1226 = vmatprep.subr.bf16.mxu0 %v1180
      %1227 = vmatpush1.bf16.msra.mxu0 %v1179
      %1228 = vmatprep.subr.bf16.mxu0 %v1177
      %1229 = vmatpush1.bf16.msra.mxu0 %v1176
      %1230 = vmatprep.subr.bf16.mxu0 %v1174
      %1231 = vmatpush1.bf16.msra.mxu0 %v1173
      %1232 = vmatprep.subr.bf16.mxu0 %v1171
      %1233 = vmatpush1.bf16.msra.mxu0 %v1170
      %1234 = vmatprep.subr.bf16.mxu0 0
      %1235 = vmatpush2.bf16.msra.mxu0 0
      %1236 = vmatprep.subr.bf16.mxu0 0
      %1237 = vmatpush2.bf16.msra.mxu0 0
      %1238 = vmatprep.subr.bf16.mxu0 0
      %1239 = vmatpush2.bf16.msra.mxu0 0
      %1240 = vmatprep.subr.bf16.mxu0 0
      %1241 = vmatpush2.bf16.msra.mxu0 0
      %1242 = vmatprep.subr.bf16.mxu0 0
      %1243 = vmatpush2.bf16.msra.mxu0 0
      %1244 = vmatprep.subr.bf16.mxu0 0
      %1245 = vmatpush2.bf16.msra.mxu0 0
      %1246 = vmatprep.subr.bf16.mxu0 0
      %1247 = vmatpush2.bf16.msra.mxu0 0
      %1248 = vmatprep.subr.bf16.mxu0 0
      %1249 = vmatpush2.bf16.msra.mxu0 0
      %1250 = vmatprep.mubr.bf16.mxu0 0
      %1251 = vmatmul.mubr.bf16.gmra.mxu0 %v1040
      %v1252 = vpop.f32.mrf.mxu0
      %v1253 = vadd.f32 %v1078, %v1252
      %v1254 = vpop.f32.mrf.mxu0
      %v1255 = vadd.f32 %v1082, %v1254
      %v1256 = vpop.f32.mrf.mxu0
      %v1257 = vadd.f32 %v1078, %v1256
      %v1258 = vpop.f32.mrf.mxu0
      %v1259 = vadd.f32 %v1082, %v1258
      %1260 = vdwg.mxu0
      %1261 = vmatprep.subr.bf16.mxu0 0
      %1262 = vmatpush1.bf16.msra.mxu0 %v1193
      %1263 = vmatprep.subr.bf16.mxu0 0
      %1264 = vmatpush1.bf16.msra.mxu0 %v1190
      %1265 = vmatprep.subr.bf16.mxu0 0
      %1266 = vmatpush1.bf16.msra.mxu0 %v1187
      %1267 = vmatprep.subr.bf16.mxu0 0
      %1268 = vmatpush1.bf16.msra.mxu0 %v1184
      %1269 = vmatprep.subr.bf16.mxu0 0
      %1270 = vmatpush1.bf16.msra.mxu0 %v1181
      %1271 = vmatprep.subr.bf16.mxu0 0
      %1272 = vmatpush1.bf16.msra.mxu0 %v1178
      %1273 = vmatprep.subr.bf16.mxu0 0
      %1274 = vmatpush1.bf16.msra.mxu0 %v1175
      %1275 = vmatprep.subr.bf16.mxu0 0
      %1276 = vmatpush1.bf16.msra.mxu0 %v1172
      %1277 = vmatprep.subr.bf16.mxu0 0
      %1278 = vmatpush2.bf16.msra.mxu0 0
      %1279 = vmatprep.subr.bf16.mxu0 0
      %1280 = vmatpush2.bf16.msra.mxu0 0
      %1281 = vmatprep.subr.bf16.mxu0 0
      %1282 = vmatpush2.bf16.msra.mxu0 0
      %1283 = vmatprep.subr.bf16.mxu0 0
      %1284 = vmatpush2.bf16.msra.mxu0 0
      %1285 = vmatprep.subr.bf16.mxu0 0
      %1286 = vmatpush2.bf16.msra.mxu0 0
      %1287 = vmatprep.subr.bf16.mxu0 0
      %1288 = vmatpush2.bf16.msra.mxu0 0
      %1289 = vmatprep.subr.bf16.mxu0 0
      %1290 = vmatpush2.bf16.msra.mxu0 0
      %1291 = vmatprep.subr.bf16.mxu0 0
      %1292 = vmatpush2.bf16.msra.mxu0 0
      %1293 = vmatprep.mubr.bf16.mxu0 0
      %1294 = vmatmul.mubr.bf16.gmra.mxu0 %v1040
      %v1295 = vpop.f32.mrf.mxu0
      %v1296 = vadd.f32 %v1086, %v1295
      %v1297 = vpop.f32.mrf.mxu0
      %v1298 = vpop.f32.mrf.mxu0
      %v1299 = vadd.f32 %v1086, %v1298
      %v1300 = vpop.f32.mrf.mxu0
      %1301 = vdwg.mxu0
      %v1302 = vld [vmem:[%s530] sm:$0x1]
      %v1303 = vpack.c.bf16 %v1257, %v1253
      %v1304 = vpack.c.bf16 %v1259, %v1255
      %v1305 = vpack.c.bf16 %v1299, %v1296
      %v1307 = vlaneseq
      %v1308 = vshrl.u32 %v1307, 7
      %v1309 = vsub.s32 0, %v1308
      %v1310 = vrot.slane %v1302, %v1309
      %vm1312 = vcmask 261120
      %v1314 = vsel %vm1312, %v1303, 0
      %v1317 = vsel %vm1312, %v1304, 0
      %1319 = vmatprep.subr.bf16.mxu0 0
      %1320 = vmatpush1.bf16.xpose.msra.mxu0 0
      %1321 = vmatprep.subr.bf16.mxu0 0
      %1322 = vmatpush1.bf16.xpose.msra.mxu0 0
      %1323 = vmatprep.subr.bf16.mxu0 0
      %1324 = vmatpush1.bf16.xpose.msra.mxu0 0
      %1325 = vmatprep.subr.bf16.mxu0 0
      %1326 = vmatpush1.bf16.xpose.msra.mxu0 0
      %1327 = vmatprep.subr.bf16.mxu0 0
      %1328 = vmatpush1.bf16.xpose.msra.mxu0 0
      %1329 = vmatprep.subr.bf16.mxu0 0
      %1330 = vmatpush1.bf16.xpose.msra.mxu0 0
      %1331 = vmatprep.subr.bf16.mxu0 0
      %1332 = vmatpush1.bf16.xpose.msra.mxu0 0
      %1333 = vmatprep.subr.bf16.mxu0 0
      %1334 = vmatpush1.bf16.xpose.msra.mxu0 %v1317
      %1335 = vmatprep.subr.bf16.mxu0 0
      %1336 = vmatpush2.bf16.xpose.msra.mxu0 0
      %1337 = vmatprep.subr.bf16.mxu0 0
      %1338 = vmatpush2.bf16.xpose.msra.mxu0 0
      %1339 = vmatprep.subr.bf16.mxu0 0
      %1340 = vmatpush2.bf16.xpose.msra.mxu0 0
      %1341 = vmatprep.subr.bf16.mxu0 0
      %1342 = vmatpush2.bf16.xpose.msra.mxu0 0
      %1343 = vmatprep.subr.bf16.mxu0 0
      %1344 = vmatpush2.bf16.xpose.msra.mxu0 0
      %1345 = vmatprep.subr.bf16.mxu0 0
      %1346 = vmatpush2.bf16.xpose.msra.mxu0 0
      %1347 = vmatprep.subr.bf16.mxu0 0
      %1348 = vmatpush2.bf16.xpose.msra.mxu0 0
      %1349 = vmatprep.subr.bf16.mxu0 0
      %1350 = vmatpush2.bf16.xpose.msra.mxu0 0
      %1351 = vmatprep.mubr.bf16.mxu0 0
      %1352 = vmatmul.mubr.bf16.gmra.mxu0 %v1314
      %v1353 = vpop.f32.mrf.mxu0
      %v1354 = vadd.f32 %v1310, %v1353
      %v1355 = vpop.f32.mrf.mxu0
      %v1356 = vpop.f32.mrf.mxu0
      %v1357 = vadd.f32 %v1310, %v1356
      %v1358 = vpop.f32.mrf.mxu0
      %1359 = vdwg.mxu0
      %vm1360 = vcmask 130048
      %v1361 = vsel %vm1360, %v1354, -inf
      %1362 = vmax.xlane.f32.xlu0 %v1361
      %v1363 = vpop.xlane.xlu0 %1362
      %v1364 = vsel %vm1360, %v1357, -inf
      %1365 = vmax.xlane.f32.xlu0 %v1364
      %v1366 = vpop.xlane.xlu0 %1365
      %v1367 = vsub.f32 %v1354, %v1363
      %v1368 = vsub.f32 %v1357, %v1366
      %v1369 = vmul.f32 %v1367, 1.442695
      %v1370 = vpow.pop %v1369
      %v1371 = vmul.f32 %v1368, 1.442695
      %v1372 = vpow.pop %v1371
      %v1373 = vsel %vm1360, %v1370, 0.0
      %1374 = vadd.xlane.f32.xlu0 %v1373
      %v1375 = vpop.xlane.xlu0 %1374
      %v1376 = vsel %vm1360, %v1372, 0.0
      %1377 = vadd.xlane.f32.xlu0 %v1376
      %v1378 = vpop.xlane.xlu0 %1377
      %v1379 = vrcp.pop %v1375
      %v1380 = vrcp.pop %v1378
      %v1381 = vmul.f32 %v1370, %v1379
      %v1382 = vmul.f32 %v1372, %v1380
      %v1383 = vpack.c.bf16 %v1382, %v1381
      %v1385 = vsel %vm1360, %v1383, 0
      %1387 = vmatprep.subr.bf16.mxu0 0
      %1388 = vmatpush1.bf16.msra.mxu0 0
      %1389 = vmatprep.subr.bf16.mxu0 0
      %1390 = vmatpush1.bf16.msra.mxu0 0
      %1391 = vmatprep.subr.bf16.mxu0 0
      %1392 = vmatpush1.bf16.msra.mxu0 0
      %1393 = vmatprep.subr.bf16.mxu0 0
      %1394 = vmatpush1.bf16.msra.mxu0 0
      %1395 = vmatprep.subr.bf16.mxu0 0
      %1396 = vmatpush1.bf16.msra.mxu0 0
      %1397 = vmatprep.subr.bf16.mxu0 0
      %1398 = vmatpush1.bf16.msra.mxu0 0
      %1399 = vmatprep.subr.bf16.mxu0 0
      %1400 = vmatpush1.bf16.msra.mxu0 0
      %1401 = vmatprep.subr.bf16.mxu0 0
      %1402 = vmatpush1.bf16.msra.mxu0 %v1305
      %1403 = vmatprep.subr.bf16.mxu0 0
      %1404 = vmatpush2.bf16.msra.mxu0 0
      %1405 = vmatprep.subr.bf16.mxu0 0
      %1406 = vmatpush2.bf16.msra.mxu0 0
      %1407 = vmatprep.subr.bf16.mxu0 0
      %1408 = vmatpush2.bf16.msra.mxu0 0
      %1409 = vmatprep.subr.bf16.mxu0 0
      %1410 = vmatpush2.bf16.msra.mxu0 0
      %1411 = vmatprep.subr.bf16.mxu0 0
      %1412 = vmatpush2.bf16.msra.mxu0 0
      %1413 = vmatprep.subr.bf16.mxu0 0
      %1414 = vmatpush2.bf16.msra.mxu0 0
      %1415 = vmatprep.subr.bf16.mxu0 0
      %1416 = vmatpush2.bf16.msra.mxu0 0
      %1417 = vmatprep.subr.bf16.mxu0 0
      %1418 = vmatpush2.bf16.msra.mxu0 0
      %1419 = vmatprep.mubr.bf16.mxu0 0
      %1420 = vmatmul.mubr.bf16.gmra.mxu0 %v1385
      %v1421 = vpop.f32.mrf.mxu0
      %v1422 = vadd.f32 0.0, %v1421
      %v1423 = vpop.f32.mrf.mxu0
      %v1424 = vpop.f32.mrf.mxu0
      %v1425 = vadd.f32 0.0, %v1424
      %v1426 = vpop.f32.mrf.mxu0
      %1427 = vdwg.mxu0
      %v1428 = vpack.c.bf16 %v1425, %v1422
      %v1429 = vld [vmem:[%s12] sm:$0xf]
      %v1430 = vld [vmem:[%s12 + $0x4] sm:$0xf]
      %v1431 = vld [vmem:[%s12 + $0x8] sm:$0xf]
      %v1432 = vld [vmem:[%s12 + $0xc] sm:$0xf]
      %1434 = vrot.lane.b32.xlu0 %v1303, 96
      %v1435 = vpop.permute.xlu0 %1434
      %1437 = vrot.lane.b32.xlu0 %v1304, 96
      %v1438 = vpop.permute.xlu0 %1437
      %v1440 = vsel %vm1312, %v1435, 0
      %v1443 = vsel %vm1312, %v1438, 0
      %1445 = vmatprep.subr.bf16.mxu0 0
      %1446 = vmatpush1.bf16.xpose.msra.mxu0 0
      %1447 = vmatprep.subr.bf16.mxu0 0
      %1448 = vmatpush1.bf16.xpose.msra.mxu0 0
      %1449 = vmatprep.subr.bf16.mxu0 0
      %1450 = vmatpush1.bf16.xpose.msra.mxu0 0
      %1451 = vmatprep.subr.bf16.mxu0 0
      %1452 = vmatpush1.bf16.xpose.msra.mxu0 0
      %1453 = vmatprep.subr.bf16.mxu0 0
      %1454 = vmatpush1.bf16.xpose.msra.mxu0 0
      %1455 = vmatprep.subr.bf16.mxu0 0
      %1456 = vmatpush1.bf16.xpose.msra.mxu0 0
      %1457 = vmatprep.subr.bf16.mxu0 0
      %1458 = vmatpush1.bf16.xpose.msra.mxu0 0
      %1459 = vmatprep.subr.bf16.mxu0 0
      %1460 = vmatpush1.bf16.xpose.msra.mxu0 %v1443
      %1461 = vmatprep.subr.bf16.mxu0 0
      %1462 = vmatpush2.bf16.xpose.msra.mxu0 0
      %1463 = vmatprep.subr.bf16.mxu0 0
      %1464 = vmatpush2.bf16.xpose.msra.mxu0 0
      %1465 = vmatprep.subr.bf16.mxu0 0
      %1466 = vmatpush2.bf16.xpose.msra.mxu0 0
      %1467 = vmatprep.subr.bf16.mxu0 0
      %1468 = vmatpush2.bf16.xpose.msra.mxu0 0
      %1469 = vmatprep.subr.bf16.mxu0 0
      %1470 = vmatpush2.bf16.xpose.msra.mxu0 0
      %1471 = vmatprep.subr.bf16.mxu0 0
      %1472 = vmatpush2.bf16.xpose.msra.mxu0 0
      %1473 = vmatprep.subr.bf16.mxu0 0
      %1474 = vmatpush2.bf16.xpose.msra.mxu0 0
      %1475 = vmatprep.subr.bf16.mxu0 0
      %1476 = vmatpush2.bf16.xpose.msra.mxu0 0
      %1477 = vmatprep.mubr.bf16.mxu0 0
      %1478 = vmatmul.mubr.bf16.gmra.mxu0 %v1440
      %v1479 = vpop.f32.mrf.mxu0
      %v1480 = vadd.f32 %v1310, %v1479
      %v1481 = vpop.f32.mrf.mxu0
      %v1482 = vpop.f32.mrf.mxu0
      %v1483 = vadd.f32 %v1310, %v1482
      %v1484 = vpop.f32.mrf.mxu0
      %1485 = vdwg.mxu0
      %v1486 = vsel %vm1360, %v1480, -inf
      %1487 = vmax.xlane.f32.xlu0 %v1486
      %v1488 = vpop.xlane.xlu0 %1487
      %v1489 = vsel %vm1360, %v1483, -inf
      %1490 = vmax.xlane.f32.xlu0 %v1489
      %v1491 = vpop.xlane.xlu0 %1490
      %v1492 = vsub.f32 %v1480, %v1488
      %v1493 = vsub.f32 %v1483, %v1491
      %v1494 = vmul.f32 %v1492, 1.442695
      %v1495 = vpow.pop %v1494
      %v1496 = vmul.f32 %v1493, 1.442695
      %v1497 = vpow.pop %v1496
      %v1498 = vsel %vm1360, %v1495, 0.0
      %1499 = vadd.xlane.f32.xlu0 %v1498
      %v1500 = vpop.xlane.xlu0 %1499
      %v1501 = vsel %vm1360, %v1497, 0.0
      %1502 = vadd.xlane.f32.xlu0 %v1501
      %v1503 = vpop.xlane.xlu0 %1502
      %v1504 = vrcp.pop %v1500
      %v1505 = vrcp.pop %v1503
      %v1506 = vmul.f32 %v1495, %v1504
      %v1507 = vmul.f32 %v1497, %v1505
      %v1508 = vpack.c.bf16 %v1507, %v1506
      %1510 = vrot.lane.b32.xlu0 %v1305, 96
      %v1511 = vpop.permute.xlu0 %1510
      %v1514 = vsel %vm1360, %v1508, 0
      %1516 = vmatprep.subr.bf16.mxu0 0
      %1517 = vmatpush1.bf16.msra.mxu0 0
      %1518 = vmatprep.subr.bf16.mxu0 0
      %1519 = vmatpush1.bf16.msra.mxu0 0
      %1520 = vmatprep.subr.bf16.mxu0 0
      %1521 = vmatpush1.bf16.msra.mxu0 0
      %1522 = vmatprep.subr.bf16.mxu0 0
      %1523 = vmatpush1.bf16.msra.mxu0 0
      %1524 = vmatprep.subr.bf16.mxu0 0
      %1525 = vmatpush1.bf16.msra.mxu0 0
      %1526 = vmatprep.subr.bf16.mxu0 0
      %1527 = vmatpush1.bf16.msra.mxu0 0
      %1528 = vmatprep.subr.bf16.mxu0 0
      %1529 = vmatpush1.bf16.msra.mxu0 0
      %1530 = vmatprep.subr.bf16.mxu0 0
      %1531 = vmatpush1.bf16.msra.mxu0 %v1511
      %1532 = vmatprep.subr.bf16.mxu0 0
      %1533 = vmatpush2.bf16.msra.mxu0 0
      %1534 = vmatprep.subr.bf16.mxu0 0
      %1535 = vmatpush2.bf16.msra.mxu0 0
      %1536 = vmatprep.subr.bf16.mxu0 0
      %1537 = vmatpush2.bf16.msra.mxu0 0
      %1538 = vmatprep.subr.bf16.mxu0 0
      %1539 = vmatpush2.bf16.msra.mxu0 0
      %1540 = vmatprep.subr.bf16.mxu0 0
      %1541 = vmatpush2.bf16.msra.mxu0 0
      %1542 = vmatprep.subr.bf16.mxu0 0
      %1543 = vmatpush2.bf16.msra.mxu0 0
      %1544 = vmatprep.subr.bf16.mxu0 0
      %1545 = vmatpush2.bf16.msra.mxu0 0
      %1546 = vmatprep.subr.bf16.mxu0 0
      %1547 = vmatpush2.bf16.msra.mxu0 0
      %1548 = vmatprep.mubr.bf16.mxu0 0
      %1549 = vmatmul.mubr.bf16.gmra.mxu0 %v1514
      %v1550 = vpop.f32.mrf.mxu0
      %v1551 = vadd.f32 0.0, %v1550
      %v1552 = vpop.f32.mrf.mxu0
      %v1553 = vpop.f32.mrf.mxu0
      %v1554 = vadd.f32 0.0, %v1553
      %v1555 = vpop.f32.mrf.mxu0
      %1556 = vdwg.mxu0
      %v1557 = vpack.c.bf16 %v1554, %v1551
      %v1558 = vld [vmem:[%s12 + $0x10] sm:$0xf]
      %v1559 = vld [vmem:[%s12 + $0x14] sm:$0xf]
      %v1560 = vld [vmem:[%s12 + $0x18] sm:$0xf]
      %v1561 = vld [vmem:[%s12 + $0x1c] sm:$0xf]
      %v1566 = vunpack.c.l.b16 %v1558
      %v1567 = vunpack.c.l.b16 %v1559
      %v1568 = vunpack.c.l.b16 %v1560
      %v1569 = vunpack.c.l.b16 %v1561
      %v1570 = vpack.c.b16 %v1567, %v1566
      %v1571 = vpack.c.b16 %v1569, %v1568
      %v1575 = vsel %vm1312, %v1557, 0
      %1577 = vmatprep.subr.bf16.mxu0 0
      %1578 = vmatpush1.bf16.msra.mxu0 0
      %1579 = vmatprep.subr.bf16.mxu0 0
      %1580 = vmatpush1.bf16.msra.mxu0 0
      %1581 = vmatprep.subr.bf16.mxu0 0
      %1582 = vmatpush1.bf16.msra.mxu0 0
      %1583 = vmatprep.subr.bf16.mxu0 0
      %1584 = vmatpush1.bf16.msra.mxu0 0
      %1585 = vmatprep.subr.bf16.mxu0 0
      %1586 = vmatpush1.bf16.msra.mxu0 0
      %1587 = vmatprep.subr.bf16.mxu0 0
      %1588 = vmatpush1.bf16.msra.mxu0 0
      %1589 = vmatprep.subr.bf16.mxu0 0
      %1590 = vmatpush1.bf16.msra.mxu0 %v1571
      %1591 = vmatprep.subr.bf16.mxu0 0
      %1592 = vmatpush1.bf16.msra.mxu0 %v1570
      %1593 = vmatprep.subr.bf16.mxu0 0
      %1594 = vmatpush2.bf16.msra.mxu0 0
      %1595 = vmatprep.subr.bf16.mxu0 0
      %1596 = vmatpush2.bf16.msra.mxu0 0
      %1597 = vmatprep.subr.bf16.mxu0 0
      %1598 = vmatpush2.bf16.msra.mxu0 0
      %1599 = vmatprep.subr.bf16.mxu0 0
      %1600 = vmatpush2.bf16.msra.mxu0 0
      %1601 = vmatprep.subr.bf16.mxu0 0
      %1602 = vmatpush2.bf16.msra.mxu0 0
      %1603 = vmatprep.subr.bf16.mxu0 0
      %1604 = vmatpush2.bf16.msra.mxu0 0
      %1605 = vmatprep.subr.bf16.mxu0 0
      %1606 = vmatpush2.bf16.msra.mxu0 0
      %1607 = vmatprep.subr.bf16.mxu0 0
      %1608 = vmatpush2.bf16.msra.mxu0 0
      %1609 = vmatprep.mubr.bf16.mxu0 0
      %1610 = vmatmul.mubr.bf16.gmra.mxu0 %v1575
      %v1611 = vpop.f32.mrf.mxu0
      %v1612 = vadd.f32 0.0, %v1611
      %v1613 = vpop.f32.mrf.mxu0
      %v1614 = vpop.f32.mrf.mxu0
      %v1615 = vadd.f32 0.0, %v1614
      %v1616 = vpop.f32.mrf.mxu0
      %1617 = vdwg.mxu0
      %v1622 = vunpack.c.l.b16 %v1429
      %v1623 = vunpack.c.l.b16 %v1430
      %v1624 = vunpack.c.l.b16 %v1431
      %v1625 = vunpack.c.l.b16 %v1432
      %v1626 = vpack.c.b16 %v1623, %v1622
      %v1627 = vpack.c.b16 %v1625, %v1624
      %v1631 = vsel %vm1312, %v1428, 0
      %1633 = vmatprep.subr.bf16.mxu0 0
      %1634 = vmatpush1.bf16.msra.mxu0 0
      %1635 = vmatprep.subr.bf16.mxu0 0
      %1636 = vmatpush1.bf16.msra.mxu0 0
      %1637 = vmatprep.subr.bf16.mxu0 0
      %1638 = vmatpush1.bf16.msra.mxu0 0
      %1639 = vmatprep.subr.bf16.mxu0 0
      %1640 = vmatpush1.bf16.msra.mxu0 0
      %1641 = vmatprep.subr.bf16.mxu0 0
      %1642 = vmatpush1.bf16.msra.mxu0 0
      %1643 = vmatprep.subr.bf16.mxu0 0
      %1644 = vmatpush1.bf16.msra.mxu0 0
      %1645 = vmatprep.subr.bf16.mxu0 0
      %1646 = vmatpush1.bf16.msra.mxu0 %v1627
      %1647 = vmatprep.subr.bf16.mxu0 0
      %1648 = vmatpush1.bf16.msra.mxu0 %v1626
      %1649 = vmatprep.subr.bf16.mxu0 0
      %1650 = vmatpush2.bf16.msra.mxu0 0
      %1651 = vmatprep.subr.bf16.mxu0 0
      %1652 = vmatpush2.bf16.msra.mxu0 0
      %1653 = vmatprep.subr.bf16.mxu0 0
      %1654 = vmatpush2.bf16.msra.mxu0 0
      %1655 = vmatprep.subr.bf16.mxu0 0
      %1656 = vmatpush2.bf16.msra.mxu0 0
      %1657 = vmatprep.subr.bf16.mxu0 0
      %1658 = vmatpush2.bf16.msra.mxu0 0
      %1659 = vmatprep.subr.bf16.mxu0 0
      %1660 = vmatpush2.bf16.msra.mxu0 0
      %1661 = vmatprep.subr.bf16.mxu0 0
      %1662 = vmatpush2.bf16.msra.mxu0 0
      %1663 = vmatprep.subr.bf16.mxu0 0
      %1664 = vmatpush2.bf16.msra.mxu0 0
      %1665 = vmatprep.mubr.bf16.mxu0 0
      %1666 = vmatmul.mubr.bf16.gmra.mxu0 %v1631
      %v1667 = vpop.f32.mrf.mxu0
      %v1668 = vadd.f32 %v1612, %v1667
      %v1669 = vpop.f32.mrf.mxu0
      %v1670 = vpop.f32.mrf.mxu0
      %v1671 = vadd.f32 %v1615, %v1670
      %v1672 = vpop.f32.mrf.mxu0
      %1673 = vdwg.mxu0
      %1674 = vrot.lane.b32.xlu0 %v1303, 64
      %v1675 = vpop.permute.xlu0 %1674
      %1676 = vrot.lane.b32.xlu0 %v1304, 64
      %v1677 = vpop.permute.xlu0 %1676
      %v1679 = vsel %vm1312, %v1675, 0
      %v1682 = vsel %vm1312, %v1677, 0
      %1684 = vmatprep.subr.bf16.mxu0 0
      %1685 = vmatpush1.bf16.xpose.msra.mxu0 0
      %1686 = vmatprep.subr.bf16.mxu0 0
      %1687 = vmatpush1.bf16.xpose.msra.mxu0 0
      %1688 = vmatprep.subr.bf16.mxu0 0
      %1689 = vmatpush1.bf16.xpose.msra.mxu0 0
      %1690 = vmatprep.subr.bf16.mxu0 0
      %1691 = vmatpush1.bf16.xpose.msra.mxu0 0
      %1692 = vmatprep.subr.bf16.mxu0 0
      %1693 = vmatpush1.bf16.xpose.msra.mxu0 0
      %1694 = vmatprep.subr.bf16.mxu0 0
      %1695 = vmatpush1.bf16.xpose.msra.mxu0 0
      %1696 = vmatprep.subr.bf16.mxu0 0
      %1697 = vmatpush1.bf16.xpose.msra.mxu0 0
      %1698 = vmatprep.subr.bf16.mxu0 0
      %1699 = vmatpush1.bf16.xpose.msra.mxu0 %v1682
      %1700 = vmatprep.subr.bf16.mxu0 0
      %1701 = vmatpush2.bf16.xpose.msra.mxu0 0
      %1702 = vmatprep.subr.bf16.mxu0 0
      %1703 = vmatpush2.bf16.xpose.msra.mxu0 0
      %1704 = vmatprep.subr.bf16.mxu0 0
      %1705 = vmatpush2.bf16.xpose.msra.mxu0 0
      %1706 = vmatprep.subr.bf16.mxu0 0
      %1707 = vmatpush2.bf16.xpose.msra.mxu0 0
      %1708 = vmatprep.subr.bf16.mxu0 0
      %1709 = vmatpush2.bf16.xpose.msra.mxu0 0
      %1710 = vmatprep.subr.bf16.mxu0 0
      %1711 = vmatpush2.bf16.xpose.msra.mxu0 0
      %1712 = vmatprep.subr.bf16.mxu0 0
      %1713 = vmatpush2.bf16.xpose.msra.mxu0 0
      %1714 = vmatprep.subr.bf16.mxu0 0
      %1715 = vmatpush2.bf16.xpose.msra.mxu0 0
      %1716 = vmatprep.mubr.bf16.mxu0 0
      %1717 = vmatmul.mubr.bf16.gmra.mxu0 %v1679
      %v1718 = vpop.f32.mrf.mxu0
      %v1719 = vadd.f32 %v1310, %v1718
      %v1720 = vpop.f32.mrf.mxu0
      %v1721 = vpop.f32.mrf.mxu0
      %v1722 = vadd.f32 %v1310, %v1721
      %v1723 = vpop.f32.mrf.mxu0
      %1724 = vdwg.mxu0
      %v1725 = vsel %vm1360, %v1719, -inf
      %1726 = vmax.xlane.f32.xlu0 %v1725
      %v1727 = vpop.xlane.xlu0 %1726
      %v1728 = vsel %vm1360, %v1722, -inf
      %1729 = vmax.xlane.f32.xlu0 %v1728
      %v1730 = vpop.xlane.xlu0 %1729
      %v1731 = vsub.f32 %v1719, %v1727
      %v1732 = vsub.f32 %v1722, %v1730
      %v1733 = vmul.f32 %v1731, 1.442695
      %v1734 = vpow.pop %v1733
      %v1735 = vmul.f32 %v1732, 1.442695
      %v1736 = vpow.pop %v1735
      %v1737 = vsel %vm1360, %v1734, 0.0
      %1738 = vadd.xlane.f32.xlu0 %v1737
      %v1739 = vpop.xlane.xlu0 %1738
      %v1740 = vsel %vm1360, %v1736, 0.0
      %1741 = vadd.xlane.f32.xlu0 %v1740
      %v1742 = vpop.xlane.xlu0 %1741
      %v1743 = vrcp.pop %v1739
      %v1744 = vrcp.pop %v1742
      %v1745 = vmul.f32 %v1734, %v1743
      %v1746 = vmul.f32 %v1736, %v1744
      %v1747 = vpack.c.bf16 %v1746, %v1745
      %1748 = vrot.lane.b32.xlu0 %v1305, 64
      %v1749 = vpop.permute.xlu0 %1748
      %v1752 = vsel %vm1360, %v1747, 0
      %1754 = vmatprep.subr.bf16.mxu0 0
      %1755 = vmatpush1.bf16.msra.mxu0 0
      %1756 = vmatprep.subr.bf16.mxu0 0
      %1757 = vmatpush1.bf16.msra.mxu0 0
      %1758 = vmatprep.subr.bf16.mxu0 0
      %1759 = vmatpush1.bf16.msra.mxu0 0
      %1760 = vmatprep.subr.bf16.mxu0 0
      %1761 = vmatpush1.bf16.msra.mxu0 0
      %1762 = vmatprep.subr.bf16.mxu0 0
      %1763 = vmatpush1.bf16.msra.mxu0 0
      %1764 = vmatprep.subr.bf16.mxu0 0
      %1765 = vmatpush1.bf16.msra.mxu0 0
      %1766 = vmatprep.subr.bf16.mxu0 0
      %1767 = vmatpush1.bf16.msra.mxu0 0
      %1768 = vmatprep.subr.bf16.mxu0 0
      %1769 = vmatpush1.bf16.msra.mxu0 %v1749
      %1770 = vmatprep.subr.bf16.mxu0 0
      %1771 = vmatpush2.bf16.msra.mxu0 0
      %1772 = vmatprep.subr.bf16.mxu0 0
      %1773 = vmatpush2.bf16.msra.mxu0 0
      %1774 = vmatprep.subr.bf16.mxu0 0
      %1775 = vmatpush2.bf16.msra.mxu0 0
      %1776 = vmatprep.subr.bf16.mxu0 0
      %1777 = vmatpush2.bf16.msra.mxu0 0
      %1778 = vmatprep.subr.bf16.mxu0 0
      %1779 = vmatpush2.bf16.msra.mxu0 0
      %1780 = vmatprep.subr.bf16.mxu0 0
      %1781 = vmatpush2.bf16.msra.mxu0 0
      %1782 = vmatprep.subr.bf16.mxu0 0
      %1783 = vmatpush2.bf16.msra.mxu0 0
      %1784 = vmatprep.subr.bf16.mxu0 0
      %1785 = vmatpush2.bf16.msra.mxu0 0
      %1786 = vmatprep.mubr.bf16.mxu0 0
      %1787 = vmatmul.mubr.bf16.gmra.mxu0 %v1752
      %v1788 = vpop.f32.mrf.mxu0
      %v1789 = vadd.f32 0.0, %v1788
      %v1790 = vpop.f32.mrf.mxu0
      %v1791 = vpop.f32.mrf.mxu0
      %v1792 = vadd.f32 0.0, %v1791
      %v1793 = vpop.f32.mrf.mxu0
      %1794 = vdwg.mxu0
      %v1795 = vpack.c.bf16 %v1792, %v1789
      %v1796 = vld [vmem:[%s12 + $0x20] sm:$0xf]
      %v1797 = vld [vmem:[%s12 + $0x24] sm:$0xf]
      %v1798 = vld [vmem:[%s12 + $0x28] sm:$0xf]
      %v1799 = vld [vmem:[%s12 + $0x2c] sm:$0xf]
      %v1804 = vunpack.c.l.b16 %v1796
      %v1805 = vunpack.c.l.b16 %v1797
      %v1806 = vunpack.c.l.b16 %v1798
      %v1807 = vunpack.c.l.b16 %v1799
      %v1808 = vpack.c.b16 %v1805, %v1804
      %v1809 = vpack.c.b16 %v1807, %v1806
      %v1813 = vsel %vm1312, %v1795, 0
      %1815 = vmatprep.subr.bf16.mxu0 0
      %1816 = vmatpush1.bf16.msra.mxu0 0
      %1817 = vmatprep.subr.bf16.mxu0 0
      %1818 = vmatpush1.bf16.msra.mxu0 0
      %1819 = vmatprep.subr.bf16.mxu0 0
      %1820 = vmatpush1.bf16.msra.mxu0 0
      %1821 = vmatprep.subr.bf16.mxu0 0
      %1822 = vmatpush1.bf16.msra.mxu0 0
      %1823 = vmatprep.subr.bf16.mxu0 0
      %1824 = vmatpush1.bf16.msra.mxu0 0
      %1825 = vmatprep.subr.bf16.mxu0 0
      %1826 = vmatpush1.bf16.msra.mxu0 0
      %1827 = vmatprep.subr.bf16.mxu0 0
      %1828 = vmatpush1.bf16.msra.mxu0 %v1809
      %1829 = vmatprep.subr.bf16.mxu0 0
      %1830 = vmatpush1.bf16.msra.mxu0 %v1808
      %1831 = vmatprep.subr.bf16.mxu0 0
      %1832 = vmatpush2.bf16.msra.mxu0 0
      %1833 = vmatprep.subr.bf16.mxu0 0
      %1834 = vmatpush2.bf16.msra.mxu0 0
      %1835 = vmatprep.subr.bf16.mxu0 0
      %1836 = vmatpush2.bf16.msra.mxu0 0
      %1837 = vmatprep.subr.bf16.mxu0 0
      %1838 = vmatpush2.bf16.msra.mxu0 0
      %1839 = vmatprep.subr.bf16.mxu0 0
      %1840 = vmatpush2.bf16.msra.mxu0 0
      %1841 = vmatprep.subr.bf16.mxu0 0
      %1842 = vmatpush2.bf16.msra.mxu0 0
      %1843 = vmatprep.subr.bf16.mxu0 0
      %1844 = vmatpush2.bf16.msra.mxu0 0
      %1845 = vmatprep.subr.bf16.mxu0 0
      %1846 = vmatpush2.bf16.msra.mxu0 0
      %1847 = vmatprep.mubr.bf16.mxu0 0
      %1848 = vmatmul.mubr.bf16.gmra.mxu0 %v1813
      %v1849 = vpop.f32.mrf.mxu0
      %v1850 = vadd.f32 0.0, %v1849
      %v1851 = vpop.f32.mrf.mxu0
      %v1852 = vpop.f32.mrf.mxu0
      %v1853 = vadd.f32 0.0, %v1852
      %v1854 = vpop.f32.mrf.mxu0
      %1855 = vdwg.mxu0
      %v1856 = vadd.f32 %v1668, %v1850
      %v1857 = vadd.f32 %v1671, %v1853
      %1858 = vrot.lane.b32.xlu0 %v1303, 32
      %v1859 = vpop.permute.xlu0 %1858
      %1860 = vrot.lane.b32.xlu0 %v1304, 32
      %v1861 = vpop.permute.xlu0 %1860
      %v1863 = vsel %vm1312, %v1859, 0
      %v1866 = vsel %vm1312, %v1861, 0
      %1868 = vmatprep.subr.bf16.mxu0 0
      %1869 = vmatpush1.bf16.xpose.msra.mxu0 0
      %1870 = vmatprep.subr.bf16.mxu0 0
      %1871 = vmatpush1.bf16.xpose.msra.mxu0 0
      %1872 = vmatprep.subr.bf16.mxu0 0
      %1873 = vmatpush1.bf16.xpose.msra.mxu0 0
      %1874 = vmatprep.subr.bf16.mxu0 0
      %1875 = vmatpush1.bf16.xpose.msra.mxu0 0
      %1876 = vmatprep.subr.bf16.mxu0 0
      %1877 = vmatpush1.bf16.xpose.msra.mxu0 0
      %1878 = vmatprep.subr.bf16.mxu0 0
      %1879 = vmatpush1.bf16.xpose.msra.mxu0 0
      %1880 = vmatprep.subr.bf16.mxu0 0
      %1881 = vmatpush1.bf16.xpose.msra.mxu0 0
      %1882 = vmatprep.subr.bf16.mxu0 0
      %1883 = vmatpush1.bf16.xpose.msra.mxu0 %v1866
      %1884 = vmatprep.subr.bf16.mxu0 0
      %1885 = vmatpush2.bf16.xpose.msra.mxu0 0
      %1886 = vmatprep.subr.bf16.mxu0 0
      %1887 = vmatpush2.bf16.xpose.msra.mxu0 0
      %1888 = vmatprep.subr.bf16.mxu0 0
      %1889 = vmatpush2.bf16.xpose.msra.mxu0 0
      %1890 = vmatprep.subr.bf16.mxu0 0
      %1891 = vmatpush2.bf16.xpose.msra.mxu0 0
      %1892 = vmatprep.subr.bf16.mxu0 0
      %1893 = vmatpush2.bf16.xpose.msra.mxu0 0
      %1894 = vmatprep.subr.bf16.mxu0 0
      %1895 = vmatpush2.bf16.xpose.msra.mxu0 0
      %1896 = vmatprep.subr.bf16.mxu0 0
      %1897 = vmatpush2.bf16.xpose.msra.mxu0 0
      %1898 = vmatprep.subr.bf16.mxu0 0
      %1899 = vmatpush2.bf16.xpose.msra.mxu0 0
      %1900 = vmatprep.mubr.bf16.mxu0 0
      %1901 = vmatmul.mubr.bf16.gmra.mxu0 %v1863
      %v1902 = vpop.f32.mrf.mxu0
      %v1903 = vadd.f32 %v1310, %v1902
      %v1904 = vpop.f32.mrf.mxu0
      %v1905 = vpop.f32.mrf.mxu0
      %v1906 = vadd.f32 %v1310, %v1905
      %v1907 = vpop.f32.mrf.mxu0
      %1908 = vdwg.mxu0
      %v1909 = vsel %vm1360, %v1903, -inf
      %1910 = vmax.xlane.f32.xlu0 %v1909
      %v1911 = vpop.xlane.xlu0 %1910
      %v1912 = vsel %vm1360, %v1906, -inf
      %1913 = vmax.xlane.f32.xlu0 %v1912
      %v1914 = vpop.xlane.xlu0 %1913
      %v1915 = vsub.f32 %v1903, %v1911
      %v1916 = vsub.f32 %v1906, %v1914
      %v1917 = vmul.f32 %v1915, 1.442695
      %v1918 = vpow.pop %v1917
      %v1919 = vmul.f32 %v1916, 1.442695
      %v1920 = vpow.pop %v1919
      %v1921 = vsel %vm1360, %v1918, 0.0
      %1922 = vadd.xlane.f32.xlu0 %v1921
      %v1923 = vpop.xlane.xlu0 %1922
      %v1924 = vsel %vm1360, %v1920, 0.0
      %1925 = vadd.xlane.f32.xlu0 %v1924
      %v1926 = vpop.xlane.xlu0 %1925
      %v1927 = vrcp.pop %v1923
      %v1928 = vrcp.pop %v1926
      %v1929 = vmul.f32 %v1918, %v1927
      %v1930 = vmul.f32 %v1920, %v1928
      %v1931 = vpack.c.bf16 %v1930, %v1929
      %1932 = vrot.lane.b32.xlu0 %v1305, 32
      %v1933 = vpop.permute.xlu0 %1932
      %v1936 = vsel %vm1360, %v1931, 0
      %1938 = vmatprep.subr.bf16.mxu0 0
      %1939 = vmatpush1.bf16.msra.mxu0 0
      %1940 = vmatprep.subr.bf16.mxu0 0
      %1941 = vmatpush1.bf16.msra.mxu0 0
      %1942 = vmatprep.subr.bf16.mxu0 0
      %1943 = vmatpush1.bf16.msra.mxu0 0
      %1944 = vmatprep.subr.bf16.mxu0 0
      %1945 = vmatpush1.bf16.msra.mxu0 0
      %1946 = vmatprep.subr.bf16.mxu0 0
      %1947 = vmatpush1.bf16.msra.mxu0 0
      %1948 = vmatprep.subr.bf16.mxu0 0
      %1949 = vmatpush1.bf16.msra.mxu0 0
      %1950 = vmatprep.subr.bf16.mxu0 0
      %1951 = vmatpush1.bf16.msra.mxu0 0
      %1952 = vmatprep.subr.bf16.mxu0 0
      %1953 = vmatpush1.bf16.msra.mxu0 %v1933
      %1954 = vmatprep.subr.bf16.mxu0 0
      %1955 = vmatpush2.bf16.msra.mxu0 0
      %1956 = vmatprep.subr.bf16.mxu0 0
      %1957 = vmatpush2.bf16.msra.mxu0 0
      %1958 = vmatprep.subr.bf16.mxu0 0
      %1959 = vmatpush2.bf16.msra.mxu0 0
      %1960 = vmatprep.subr.bf16.mxu0 0
      %1961 = vmatpush2.bf16.msra.mxu0 0
      %1962 = vmatprep.subr.bf16.mxu0 0
      %1963 = vmatpush2.bf16.msra.mxu0 0
      %1964 = vmatprep.subr.bf16.mxu0 0
      %1965 = vmatpush2.bf16.msra.mxu0 0
      %1966 = vmatprep.subr.bf16.mxu0 0
      %1967 = vmatpush2.bf16.msra.mxu0 0
      %1968 = vmatprep.subr.bf16.mxu0 0
      %1969 = vmatpush2.bf16.msra.mxu0 0
      %1970 = vmatprep.mubr.bf16.mxu0 0
      %1971 = vmatmul.mubr.bf16.gmra.mxu0 %v1936
      %v1972 = vpop.f32.mrf.mxu0
      %v1973 = vadd.f32 0.0, %v1972
      %v1974 = vpop.f32.mrf.mxu0
      %v1975 = vpop.f32.mrf.mxu0
      %v1976 = vadd.f32 0.0, %v1975
      %v1977 = vpop.f32.mrf.mxu0
      %1978 = vdwg.mxu0
      %v1979 = vpack.c.bf16 %v1976, %v1973
      %v1980 = vld [vmem:[%s12 + $0x30] sm:$0xf]
      %v1981 = vld [vmem:[%s12 + $0x34] sm:$0xf]
      %v1982 = vld [vmem:[%s12 + $0x38] sm:$0xf]
      %v1983 = vld [vmem:[%s12 + $0x3c] sm:$0xf]
      %v1984 = vld [vmem:[%s13] sm:$0x1]
      %v1986 = vlaneseq
      %v1987 = vshrl.u32 %v1986, 7
      %v1988 = vsub.s32 0, %v1987
      %v1989 = vrot.slane %v1984, %v1988
      %v1995 = vunpack.c.l.b16 %v1980
      %v1996 = vunpack.c.l.b16 %v1981
      %v1997 = vunpack.c.l.b16 %v1982
      %v1998 = vunpack.c.l.b16 %v1983
      %v1999 = vpack.c.b16 %v1996, %v1995
      %v2000 = vpack.c.b16 %v1998, %v1997
      %v2004 = vsel %vm1312, %v1979, 0
      %2006 = vmatprep.subr.bf16.mxu0 0
      %2007 = vmatpush1.bf16.msra.mxu0 0
      %2008 = vmatprep.subr.bf16.mxu0 0
      %2009 = vmatpush1.bf16.msra.mxu0 0
      %2010 = vmatprep.subr.bf16.mxu0 0
      %2011 = vmatpush1.bf16.msra.mxu0 0
      %2012 = vmatprep.subr.bf16.mxu0 0
      %2013 = vmatpush1.bf16.msra.mxu0 0
      %2014 = vmatprep.subr.bf16.mxu0 0
      %2015 = vmatpush1.bf16.msra.mxu0 0
      %2016 = vmatprep.subr.bf16.mxu0 0
      %2017 = vmatpush1.bf16.msra.mxu0 0
      %2018 = vmatprep.subr.bf16.mxu0 0
      %2019 = vmatpush1.bf16.msra.mxu0 %v2000
      %2020 = vmatprep.subr.bf16.mxu0 0
      %2021 = vmatpush1.bf16.msra.mxu0 %v1999
      %2022 = vmatprep.subr.bf16.mxu0 0
      %2023 = vmatpush2.bf16.msra.mxu0 0
      %2024 = vmatprep.subr.bf16.mxu0 0
      %2025 = vmatpush2.bf16.msra.mxu0 0
      %2026 = vmatprep.subr.bf16.mxu0 0
      %2027 = vmatpush2.bf16.msra.mxu0 0
      %2028 = vmatprep.subr.bf16.mxu0 0
      %2029 = vmatpush2.bf16.msra.mxu0 0
      %2030 = vmatprep.subr.bf16.mxu0 0
      %2031 = vmatpush2.bf16.msra.mxu0 0
      %2032 = vmatprep.subr.bf16.mxu0 0
      %2033 = vmatpush2.bf16.msra.mxu0 0
      %2034 = vmatprep.subr.bf16.mxu0 0
      %2035 = vmatpush2.bf16.msra.mxu0 0
      %2036 = vmatprep.subr.bf16.mxu0 0
      %2037 = vmatpush2.bf16.msra.mxu0 0
      %2038 = vmatprep.mubr.bf16.mxu0 0
      %2039 = vmatmul.mubr.bf16.gmra.mxu0 %v2004
      %v2040 = vpop.f32.mrf.mxu0
      %v2041 = vadd.f32 %v1989, %v2040
      %v2042 = vpop.f32.mrf.mxu0
      %v2043 = vpop.f32.mrf.mxu0
      %v2044 = vadd.f32 %v1989, %v2043
      %v2045 = vpop.f32.mrf.mxu0
      %2046 = vdwg.mxu0
      %v2047 = vadd.f32 %v1856, %v2041
      %v2048 = vadd.f32 %v1857, %v2044
      %v2049 = vadd.f32 %v2047, %v1002
      %v2050 = vadd.f32 %v2048, %v1003
      %v2051 = vld [vmem:[%s8 + $0x1] sm:$0x1]
      %v2052 = vld [vmem:[%s9 + $0x1] sm:$0x1]
      %2053 = vadd.xlane.f32.xlu0 %v2049
      %v2054 = vpop.xlane.xlu0 %2053
      %2055 = vadd.xlane.f32.xlu0 %v2050
      %v2056 = vpop.xlane.xlu0 %2055
      %v2057 = vmul.f32 %v2054, %v551
      %v2058 = vmul.f32 %v2056, %v551
      %v2059 = vsub.f32 %v2049, %v2057
      %v2060 = vsub.f32 %v2050, %v2058
      %v2061 = vmul.f32 %v2059, %v2059
      %v2062 = vmul.f32 %v2060, %v2060
      %2063 = vadd.xlane.f32.xlu0 %v2061
      %v2064 = vpop.xlane.xlu0 %2063
      %2065 = vadd.xlane.f32.xlu0 %v2062
      %v2066 = vpop.xlane.xlu0 %2065
      %v2067 = vmul.f32 %v2064, %v551
      %v2068 = vmul.f32 %v2066, %v551
      %v2069 = vadd.f32 %v2067, 1e-05
      %v2070 = vadd.f32 %v2068, 1e-05
      %v2071 = vrsqrt.pop %v2069
      %v2072 = vrsqrt.pop %v2070
      %v2073 = vmul.f32 %v2059, %v2071
      %v2074 = vmul.f32 %v2060, %v2072
      %v2075 = vlaneseq
      %v2076 = vshrl.u32 %v2075, 7
      %v2077 = vsub.s32 0, %v2076
      %v2078 = vrot.slane %v2051, %v2077
      %v2079 = vmul.f32 %v2073, %v2078
      %v2080 = vmul.f32 %v2074, %v2078
      %v2081 = vlaneseq
      %v2082 = vshrl.u32 %v2081, 7
      %v2083 = vsub.s32 0, %v2082
      %v2084 = vrot.slane %v2052, %v2083
      %v2085 = vadd.f32 %v2079, %v2084
      %v2086 = vadd.f32 %v2080, %v2084
      %v2087 = vpack.c.bf16 %v2086, %v2085
      %v2088 = vld [vmem:[%s14] sm:$0xf]
      %v2089 = vld [vmem:[%s14 + $0x4] sm:$0xf]
      %v2090 = vld [vmem:[%s14 + $0x8] sm:$0xf]
      %v2091 = vld [vmem:[%s14 + $0xc] sm:$0xf]
      %v2092 = vld [vmem:[%s14 + $0x10] sm:$0xf]
      %v2093 = vld [vmem:[%s14 + $0x14] sm:$0xf]
      %v2094 = vld [vmem:[%s14 + $0x18] sm:$0xf]
      %v2095 = vld [vmem:[%s14 + $0x1c] sm:$0xf]
      %v2096 = vld [vmem:[%s14 + $0x20] sm:$0xf]
      %v2097 = vld [vmem:[%s14 + $0x24] sm:$0xf]
      %v2098 = vld [vmem:[%s14 + $0x28] sm:$0xf]
      %v2099 = vld [vmem:[%s14 + $0x2c] sm:$0xf]
      %v2100 = vld [vmem:[%s14 + $0x30] sm:$0xf]
      %v2101 = vld [vmem:[%s14 + $0x34] sm:$0xf]
      %v2102 = vld [vmem:[%s14 + $0x38] sm:$0xf]
      %v2103 = vld [vmem:[%s14 + $0x3c] sm:$0xf]
      %v2104 = vld [vmem:[%s15] sm:$0x1]
      %v2105 = vlaneseq
      %v2106 = vshrl.u32 %v2105, 7
      %v2107 = vsub.s32 0, %v2106
      %v2108 = vrot.slane %v2104, %v2107
      %v2125 = vunpack.c.l.b16 %v2088
      %v2126 = vunpack.c.l.b16 %v2089
      %v2127 = vunpack.c.l.b16 %v2090
      %v2128 = vunpack.c.l.b16 %v2091
      %v2129 = vunpack.c.l.b16 %v2092
      %v2130 = vunpack.c.l.b16 %v2093
      %v2131 = vunpack.c.l.b16 %v2094
      %v2132 = vunpack.c.l.b16 %v2095
      %v2133 = vunpack.c.l.b16 %v2096
      %v2134 = vunpack.c.l.b16 %v2097
      %v2135 = vunpack.c.l.b16 %v2098
      %v2136 = vunpack.c.l.b16 %v2099
      %v2137 = vunpack.c.l.b16 %v2100
      %v2138 = vunpack.c.l.b16 %v2101
      %v2139 = vunpack.c.l.b16 %v2102
      %v2140 = vunpack.c.l.b16 %v2103
      %v2141 = vpack.c.b16 %v2126, %v2125
      %v2142 = vpack.c.b16 %v2128, %v2127
      %v2143 = vpack.c.b16 %v2130, %v2129
      %v2144 = vpack.c.b16 %v2132, %v2131
      %v2145 = vpack.c.b16 %v2134, %v2133
      %v2146 = vpack.c.b16 %v2136, %v2135
      %v2147 = vpack.c.b16 %v2138, %v2137
      %v2148 = vpack.c.b16 %v2140, %v2139
      %2157 = vmatprep.subr.bf16.mxu0 0
      %2158 = vmatpush1.bf16.msra.mxu0 %v2148
      %2159 = vmatprep.subr.bf16.mxu0 0
      %2160 = vmatpush1.bf16.msra.mxu0 %v2147
      %2161 = vmatprep.subr.bf16.mxu0 0
      %2162 = vmatpush1.bf16.msra.mxu0 %v2146
      %2163 = vmatprep.subr.bf16.mxu0 0
      %2164 = vmatpush1.bf16.msra.mxu0 %v2145
      %2165 = vmatprep.subr.bf16.mxu0 0
      %2166 = vmatpush1.bf16.msra.mxu0 %v2144
      %2167 = vmatprep.subr.bf16.mxu0 0
      %2168 = vmatpush1.bf16.msra.mxu0 %v2143
      %2169 = vmatprep.subr.bf16.mxu0 0
      %2170 = vmatpush1.bf16.msra.mxu0 %v2142
      %2171 = vmatprep.subr.bf16.mxu0 0
      %2172 = vmatpush1.bf16.msra.mxu0 %v2141
      %2173 = vmatprep.subr.bf16.mxu0 0
      %2174 = vmatpush2.bf16.msra.mxu0 0
      %2175 = vmatprep.subr.bf16.mxu0 0
      %2176 = vmatpush2.bf16.msra.mxu0 0
      %2177 = vmatprep.subr.bf16.mxu0 0
      %2178 = vmatpush2.bf16.msra.mxu0 0
      %2179 = vmatprep.subr.bf16.mxu0 0
      %2180 = vmatpush2.bf16.msra.mxu0 0
      %2181 = vmatprep.subr.bf16.mxu0 0
      %2182 = vmatpush2.bf16.msra.mxu0 0
      %2183 = vmatprep.subr.bf16.mxu0 0
      %2184 = vmatpush2.bf16.msra.mxu0 0
      %2185 = vmatprep.subr.bf16.mxu0 0
      %2186 = vmatpush2.bf16.msra.mxu0 0
      %2187 = vmatprep.subr.bf16.mxu0 0
      %2188 = vmatpush2.bf16.msra.mxu0 0
      %2189 = vmatprep.mubr.bf16.mxu0 0
      %2190 = vmatmul.mubr.bf16.gmra.mxu0 %v2087
      %v2191 = vpop.f32.mrf.mxu0
      %v2192 = vadd.f32 %v2108, %v2191
      %v2193 = vpop.f32.mrf.mxu0
      %v2194 = vpop.f32.mrf.mxu0
      %v2195 = vadd.f32 %v2108, %v2194
      %v2196 = vpop.f32.mrf.mxu0
      %2197 = vdwg.mxu0
      %v2198 = vmax.f32 %v2192, 0.0
      %v2199 = vmax.f32 %v2195, 0.0
      %v2200 = vpack.c.bf16 %v2199, %v2198
      %s2201 = scalar_lea.vmem %s14, 64
      %v2202 = vld [vmem:[%s2201] sm:$0xf]
      %v2203 = vld [vmem:[%s2201 + $0x4] sm:$0xf]
      %v2204 = vld [vmem:[%s2201 + $0x8] sm:$0xf]
      %v2205 = vld [vmem:[%s2201 + $0xc] sm:$0xf]
      %v2206 = vld [vmem:[%s2201 + $0x10] sm:$0xf]
      %v2207 = vld [vmem:[%s2201 + $0x14] sm:$0xf]
      %v2208 = vld [vmem:[%s2201 + $0x18] sm:$0xf]
      %v2209 = vld [vmem:[%s2201 + $0x1c] sm:$0xf]
      %v2210 = vld [vmem:[%s2201 + $0x20] sm:$0xf]
      %v2211 = vld [vmem:[%s2201 + $0x24] sm:$0xf]
      %v2212 = vld [vmem:[%s2201 + $0x28] sm:$0xf]
      %v2213 = vld [vmem:[%s2201 + $0x2c] sm:$0xf]
      %v2214 = vld [vmem:[%s2201 + $0x30] sm:$0xf]
      %v2215 = vld [vmem:[%s2201 + $0x34] sm:$0xf]
      %v2216 = vld [vmem:[%s2201 + $0x38] sm:$0xf]
      %v2217 = vld [vmem:[%s2201 + $0x3c] sm:$0xf]
      %v2218 = vld [vmem:[%s15 + $0x1] sm:$0x1]
      %v2219 = vlaneseq
      %v2220 = vshrl.u32 %v2219, 7
      %v2221 = vsub.s32 0, %v2220
      %v2222 = vrot.slane %v2218, %v2221
      %v2239 = vunpack.c.l.b16 %v2202
      %v2240 = vunpack.c.l.b16 %v2203
      %v2241 = vunpack.c.l.b16 %v2204
      %v2242 = vunpack.c.l.b16 %v2205
      %v2243 = vunpack.c.l.b16 %v2206
      %v2244 = vunpack.c.l.b16 %v2207
      %v2245 = vunpack.c.l.b16 %v2208
      %v2246 = vunpack.c.l.b16 %v2209
      %v2247 = vunpack.c.l.b16 %v2210
      %v2248 = vunpack.c.l.b16 %v2211
      %v2249 = vunpack.c.l.b16 %v2212
      %v2250 = vunpack.c.l.b16 %v2213
      %v2251 = vunpack.c.l.b16 %v2214
      %v2252 = vunpack.c.l.b16 %v2215
      %v2253 = vunpack.c.l.b16 %v2216
      %v2254 = vunpack.c.l.b16 %v2217
      %v2255 = vpack.c.b16 %v2240, %v2239
      %v2256 = vpack.c.b16 %v2242, %v2241
      %v2257 = vpack.c.b16 %v2244, %v2243
      %v2258 = vpack.c.b16 %v2246, %v2245
      %v2259 = vpack.c.b16 %v2248, %v2247
      %v2260 = vpack.c.b16 %v2250, %v2249
      %v2261 = vpack.c.b16 %v2252, %v2251
      %v2262 = vpack.c.b16 %v2254, %v2253
      %2271 = vmatprep.subr.bf16.mxu0 0
      %2272 = vmatpush1.bf16.msra.mxu0 %v2262
      %2273 = vmatprep.subr.bf16.mxu0 0
      %2274 = vmatpush1.bf16.msra.mxu0 %v2261
      %2275 = vmatprep.subr.bf16.mxu0 0
      %2276 = vmatpush1.bf16.msra.mxu0 %v2260
      %2277 = vmatprep.subr.bf16.mxu0 0
      %2278 = vmatpush1.bf16.msra.mxu0 %v2259
      %2279 = vmatprep.subr.bf16.mxu0 0
      %2280 = vmatpush1.bf16.msra.mxu0 %v2258
      %2281 = vmatprep.subr.bf16.mxu0 0
      %2282 = vmatpush1.bf16.msra.mxu0 %v2257
      %2283 = vmatprep.subr.bf16.mxu0 0
      %2284 = vmatpush1.bf16.msra.mxu0 %v2256
      %2285 = vmatprep.subr.bf16.mxu0 0
      %2286 = vmatpush1.bf16.msra.mxu0 %v2255
      %2287 = vmatprep.subr.bf16.mxu0 0
      %2288 = vmatpush2.bf16.msra.mxu0 0
      %2289 = vmatprep.subr.bf16.mxu0 0
      %2290 = vmatpush2.bf16.msra.mxu0 0
      %2291 = vmatprep.subr.bf16.mxu0 0
      %2292 = vmatpush2.bf16.msra.mxu0 0
      %2293 = vmatprep.subr.bf16.mxu0 0
      %2294 = vmatpush2.bf16.msra.mxu0 0
      %2295 = vmatprep.subr.bf16.mxu0 0
      %2296 = vmatpush2.bf16.msra.mxu0 0
      %2297 = vmatprep.subr.bf16.mxu0 0
      %2298 = vmatpush2.bf16.msra.mxu0 0
      %2299 = vmatprep.subr.bf16.mxu0 0
      %2300 = vmatpush2.bf16.msra.mxu0 0
      %2301 = vmatprep.subr.bf16.mxu0 0
      %2302 = vmatpush2.bf16.msra.mxu0 0
      %2303 = vmatprep.mubr.bf16.mxu0 0
      %2304 = vmatmul.mubr.bf16.gmra.mxu0 %v2200
      %v2305 = vpop.f32.mrf.mxu0
      %v2306 = vadd.f32 %v2222, %v2305
      %v2307 = vpop.f32.mrf.mxu0
      %v2308 = vpop.f32.mrf.mxu0
      %v2309 = vadd.f32 %v2222, %v2308
      %v2310 = vpop.f32.mrf.mxu0
      %2311 = vdwg.mxu0
      %v2312 = vadd.f32 %v2306, %v2049
      %v2313 = vadd.f32 %v2309, %v2050
      %2314 = vst [vmem:[%s535] sm:$0xff] %v2312
      %2315 = vst [vmem:[%s535 + $0x8] sm:$0xff] %v2313
      %p2316 = scmp.lt.s32.totalorder %s27, 1
      %s2317 = scalar_select %p2316, %s27, 1
      %s2318 = smul.addr %s2317, 2
      %s2319 = smul.addr %s2318, 8
      %s2320 = scalar_lea.vmem %s16, %s2319
      // Predicated region
      $region85: #{stacked_encoder_forward.1} parent=83 // pred_check
        %p2321 = pneg %p391
      $region86: #{stacked_encoder_forward.1} parent=83 // pred_check_branch
        %2323 = sbr.rel (%p2321) target = $region88
      $region87: #{stacked_encoder_forward.1} parent=83 // pred_region
        _
      $region88: #{stacked_encoder_forward.1} parent=83 // pred_fallthru
        _
    $region84: #{stacked_encoder_forward.1} parent=5 // pred_fallthru
      _
    %p2324 = scmp.le.s32.totalorder 2, %s22
    // Predicated region
    $region89: #{stacked_encoder_forward.1} parent=5 // pred_check
      %p2325 = pneg %p2324
    $region90: #{stacked_encoder_forward.1} parent=5 // pred_check_branch
      %2327 = sbr.rel (%p2325) target = $region92
    $region91: #{stacked_encoder_forward.1} parent=5 // pred_region
      %s2328 = ssub.s32 %s22, 2
      // Predicated region
      $region93: #{stacked_encoder_forward.1} parent=91 // pred_check
        %p2329 = pneg %p397
      $region94: #{stacked_encoder_forward.1} parent=91 // pred_check_branch
        %2331 = sbr.rel (%p2329) target = $region96
      $region95: #{stacked_encoder_forward.1} parent=91 // pred_region
        %p2332 = scmp.lt.s32.totalorder %s28, 1
        %s2333 = scalar_select %p2332, %s28, 1
        %s2334 = smul.addr %s2333, 2
        %s2335 = smul.addr %s2334, 8
        %s2336 = scalar_lea.vmem %s16, %s2335
      $region96: #{stacked_encoder_forward.1} parent=91 // pred_fallthru
        _
    $region92: #{stacked_encoder_forward.1} parent=5 // pred_fallthru
      _
  $region6: #{stacked_encoder_forward.1} parent=0 // loop_footer
    %s26 = sadd.s32 1, %s22
  $region7: #{stacked_encoder_forward.1} parent=0 // loop_footer_branch
    %21 = sbr.rel target = $region3
  $region8: #{stacked_encoder_forward.1} parent=0 // loop_exit
    _

</llo_original>
